<compile_context>
chip_gen: v5e
topology: v5e:2x2
jax: 0.10.0
libtpu: 0.0.40
codegen_flags: <defaults>
</compile_context>

<pallas_src>
import functools

import jax
import jax.numpy as jnp
from jax.experimental import pallas as pl
from jax.experimental.pallas import tpu as pltpu


# ----------------------------- 2x2 max pool (single-read kernel) -----------------------------

def _maxpool2x2_kernel(x_ref, o_ref):
    # x_ref block: (hp, 2, wp, 2, c)   o_ref block: (hp, wp, 1, c)
    v = x_ref[...]
    m = jnp.maximum(v[:, 0], v[:, 1])                  # pair rows    -> (hp, wp, 2, c)
    o_ref[...] = jnp.max(m, axis=2, keepdims=True)     # pair columns -> (hp, wp, 1, c)


def maxpool2x2_flat(x):
    """(N, H, W, C) NHWC -> (N, (H//2)*(W//2), C) flattened rows (row stride = W//2)."""
    n, h, w, c = x.shape
    hp, wp = h // 2, w // 2
    xr = x.reshape(n * hp, 2, wp, 2, c)                # free reshape, no HBM copy
    out = pl.pallas_call(
        _maxpool2x2_kernel,
        out_shape=jax.ShapeDtypeStruct((n * hp, wp, 1, c), jnp.float32),
        grid_spec=pltpu.PrefetchScalarGridSpec(
            num_scalar_prefetch=0,
            grid=(n,),
            in_specs=[pl.BlockSpec((hp, 2, wp, 2, c), lambda i: (i, 0, 0, 0, 0))],
            out_specs=pl.BlockSpec((hp, wp, 1, c), lambda i: (i, 0, 0, 0)),
        ),
        compiler_params=pltpu.CompilerParams(dimension_semantics=("parallel",)),
    )(xr)
    return out.reshape(n, hp * wp, c)                  # free reshape


# --------------------- 3x3 valid conv + fused BN statistics (one kernel) ---------------------

def _conv3x3_wide_kernel(x_ref, w_ref, ps_ref, pb_ref, y_ref, sum_ref, sq_ref,
                         *, w_stride, ho, wo, apply_pre):
    """3x3 valid conv on a per-batch, row-flattened activation (row stride = w_stride).

    Produces the "wide" output (ho * w_stride flat rows, of which only columns < wo are valid
    conv results; the rest is never consumed as valid data downstream) and the BatchNorm batch
    statistics (sum, sum-of-squares) of the valid positions.  If apply_pre, the producer's
    BN affine + ReLU is applied to the input taps on the fly (f32), so the producer's raw
    conv output never needs a separate normalize pass.
    """
    cout = y_ref.shape[-1]
    mw = ho * w_stride - 2            # number of wide-output rows that stay in bounds
    l_out = ho * w_stride

    acc = jnp.zeros((mw, cout), jnp.float32)
    for ky in range(3):
        for kx in range(3):
            # shifted window of the flattened activation: one VMEM-resident block, 9 reads,
            # zero extra HBM traffic (this replaces the HBM im2col of the previous version).
            a = x_ref[0, pl.ds(ky * w_stride + kx, mw), :]          # (mw, cin) f32
            if apply_pre:                                           # fused BN + ReLU (f32)
                a = jnp.maximum(a * ps_ref[...] + pb_ref[...], 0.0)
            acc += jnp.dot(a.astype(jnp.bfloat16), w_ref[ky * 3 + kx],
                           preferred_element_type=jnp.float32)      # bf16 MXU, f32 accumulate

    # Store the wide output (zero the 2 unused tail rows so everything stays finite).
    y_ref[0] = jnp.zeros((l_out, cout), y_ref.dtype)
    y_ref[0, pl.ds(0, mw), :] = acc.astype(y_ref.dtype)

    # Fused BN statistics over the valid output positions only (mask the wrapped columns).
    col = jax.lax.broadcasted_iota(jnp.int32, (mw, cout), 0) % w_stride
    av = jnp.where(col < wo, acc, 0.0)
    sum_ref[0] = jnp.sum(av, axis=0, keepdims=True)
    sq_ref[0] = jnp.sum(av * av, axis=0, keepdims=True)


def conv3x3_wide(x_flat, w, pre_scale, pre_shift, *, w_stride, ho, wo):
    """x_flat: (N, L_in, Cin) flattened activation with row stride w_stride
       (L_in >= (ho + 2) * w_stride).  w: (3, 3, Cin, Cout), no bias (cancelled by BN).

    Returns (y_flat (N, ho*w_stride, Cout) f32  [columns >= wo are don't-care],
             per-batch channel sums (N, 1, Cout), per-batch sums of squares (N, 1, Cout)).
    """
    n, l_in, cin = x_flat.shape
    cout = w.shape[-1]
    l_out = ho * w_stride
    w9 = w.reshape(9, cin, cout).astype(jnp.bfloat16)               # bf16 MXU operand
    apply_pre = pre_scale is not None
    ps = (pre_scale if apply_pre else jnp.ones((cin,), jnp.float32)).reshape(1, cin)
    pb = (pre_shift if apply_pre else jnp.zeros((cin,), jnp.float32)).reshape(1, cin)

    kernel = functools.partial(_conv3x3_wide_kernel, w_stride=w_stride, ho=ho, wo=wo,
                               apply_pre=apply_pre)
    y, s, q = pl.pallas_call(
        kernel,
        out_shape=(jax.ShapeDtypeStruct((n, l_out, cout), jnp.float32),
                   jax.ShapeDtypeStruct((n, 1, cout), jnp.float32),
                   jax.ShapeDtypeStruct((n, 1, cout), jnp.float32)),
        grid_spec=pltpu.PrefetchScalarGridSpec(
            num_scalar_prefetch=0,
            grid=(n,),
            in_specs=[
                pl.BlockSpec((1, l_in, cin), lambda i: (i, 0, 0)),
                pl.BlockSpec((9, cin, cout), lambda i: (0, 0, 0)),
                pl.BlockSpec((1, cin), lambda i: (0, 0)),
                pl.BlockSpec((1, cin), lambda i: (0, 0)),
            ],
            out_specs=(
                pl.BlockSpec((1, l_out, cout), lambda i: (i, 0, 0)),
                pl.BlockSpec((1, 1, cout), lambda i: (i, 0, 0)),
                pl.BlockSpec((1, 1, cout), lambda i: (i, 0, 0)),
            ),
        ),
        compiler_params=pltpu.CompilerParams(dimension_semantics=("parallel",)),
    )(x_flat, w9, ps, pb)
    return y, s, q


def bn_scale_shift(s, q, count, gamma, beta, eps=1e-5):
    """Finalize BatchNorm batch statistics (tiny length-C vectors, done in plain JAX)."""
    mean = s / count
    var = q / count - mean * mean      # biased variance == PyTorch train-mode normalization
    scale = gamma * jax.lax.rsqrt(var + eps)
    return scale, beta - mean * scale


# --------------------------- final BN affine + ReLU + crop kernel ---------------------------

def _bn_relu_crop_kernel(x_ref, s_ref, b_ref, o_ref, *, wo):
    row = x_ref[0, pl.ds(0, wo), :]                         # valid columns of this output row
    o_ref[0, 0] = jnp.maximum(row * s_ref[...] + b_ref[...], 0.0)


def bn_relu_crop(y_flat, scale, shift, *, w_stride, ho, wo):
    """(N, ho*w_stride, C) wide activation -> BN affine + ReLU + crop -> (N, ho, wo, C)."""
    n, _, c = y_flat.shape
    return pl.pallas_call(
        functools.partial(_bn_relu_crop_kernel, wo=wo),
        out_shape=jax.ShapeDtypeStruct((n, ho, wo, c), jnp.float32),
        grid_spec=pltpu.PrefetchScalarGridSpec(
            num_scalar_prefetch=0,
            grid=(n, ho),
            in_specs=[
                pl.BlockSpec((1, w_stride, c), lambda i, r: (i, r, 0)),
                pl.BlockSpec((1, c), lambda i, r: (0, 0)),
                pl.BlockSpec((1, c), lambda i, r: (0, 0)),
            ],
            out_specs=pl.BlockSpec((1, 1, wo, c), lambda i, r: (i, r, 0, 0)),
        ),
        compiler_params=pltpu.CompilerParams(
            dimension_semantics=("parallel", "parallel")),
    )(y_flat, scale.reshape(1, c), shift.reshape(1, c))


# ------------------------------------ downStep forward ------------------------------------

def down_step(x_nchw, params, eps=1e-5):
    """Pallas forward of PyTorch downStep.  x: (N, inC, H, W) -> (N, outC, H//2-4, W//2-4).
    H, W must be even and >= 10 (valid convs after the 2x2 pool)."""
    n, _, h, w = x_nchw.shape
    hp, wp = h // 2, w // 2
    ho1, wo1 = hp - 2, wp - 2          # conv1 output size
    ho2, wo2 = hp - 4, wp - 4          # conv2 output size

    x = jnp.transpose(x_nchw, (0, 2, 3, 1)).astype(jnp.float32)     # NCHW -> NHWC
    xp = maxpool2x2_flat(x)                                         # (N, hp*wp, inC)

    # conv1 (+ fused BN1 batch statistics); conv bias is exactly cancelled by train-mode BN.
    y1, s1, q1 = conv3x3_wide(xp, params["w1"], None, None,
                              w_stride=wp, ho=ho1, wo=wo1)
    scale1, shift1 = bn_scale_shift(jnp.sum(s1, axis=(0, 1)), jnp.sum(q1, axis=(0, 1)),
                                    n * ho1 * wo1, params["g1"], params["b1"], eps)

    # conv2 with BN1 affine + ReLU fused into its tap reads (+ fused BN2 statistics).
    y2, s2, q2 = conv3x3_wide(y1, params["w2"], scale1, shift1,
                              w_stride=wp, ho=ho2, wo=wo2)
    scale2, shift2 = bn_scale_shift(jnp.sum(s2, axis=(0, 1)), jnp.sum(q2, axis=(0, 1)),
                                    n * ho2 * wo2, params["g2"], params["b2"], eps)

    out = bn_relu_crop(y2, scale2, shift2, w_stride=wp, ho=ho2, wo=wo2)  # (N, ho2, wo2, outC)
    return jnp.transpose(out, (0, 3, 1, 2))                              # NHWC -> NCHW


# ------------------------------- pure-JAX reference (f32) -------------------------------

def down_step_reference(x_nchw, params, eps=1e-5):
    x = jnp.transpose(x_nchw, (0, 2, 3, 1)).astype(jnp.float32)
    n, h, w, c = x.shape
    x = x.reshape(n, h // 2, 2, w // 2, 2, c).max(axis=(2, 4))

    def conv(y, wgt):
        return jax.lax.conv_general_dilated(y, wgt, (1, 1), "VALID",
                                            dimension_numbers=("NHWC", "HWIO", "NHWC"))

    def bn_relu(y, g, b):
        mean = jnp.mean(y, axis=(0, 1, 2))
        var = jnp.mean(jnp.square(y - mean), axis=(0, 1, 2))
        return jnp.maximum((y - mean) * (g / jnp.sqrt(var + eps)) + b, 0.0)

    y = bn_relu(conv(x, params["w1"]), params["g1"], params["b1"])
    y = bn_relu(conv(y, params["w2"]), params["g2"], params["b2"])
    return jnp.transpose(y, (0, 3, 1, 2))


if __name__ == "__main__":
    key = jax.random.PRNGKey(0)
    kx, k1, k2 = jax.random.split(key, 3)
    N, inC, outC, H, W = 2, 4, 8, 16, 16
    x = jax.random.normal(kx, (N, inC, H, W), jnp.float32)
    params = {
        "w1": 0.1 * jax.random.normal(k1, (3, 3, inC, outC), jnp.float32),
        "g1": jnp.ones((outC,), jnp.float32),
        "b1": jnp.zeros((outC,), jnp.float32),
        "w2": 0.1 * jax.random.normal(k2, (3, 3, outC, outC), jnp.float32),
        "g2": jnp.ones((outC,), jnp.float32),
        "b2": jnp.zeros((outC,), jnp.float32),
    }

    fwd = jax.jit(down_step)
    out = jax.block_until_ready(fwd(x, params))
    assert out.shape == (N, outC, H // 2 - 4, W // 2 - 4), out.shape
    assert bool(jnp.all(jnp.isfinite(out)))

    # bf16 MXU operands (f32 accumulation, f32 BatchNorm) => small drift vs the f32 reference.
    ref = jax.jit(down_step_reference)(x, params)
    max_err = float(jnp.max(jnp.abs(out - ref)))
    assert max_err < 0.1, f"max abs err vs f32 reference: {max_err}"
    print("KERNEL_OK")
</pallas_src>

<mosaic_0001>
module attributes {stable_mosaic.version = 11 : i64} {
  func.func @_maxpool2x2_kernel(%arg0: i32, %arg1: memref<8x2x8x2x4xf32, #tpu.memory_space<vmem>>, %arg2: memref<8x8x1x4xf32, #tpu.memory_space<vmem>>) attributes {dimension_semantics = [#tpu.dimension_semantics<parallel>], iteration_bounds = array<i64: 2>, scalar_prefetch = 0 : i64, scratch_operands = 0 : i64, tpu.core_type = #tpu.core_type<tc>, window_params = [{transform_indices = @transform_0, window_bounds = array<i64: 8, 2, 8, 2, 4>}, {transform_indices = @transform_1, window_bounds = array<i64: 8, 8, 1, 4>}]} {
    %c0 = arith.constant 0 : index
    %c0_0 = arith.constant 0 : index
    %c0_1 = arith.constant 0 : index
    %c0_2 = arith.constant 0 : index
    %c0_3 = arith.constant 0 : index
    %0 = vector.load %arg1[%c0, %c0_0, %c0_1, %c0_2, %c0_3] : memref<8x2x8x2x4xf32, #tpu.memory_space<vmem>>, vector<8x2x8x2x4xf32>
    %1 = vector.extract_strided_slice %0 {offsets = [0, 0, 0, 0, 0], sizes = [8, 1, 8, 2, 4], strides = [1, 1, 1, 1, 1]} : vector<8x2x8x2x4xf32> to vector<8x1x8x2x4xf32>
    %2 = vector.shape_cast %1 : vector<8x1x8x2x4xf32> to vector<8x8x2x4xf32>
    %3 = vector.extract_strided_slice %0 {offsets = [0, 1, 0, 0, 0], sizes = [8, 1, 8, 2, 4], strides = [1, 1, 1, 1, 1]} : vector<8x2x8x2x4xf32> to vector<8x1x8x2x4xf32>
    %4 = vector.shape_cast %3 : vector<8x1x8x2x4xf32> to vector<8x8x2x4xf32>
    %5 = arith.maximumf %2, %4 : vector<8x8x2x4xf32>
    %cst = arith.constant dense<0xFF800000> : vector<8x8x4xf32>
    %6 = vector.multi_reduction <maximumf>, %5, %cst [2] : vector<8x8x2x4xf32> to vector<8x8x4xf32>
    %7 = vector.shape_cast %6 : vector<8x8x4xf32> to vector<8x8x1x4xf32>
    %c0_4 = arith.constant 0 : index
    %c0_5 = arith.constant 0 : index
    %c0_6 = arith.constant 0 : index
    %c0_7 = arith.constant 0 : index
    %8 = vector.load %arg2[%c0_4, %c0_5, %c0_6, %c0_7] : memref<8x8x1x4xf32, #tpu.memory_space<vmem>>, vector<8x8x1x4xf32>
    tpu.vector_store %arg2[%c0_4, %c0_5, %c0_6, %c0_7], %7 {strides = array<i32>} : memref<8x8x1x4xf32, #tpu.memory_space<vmem>>, vector<8x8x1x4xf32>,
    return
  }
  func.func @transform_0(%arg0: i32) -> (i32, i32, i32, i32, i32) {
    %c0_i32 = arith.constant 0 : i32
    %c0_i32_0 = arith.constant 0 : i32
    %c0_i32_1 = arith.constant 0 : i32
    %c0_i32_2 = arith.constant 0 : i32
    %c0_i32_3 = arith.constant 0 : i32
    return %arg0, %c0_i32, %c0_i32_0, %c0_i32_1, %c0_i32_2 : i32, i32, i32, i32, i32
  }
  func.func @transform_1(%arg0: i32) -> (i32, i32, i32, i32) {
    %c0_i32 = arith.constant 0 : i32
    %c0_i32_0 = arith.constant 0 : i32
    %c0_i32_1 = arith.constant 0 : i32
    %c0_i32_2 = arith.constant 0 : i32
    return %arg0, %c0_i32, %c0_i32_0, %c0_i32_1 : i32, i32, i32, i32
  }
}

module attributes {stable_mosaic.version = 11 : i64} {
  func.func @_conv3x3_wide_kernel(%arg0: i32, %arg1: memref<1x64x4xf32, #tpu.memory_space<vmem>>, %arg2: memref<9x4x8xbf16, #tpu.memory_space<vmem>>, %arg3: memref<1x4xf32, #tpu.memory_space<vmem>>, %arg4: memref<1x4xf32, #tpu.memory_space<vmem>>, %arg5: memref<1x48x8xf32, #tpu.memory_space<vmem>>, %arg6: memref<1x1x8xf32, #tpu.memory_space<vmem>>, %arg7: memref<1x1x8xf32, #tpu.memory_space<vmem>>) attributes {dimension_semantics = [#tpu.dimension_semantics<parallel>], iteration_bounds = array<i64: 2>, scalar_prefetch = 0 : i64, scratch_operands = 0 : i64, tpu.core_type = #tpu.core_type<tc>, window_params = [{transform_indices = @transform_0, window_bounds = array<i64: 1, 64, 4>}, {pipeline_mode = #tpu.pipeline_mode<synchronous>, transform_indices = @transform_1, window_bounds = array<i64: 9, 4, 8>}, {pipeline_mode = #tpu.pipeline_mode<synchronous>, transform_indices = @transform_2, window_bounds = array<i64: 1, 4>}, {pipeline_mode = #tpu.pipeline_mode<synchronous>, transform_indices = @transform_3, window_bounds = array<i64: 1, 4>}, {transform_indices = @transform_4, window_bounds = array<i64: 1, 48, 8>}, {transform_indices = @transform_5, window_bounds = array<i64: 1, 1, 8>}, {transform_indices = @transform_6, window_bounds = array<i64: 1, 1, 8>}]} {
    %cst = arith.constant 0.000000e+00 : f32
    %0 = vector.broadcast %cst : f32 to vector<46x8xf32>
    %c0 = arith.constant 0 : index
    %c0_0 = arith.constant 0 : index
    %c0_1 = arith.constant 0 : index
    %1 = vector.load %arg1[%c0, %c0_0, %c0_1] : memref<1x64x4xf32, #tpu.memory_space<vmem>>, vector<1x46x4xf32>
    %2 = vector.shape_cast %1 : vector<1x46x4xf32> to vector<46x4xf32>
    %3 = arith.truncf %2 : vector<46x4xf32> to vector<46x4xbf16>
    %c0_2 = arith.constant 0 : index
    %c0_3 = arith.constant 0 : index
    %c0_4 = arith.constant 0 : index
    %4 = vector.load %arg2[%c0_2, %c0_3, %c0_4] : memref<9x4x8xbf16, #tpu.memory_space<vmem>>, vector<1x4x8xbf16>
    %5 = vector.shape_cast %4 : vector<1x4x8xbf16> to vector<4x8xbf16>
    %cst_5 = arith.constant dense<0.000000e+00> : vector<46x8xf32>
    %6 = tpu.matmul %3, %5, %cst_5 {dimension_numbers = #tpu.dot_dimension_numbers<[1], [0], [0], [1], [0, 0, 1, 1], [], []>} : vector<46x4xbf16>, vector<4x8xbf16>, vector<46x8xf32> -> vector<46x8xf32>
    %7 = arith.addf %0, %6 : vector<46x8xf32>
    %c0_6 = arith.constant 0 : index
    %c1 = arith.constant 1 : index
    %c0_7 = arith.constant 0 : index
    %8 = vector.load %arg1[%c0_6, %c1, %c0_7] : memref<1x64x4xf32, #tpu.memory_space<vmem>>, vector<1x46x4xf32>
    %9 = vector.shape_cast %8 : vector<1x46x4xf32> to vector<46x4xf32>
    %10 = arith.truncf %9 : vector<46x4xf32> to vector<46x4xbf16>
    %c1_8 = arith.constant 1 : index
    %c0_9 = arith.constant 0 : index
    %c0_10 = arith.constant 0 : index
    %11 = vector.load %arg2[%c1_8, %c0_9, %c0_10] : memref<9x4x8xbf16, #tpu.memory_space<vmem>>, vector<1x4x8xbf16>
    %12 = vector.shape_cast %11 : vector<1x4x8xbf16> to vector<4x8xbf16>
    %cst_11 = arith.constant dense<0.000000e+00> : vector<46x8xf32>
    %13 = tpu.matmul %10, %12, %cst_11 {dimension_numbers = #tpu.dot_dimension_numbers<[1], [0], [0], [1], [0, 0, 1, 1], [], []>} : vector<46x4xbf16>, vector<4x8xbf16>, vector<46x8xf32> -> vector<46x8xf32>
    %14 = arith.addf %7, %13 : vector<46x8xf32>
    %c0_12 = arith.constant 0 : index
    %c2 = arith.constant 2 : index
    %c0_13 = arith.constant 0 : index
    %15 = vector.load %arg1[%c0_12, %c2, %c0_13] : memref<1x64x4xf32, #tpu.memory_space<vmem>>, vector<1x46x4xf32>
    %16 = vector.shape_cast %15 : vector<1x46x4xf32> to vector<46x4xf32>
    %17 = arith.truncf %16 : vector<46x4xf32> to vector<46x4xbf16>
    %c2_14 = arith.constant 2 : index
    %c0_15 = arith.constant 0 : index
    %c0_16 = arith.constant 0 : index
    %18 = vector.load %arg2[%c2_14, %c0_15, %c0_16] : memref<9x4x8xbf16, #tpu.memory_space<vmem>>, vector<1x4x8xbf16>
    %19 = vector.shape_cast %18 : vector<1x4x8xbf16> to vector<4x8xbf16>
    %cst_17 = arith.constant dense<0.000000e+00> : vector<46x8xf32>
    %20 = tpu.matmul %17, %19, %cst_17 {dimension_numbers = #tpu.dot_dimension_numbers<[1], [0], [0], [1], [0, 0, 1, 1], [], []>} : vector<46x4xbf16>, vector<4x8xbf16>, vector<46x8xf32> -> vector<46x8xf32>
    %21 = arith.addf %14, %20 : vector<46x8xf32>
    %c0_18 = arith.constant 0 : index
    %c8 = arith.constant 8 : index
    %c0_19 = arith.constant 0 : index
    %22 = vector.load %arg1[%c0_18, %c8, %c0_19] : memref<1x64x4xf32, #tpu.memory_space<vmem>>, vector<1x46x4xf32>
    %23 = vector.shape_cast %22 : vector<1x46x4xf32> to vector<46x4xf32>
    %24 = arith.truncf %23 : vector<46x4xf32> to vector<46x4xbf16>
    %c3 = arith.constant 3 : index
    %c0_20 = arith.constant 0 : index
    %c0_21 = arith.constant 0 : index
    %25 = vector.load %arg2[%c3, %c0_20, %c0_21] : memref<9x4x8xbf16, #tpu.memory_space<vmem>>, vector<1x4x8xbf16>
    %26 = vector.shape_cast %25 : vector<1x4x8xbf16> to vector<4x8xbf16>
    %cst_22 = arith.constant dense<0.000000e+00> : vector<46x8xf32>
    %27 = tpu.matmul %24, %26, %cst_22 {dimension_numbers = #tpu.dot_dimension_numbers<[1], [0], [0], [1], [0, 0, 1, 1], [], []>} : vector<46x4xbf16>, vector<4x8xbf16>, vector<46x8xf32> -> vector<46x8xf32>
    %28 = arith.addf %21, %27 : vector<46x8xf32>
    %c0_23 = arith.constant 0 : index
    %c9 = arith.constant 9 : index
    %c0_24 = arith.constant 0 : index
    %29 = vector.load %arg1[%c0_23, %c9, %c0_24] : memref<1x64x4xf32, #tpu.memory_space<vmem>>, vector<1x46x4xf32>
    %30 = vector.shape_cast %29 : vector<1x46x4xf32> to vector<46x4xf32>
    %31 = arith.truncf %30 : vector<46x4xf32> to vector<46x4xbf16>
    %c4 = arith.constant 4 : index
    %c0_25 = arith.constant 0 : index
    %c0_26 = arith.constant 0 : index
    %32 = vector.load %arg2[%c4, %c0_25, %c0_26] : memref<9x4x8xbf16, #tpu.memory_space<vmem>>, vector<1x4x8xbf16>
    %33 = vector.shape_cast %32 : vector<1x4x8xbf16> to vector<4x8xbf16>
    %cst_27 = arith.constant dense<0.000000e+00> : vector<46x8xf32>
    %34 = tpu.matmul %31, %33, %cst_27 {dimension_numbers = #tpu.dot_dimension_numbers<[1], [0], [0], [1], [0, 0, 1, 1], [], []>} : vector<46x4xbf16>, vector<4x8xbf16>, vector<46x8xf32> -> vector<46x8xf32>
    %35 = arith.addf %28, %34 : vector<46x8xf32>
    %c0_28 = arith.constant 0 : index
    %c10 = arith.constant 10 : index
    %c0_29 = arith.constant 0 : index
    %36 = vector.load %arg1[%c0_28, %c10, %c0_29] : memref<1x64x4xf32, #tpu.memory_space<vmem>>, vector<1x46x4xf32>
    %37 = vector.shape_cast %36 : vector<1x46x4xf32> to vector<46x4xf32>
    %38 = arith.truncf %37 : vector<46x4xf32> to vector<46x4xbf16>
    %c5 = arith.constant 5 : index
    %c0_30 = arith.constant 0 : index
    %c0_31 = arith.constant 0 : index
    %39 = vector.load %arg2[%c5, %c0_30, %c0_31] : memref<9x4x8xbf16, #tpu.memory_space<vmem>>, vector<1x4x8xbf16>
    %40 = vector.shape_cast %39 : vector<1x4x8xbf16> to vector<4x8xbf16>
    %cst_32 = arith.constant dense<0.000000e+00> : vector<46x8xf32>
    %41 = tpu.matmul %38, %40, %cst_32 {dimension_numbers = #tpu.dot_dimension_numbers<[1], [0], [0], [1], [0, 0, 1, 1], [], []>} : vector<46x4xbf16>, vector<4x8xbf16>, vector<46x8xf32> -> vector<46x8xf32>
    %42 = arith.addf %35, %41 : vector<46x8xf32>
    %c0_33 = arith.constant 0 : index
    %c16 = arith.constant 16 : index
    %c0_34 = arith.constant 0 : index
    %43 = vector.load %arg1[%c0_33, %c16, %c0_34] : memref<1x64x4xf32, #tpu.memory_space<vmem>>, vector<1x46x4xf32>
    %44 = vector.shape_cast %43 : vector<1x46x4xf32> to vector<46x4xf32>
    %45 = arith.truncf %44 : vector<46x4xf32> to vector<46x4xbf16>
    %c6 = arith.constant 6 : index
    %c0_35 = arith.constant 0 : index
    %c0_36 = arith.constant 0 : index
    %46 = vector.load %arg2[%c6, %c0_35, %c0_36] : memref<9x4x8xbf16, #tpu.memory_space<vmem>>, vector<1x4x8xbf16>
    %47 = vector.shape_cast %46 : vector<1x4x8xbf16> to vector<4x8xbf16>
    %cst_37 = arith.constant dense<0.000000e+00> : vector<46x8xf32>
    %48 = tpu.matmul %45, %47, %cst_37 {dimension_numbers = #tpu.dot_dimension_numbers<[1], [0], [0], [1], [0, 0, 1, 1], [], []>} : vector<46x4xbf16>, vector<4x8xbf16>, vector<46x8xf32> -> vector<46x8xf32>
    %49 = arith.addf %42, %48 : vector<46x8xf32>
    %c0_38 = arith.constant 0 : index
    %c17 = arith.constant 17 : index
    %c0_39 = arith.constant 0 : index
    %50 = vector.load %arg1[%c0_38, %c17, %c0_39] : memref<1x64x4xf32, #tpu.memory_space<vmem>>, vector<1x46x4xf32>
    %51 = vector.shape_cast %50 : vector<1x46x4xf32> to vector<46x4xf32>
    %52 = arith.truncf %51 : vector<46x4xf32> to vector<46x4xbf16>
    %c7 = arith.constant 7 : index
    %c0_40 = arith.constant 0 : index
    %c0_41 = arith.constant 0 : index
    %53 = vector.load %arg2[%c7, %c0_40, %c0_41] : memref<9x4x8xbf16, #tpu.memory_space<vmem>>, vector<1x4x8xbf16>
    %54 = vector.shape_cast %53 : vector<1x4x8xbf16> to vector<4x8xbf16>
    %cst_42 = arith.constant dense<0.000000e+00> : vector<46x8xf32>
    %55 = tpu.matmul %52, %54, %cst_42 {dimension_numbers = #tpu.dot_dimension_numbers<[1], [0], [0], [1], [0, 0, 1, 1], [], []>} : vector<46x4xbf16>, vector<4x8xbf16>, vector<46x8xf32> -> vector<46x8xf32>
    %56 = arith.addf %49, %55 : vector<46x8xf32>
    %c0_43 = arith.constant 0 : index
    %c18 = arith.constant 18 : index
    %c0_44 = arith.constant 0 : index
    %57 = vector.load %arg1[%c0_43, %c18, %c0_44] : memref<1x64x4xf32, #tpu.memory_space<vmem>>, vector<1x46x4xf32>
    %58 = vector.shape_cast %57 : vector<1x46x4xf32> to vector<46x4xf32>
    %59 = arith.truncf %58 : vector<46x4xf32> to vector<46x4xbf16>
    %c8_45 = arith.constant 8 : index
    %c0_46 = arith.constant 0 : index
    %c0_47 = arith.constant 0 : index
    %60 = vector.load %arg2[%c8_45, %c0_46, %c0_47] : memref<9x4x8xbf16, #tpu.memory_space<vmem>>, vector<1x4x8xbf16>
    %61 = vector.shape_cast %60 : vector<1x4x8xbf16> to vector<4x8xbf16>
    %cst_48 = arith.constant dense<0.000000e+00> : vector<46x8xf32>
    %62 = tpu.matmul %59, %61, %cst_48 {dimension_numbers = #tpu.dot_dimension_numbers<[1], [0], [0], [1], [0, 0, 1, 1], [], []>} : vector<46x4xbf16>, vector<4x8xbf16>, vector<46x8xf32> -> vector<46x8xf32>
    %63 = arith.addf %56, %62 : vector<46x8xf32>
    %cst_49 = arith.constant 0.000000e+00 : f32
    %64 = vector.broadcast %cst_49 : f32 to vector<48x8xf32>
    %c0_50 = arith.constant 0 : index
    %c0_51 = arith.constant 0 : index
    %c0_52 = arith.constant 0 : index
    %65 = vector.load %arg5[%c0_50, %c0_51, %c0_52] : memref<1x48x8xf32, #tpu.memory_space<vmem>>, vector<1x48x8xf32>
    %66 = vector.shape_cast %65 : vector<1x48x8xf32> to vector<48x8xf32>
    %67 = vector.shape_cast %64 : vector<48x8xf32> to vector<1x48x8xf32>
    tpu.vector_store %arg5[%c0_50, %c0_51, %c0_52], %67 {strides = array<i32>} : memref<1x48x8xf32, #tpu.memory_space<vmem>>, vector<1x48x8xf32>,
    %c0_53 = arith.constant 0 : index
    %c0_54 = arith.constant 0 : index
    %c0_55 = arith.constant 0 : index
    %68 = vector.load %arg5[%c0_53, %c0_54, %c0_55] : memref<1x48x8xf32, #tpu.memory_space<vmem>>, vector<1x46x8xf32>
    %69 = vector.shape_cast %68 : vector<1x46x8xf32> to vector<46x8xf32>
    %70 = vector.shape_cast %63 : vector<46x8xf32> to vector<1x46x8xf32>
    tpu.vector_store %arg5[%c0_53, %c0_54, %c0_55], %70 {strides = array<i32>} : memref<1x48x8xf32, #tpu.memory_space<vmem>>, vector<1x46x8xf32>,
    %71 = tpu.iota {dimensions = array<i32: 0>} : vector<46x8xi32>
    %c8_i32 = arith.constant 8 : i32
    %c0_i32 = arith.constant 0 : i32
    %72 = arith.cmpi eq, %c8_i32, %c0_i32 : i32
    %c1_i32 = arith.constant 1 : i32
    %73 = arith.select %72, %c1_i32, %c8_i32 : i32
    %74 = vector.broadcast %73 : i32 to vector<46x8xi32>
    %75 = arith.remsi %71, %74 : vector<46x8xi32>
    %c0_i32_56 = arith.constant 0 : i32
    %76 = vector.broadcast %c0_i32_56 : i32 to vector<46x8xi32>
    %77 = arith.cmpi ne, %75, %76 : vector<46x8xi32>
    %c0_i32_57 = arith.constant 0 : i32
    %78 = vector.broadcast %c0_i32_57 : i32 to vector<46x8xi32>
    %79 = arith.cmpi slt, %75, %78 : vector<46x8xi32>
    %c0_i32_58 = arith.constant 0 : i32
    %80 = arith.cmpi slt, %73, %c0_i32_58 : i32
    %81 = vector.broadcast %80 : i1 to vector<46x8xi1>
    %82 = vector.broadcast %81 : vector<46x8xi1> to vector<46x8xi1>
    %83 = arith.xori %79, %82 : vector<46x8xi1>
    %84 = arith.andi %83, %77 : vector<46x8xi1>
    %85 = vector.broadcast %73 : i32 to vector<46x8xi32>
    %86 = arith.addi %75, %85 : vector<46x8xi32>
    %87 = arith.select %84, %86, %75 : vector<46x8xi1>, vector<46x8xi32>
    %c6_i32 = arith.constant 6 : i32
    %88 = vector.broadcast %c6_i32 : i32 to vector<46x8xi32>
    %89 = arith.cmpi slt, %87, %88 : vector<46x8xi32>
    %cst_59 = arith.constant 0.000000e+00 : f32
    %90 = vector.broadcast %cst_59 : f32 to vector<46x8xf32>
    %91 = arith.select %89, %63, %90 : vector<46x8xi1>, vector<46x8xf32>
    %cst_60 = arith.constant dense<0.000000e+00> : vector<8xf32>
    %92 = vector.multi_reduction <add>, %91, %cst_60 [0] : vector<46x8xf32> to vector<8xf32>
    %93 = vector.shape_cast %92 : vector<8xf32> to vector<1x8xf32>
    %c0_61 = arith.constant 0 : index
    %c0_62 = arith.constant 0 : index
    %c0_63 = arith.constant 0 : index
    %94 = vector.load %arg6[%c0_61, %c0_62, %c0_63] : memref<1x1x8xf32, #tpu.memory_space<vmem>>, vector<1x1x8xf32>
    %95 = vector.shape_cast %94 : vector<1x1x8xf32> to vector<1x8xf32>
    %96 = vector.shape_cast %93 : vector<1x8xf32> to vector<1x1x8xf32>
    tpu.vector_store %arg6[%c0_61, %c0_62, %c0_63], %96 {strides = array<i32>} : memref<1x1x8xf32, #tpu.memory_space<vmem>>, vector<1x1x8xf32>,
    %97 = arith.mulf %91, %91 : vector<46x8xf32>
    %cst_64 = arith.constant dense<0.000000e+00> : vector<8xf32>
    %98 = vector.multi_reduction <add>, %97, %cst_64 [0] : vector<46x8xf32> to vector<8xf32>
    %99 = vector.shape_cast %98 : vector<8xf32> to vector<1x8xf32>
    %c0_65 = arith.constant 0 : index
    %c0_66 = arith.constant 0 : index
    %c0_67 = arith.constant 0 : index
    %100 = vector.load %arg7[%c0_65, %c0_66, %c0_67] : memref<1x1x8xf32, #tpu.memory_space<vmem>>, vector<1x1x8xf32>
    %101 = vector.shape_cast %100 : vector<1x1x8xf32> to vector<1x8xf32>
    %102 = vector.shape_cast %99 : vector<1x8xf32> to vector<1x1x8xf32>
    tpu.vector_store %arg7[%c0_65, %c0_66, %c0_67], %102 {strides = array<i32>} : memref<1x1x8xf32, #tpu.memory_space<vmem>>, vector<1x1x8xf32>,
    return
  }
  func.func @transform_0(%arg0: i32) -> (i32, i32, i32) {
    %c0_i32 = arith.constant 0 : i32
    %c0_i32_0 = arith.constant 0 : i32
    %c0_i32_1 = arith.constant 0 : i32
    return %arg0, %c0_i32, %c0_i32_0 : i32, i32, i32
  }
  func.func @transform_1(%arg0: i32) -> (i32, i32, i32) {
    %c0_i32 = arith.constant 0 : i32
    %c0_i32_0 = arith.constant 0 : i32
    %c0_i32_1 = arith.constant 0 : i32
    %c0_i32_2 = arith.constant 0 : i32
    return %c0_i32, %c0_i32_0, %c0_i32_1 : i32, i32, i32
  }
  func.func @transform_2(%arg0: i32) -> (i32, i32) {
    %c0_i32 = arith.constant 0 : i32
    %c0_i32_0 = arith.constant 0 : i32
    %c0_i32_1 = arith.constant 0 : i32
    return %c0_i32, %c0_i32_0 : i32, i32
  }
  func.func @transform_3(%arg0: i32) -> (i32, i32) {
    %c0_i32 = arith.constant 0 : i32
    %c0_i32_0 = arith.constant 0 : i32
    %c0_i32_1 = arith.constant 0 : i32
    return %c0_i32, %c0_i32_0 : i32, i32
  }
  func.func @transform_4(%arg0: i32) -> (i32, i32, i32) {
    %c0_i32 = arith.constant 0 : i32
    %c0_i32_0 = arith.constant 0 : i32
    %c0_i32_1 = arith.constant 0 : i32
    return %arg0, %c0_i32, %c0_i32_0 : i32, i32, i32
  }
  func.func @transform_5(%arg0: i32) -> (i32, i32, i32) {
    %c0_i32 = arith.constant 0 : i32
    %c0_i32_0 = arith.constant 0 : i32
    %c0_i32_1 = arith.constant 0 : i32
    return %arg0, %c0_i32, %c0_i32_0 : i32, i32, i32
  }
  func.func @transform_6(%arg0: i32) -> (i32, i32, i32) {
    %c0_i32 = arith.constant 0 : i32
    %c0_i32_0 = arith.constant 0 : i32
    %c0_i32_1 = arith.constant 0 : i32
    return %arg0, %c0_i32, %c0_i32_0 : i32, i32, i32
  }
}

module attributes {stable_mosaic.version = 11 : i64} {
  func.func @_bn_relu_crop_kernel(%arg0: i32, %arg1: i32, %arg2: memref<1x8x8xf32, #tpu.memory_space<vmem>>, %arg3: memref<1x8xf32, #tpu.memory_space<vmem>>, %arg4: memref<1x8xf32, #tpu.memory_space<vmem>>, %arg5: memref<1x1x4x8xf32, #tpu.memory_space<vmem>>) attributes {dimension_semantics = [#tpu.dimension_semantics<parallel>, #tpu.dimension_semantics<parallel>], iteration_bounds = array<i64: 2, 4>, scalar_prefetch = 0 : i64, scratch_operands = 0 : i64, tpu.core_type = #tpu.core_type<tc>, window_params = [{transform_indices = @transform_0, window_bounds = array<i64: 1, 8, 8>}, {pipeline_mode = #tpu.pipeline_mode<synchronous>, transform_indices = @transform_1, window_bounds = array<i64: 1, 8>}, {pipeline_mode = #tpu.pipeline_mode<synchronous>, transform_indices = @transform_2, window_bounds = array<i64: 1, 8>}, {transform_indices = @transform_3, window_bounds = array<i64: 1, 1, 4, 8>}]} {
    %c0 = arith.constant 0 : index
    %c0_0 = arith.constant 0 : index
    %c0_1 = arith.constant 0 : index
    %0 = vector.load %arg2[%c0, %c0_0, %c0_1] : memref<1x8x8xf32, #tpu.memory_space<vmem>>, vector<1x4x8xf32>
    %1 = vector.shape_cast %0 : vector<1x4x8xf32> to vector<4x8xf32>
    %c0_2 = arith.constant 0 : index
    %c0_3 = arith.constant 0 : index
    %2 = vector.load %arg3[%c0_2, %c0_3] : memref<1x8xf32, #tpu.memory_space<vmem>>, vector<1x8xf32>
    %3 = vector.broadcast %2 : vector<1x8xf32> to vector<4x8xf32>
    %4 = arith.mulf %1, %3 : vector<4x8xf32>
    %c0_4 = arith.constant 0 : index
    %c0_5 = arith.constant 0 : index
    %5 = vector.load %arg4[%c0_4, %c0_5] : memref<1x8xf32, #tpu.memory_space<vmem>>, vector<1x8xf32>
    %6 = vector.broadcast %5 : vector<1x8xf32> to vector<4x8xf32>
    %7 = arith.addf %4, %6 : vector<4x8xf32>
    %cst = arith.constant 0.000000e+00 : f32
    %8 = vector.broadcast %cst : f32 to vector<4x8xf32>
    %9 = arith.maximumf %7, %8 : vector<4x8xf32>
    %c0_6 = arith.constant 0 : index
    %c0_7 = arith.constant 0 : index
    %c0_8 = arith.constant 0 : index
    %c0_9 = arith.constant 0 : index
    %10 = vector.load %arg5[%c0_6, %c0_7, %c0_8, %c0_9] : memref<1x1x4x8xf32, #tpu.memory_space<vmem>>, vector<1x1x4x8xf32>
    %11 = vector.shape_cast %10 : vector<1x1x4x8xf32> to vector<4x8xf32>
    %12 = vector.shape_cast %9 : vector<4x8xf32> to vector<1x1x4x8xf32>
    tpu.vector_store %arg5[%c0_6, %c0_7, %c0_8, %c0_9], %12 {strides = array<i32>} : memref<1x1x4x8xf32, #tpu.memory_space<vmem>>, vector<1x1x4x8xf32>,
    return
  }
  func.func @transform_0(%arg0: i32, %arg1: i32) -> (i32, i32, i32) {
    %c0_i32 = arith.constant 0 : i32
    %c0_i32_0 = arith.constant 0 : i32
    return %arg0, %arg1, %c0_i32 : i32, i32, i32
  }
  func.func @transform_1(%arg0: i32, %arg1: i32) -> (i32, i32) {
    %c0_i32 = arith.constant 0 : i32
    %c0_i32_0 = arith.constant 0 : i32
    %c0_i32_1 = arith.constant 0 : i32
    return %c0_i32, %c0_i32_0 : i32, i32
  }
  func.func @transform_2(%arg0: i32, %arg1: i32) -> (i32, i32) {
    %c0_i32 = arith.constant 0 : i32
    %c0_i32_0 = arith.constant 0 : i32
    %c0_i32_1 = arith.constant 0 : i32
    return %c0_i32, %c0_i32_0 : i32, i32
  }
  func.func @transform_3(%arg0: i32, %arg1: i32) -> (i32, i32, i32, i32) {
    %c0_i32 = arith.constant 0 : i32
    %c0_i32_0 = arith.constant 0 : i32
    %c0_i32_1 = arith.constant 0 : i32
    return %arg0, %arg1, %c0_i32, %c0_i32_0 : i32, i32, i32, i32
  }
}

module attributes {stable_mosaic.version = 11 : i64} {
  func.func @_conv3x3_wide_kernel(%arg0: i32, %arg1: memref<1x48x8xf32, #tpu.memory_space<vmem>>, %arg2: memref<9x8x8xbf16, #tpu.memory_space<vmem>>, %arg3: memref<1x8xf32, #tpu.memory_space<vmem>>, %arg4: memref<1x8xf32, #tpu.memory_space<vmem>>, %arg5: memref<1x32x8xf32, #tpu.memory_space<vmem>>, %arg6: memref<1x1x8xf32, #tpu.memory_space<vmem>>, %arg7: memref<1x1x8xf32, #tpu.memory_space<vmem>>) attributes {dimension_semantics = [#tpu.dimension_semantics<parallel>], iteration_bounds = array<i64: 2>, scalar_prefetch = 0 : i64, scratch_operands = 0 : i64, tpu.core_type = #tpu.core_type<tc>, window_params = [{transform_indices = @transform_0, window_bounds = array<i64: 1, 48, 8>}, {pipeline_mode = #tpu.pipeline_mode<synchronous>, transform_indices = @transform_1, window_bounds = array<i64: 9, 8, 8>}, {pipeline_mode = #tpu.pipeline_mode<synchronous>, transform_indices = @transform_2, window_bounds = array<i64: 1, 8>}, {pipeline_mode = #tpu.pipeline_mode<synchronous>, transform_indices = @transform_3, window_bounds = array<i64: 1, 8>}, {transform_indices = @transform_4, window_bounds = array<i64: 1, 32, 8>}, {transform_indices = @transform_5, window_bounds = array<i64: 1, 1, 8>}, {transform_indices = @transform_6, window_bounds = array<i64: 1, 1, 8>}]} {
    %cst = arith.constant 0.000000e+00 : f32
    %0 = vector.broadcast %cst : f32 to vector<30x8xf32>
    %c0 = arith.constant 0 : index
    %c0_0 = arith.constant 0 : index
    %c0_1 = arith.constant 0 : index
    %1 = vector.load %arg1[%c0, %c0_0, %c0_1] : memref<1x48x8xf32, #tpu.memory_space<vmem>>, vector<1x30x8xf32>
    %2 = vector.shape_cast %1 : vector<1x30x8xf32> to vector<30x8xf32>
    %c0_2 = arith.constant 0 : index
    %c0_3 = arith.constant 0 : index
    %3 = vector.load %arg3[%c0_2, %c0_3] : memref<1x8xf32, #tpu.memory_space<vmem>>, vector<1x8xf32>
    %4 = vector.broadcast %3 : vector<1x8xf32> to vector<30x8xf32>
    %5 = arith.mulf %2, %4 : vector<30x8xf32>
    %c0_4 = arith.constant 0 : index
    %c0_5 = arith.constant 0 : index
    %6 = vector.load %arg4[%c0_4, %c0_5] : memref<1x8xf32, #tpu.memory_space<vmem>>, vector<1x8xf32>
    %7 = vector.broadcast %6 : vector<1x8xf32> to vector<30x8xf32>
    %8 = arith.addf %5, %7 : vector<30x8xf32>
    %cst_6 = arith.constant 0.000000e+00 : f32
    %9 = vector.broadcast %cst_6 : f32 to vector<30x8xf32>
    %10 = arith.maximumf %8, %9 : vector<30x8xf32>
    %11 = arith.truncf %10 : vector<30x8xf32> to vector<30x8xbf16>
    %c0_7 = arith.constant 0 : index
    %c0_8 = arith.constant 0 : index
    %c0_9 = arith.constant 0 : index
    %12 = vector.load %arg2[%c0_7, %c0_8, %c0_9] : memref<9x8x8xbf16, #tpu.memory_space<vmem>>, vector<1x8x8xbf16>
    %13 = vector.shape_cast %12 : vector<1x8x8xbf16> to vector<8x8xbf16>
    %cst_10 = arith.constant dense<0.000000e+00> : vector<30x8xf32>
    %14 = tpu.matmul %11, %13, %cst_10 {dimension_numbers = #tpu.dot_dimension_numbers<[1], [0], [0], [1], [0, 0, 1, 1], [], []>} : vector<30x8xbf16>, vector<8x8xbf16>, vector<30x8xf32> -> vector<30x8xf32>
    %15 = arith.addf %0, %14 : vector<30x8xf32>
    %c0_11 = arith.constant 0 : index
    %c1 = arith.constant 1 : index
    %c0_12 = arith.constant 0 : index
    %16 = vector.load %arg1[%c0_11, %c1, %c0_12] : memref<1x48x8xf32, #tpu.memory_space<vmem>>, vector<1x30x8xf32>
    %17 = vector.shape_cast %16 : vector<1x30x8xf32> to vector<30x8xf32>
    %c0_13 = arith.constant 0 : index
    %c0_14 = arith.constant 0 : index
    %18 = vector.load %arg3[%c0_13, %c0_14] : memref<1x8xf32, #tpu.memory_space<vmem>>, vector<1x8xf32>
    %19 = vector.broadcast %18 : vector<1x8xf32> to vector<30x8xf32>
    %20 = arith.mulf %17, %19 : vector<30x8xf32>
    %c0_15 = arith.constant 0 : index
    %c0_16 = arith.constant 0 : index
    %21 = vector.load %arg4[%c0_15, %c0_16] : memref<1x8xf32, #tpu.memory_space<vmem>>, vector<1x8xf32>
    %22 = vector.broadcast %21 : vector<1x8xf32> to vector<30x8xf32>
    %23 = arith.addf %20, %22 : vector<30x8xf32>
    %cst_17 = arith.constant 0.000000e+00 : f32
    %24 = vector.broadcast %cst_17 : f32 to vector<30x8xf32>
    %25 = arith.maximumf %23, %24 : vector<30x8xf32>
    %26 = arith.truncf %25 : vector<30x8xf32> to vector<30x8xbf16>
    %c1_18 = arith.constant 1 : index
    %c0_19 = arith.constant 0 : index
    %c0_20 = arith.constant 0 : index
    %27 = vector.load %arg2[%c1_18, %c0_19, %c0_20] : memref<9x8x8xbf16, #tpu.memory_space<vmem>>, vector<1x8x8xbf16>
    %28 = vector.shape_cast %27 : vector<1x8x8xbf16> to vector<8x8xbf16>
    %cst_21 = arith.constant dense<0.000000e+00> : vector<30x8xf32>
    %29 = tpu.matmul %26, %28, %cst_21 {dimension_numbers = #tpu.dot_dimension_numbers<[1], [0], [0], [1], [0, 0, 1, 1], [], []>} : vector<30x8xbf16>, vector<8x8xbf16>, vector<30x8xf32> -> vector<30x8xf32>
    %30 = arith.addf %15, %29 : vector<30x8xf32>
    %c0_22 = arith.constant 0 : index
    %c2 = arith.constant 2 : index
    %c0_23 = arith.constant 0 : index
    %31 = vector.load %arg1[%c0_22, %c2, %c0_23] : memref<1x48x8xf32, #tpu.memory_space<vmem>>, vector<1x30x8xf32>
    %32 = vector.shape_cast %31 : vector<1x30x8xf32> to vector<30x8xf32>
    %c0_24 = arith.constant 0 : index
    %c0_25 = arith.constant 0 : index
    %33 = vector.load %arg3[%c0_24, %c0_25] : memref<1x8xf32, #tpu.memory_space<vmem>>, vector<1x8xf32>
    %34 = vector.broadcast %33 : vector<1x8xf32> to vector<30x8xf32>
    %35 = arith.mulf %32, %34 : vector<30x8xf32>
    %c0_26 = arith.constant 0 : index
    %c0_27 = arith.constant 0 : index
    %36 = vector.load %arg4[%c0_26, %c0_27] : memref<1x8xf32, #tpu.memory_space<vmem>>, vector<1x8xf32>
    %37 = vector.broadcast %36 : vector<1x8xf32> to vector<30x8xf32>
    %38 = arith.addf %35, %37 : vector<30x8xf32>
    %cst_28 = arith.constant 0.000000e+00 : f32
    %39 = vector.broadcast %cst_28 : f32 to vector<30x8xf32>
    %40 = arith.maximumf %38, %39 : vector<30x8xf32>
    %41 = arith.truncf %40 : vector<30x8xf32> to vector<30x8xbf16>
    %c2_29 = arith.constant 2 : index
    %c0_30 = arith.constant 0 : index
    %c0_31 = arith.constant 0 : index
    %42 = vector.load %arg2[%c2_29, %c0_30, %c0_31] : memref<9x8x8xbf16, #tpu.memory_space<vmem>>, vector<1x8x8xbf16>
    %43 = vector.shape_cast %42 : vector<1x8x8xbf16> to vector<8x8xbf16>
    %cst_32 = arith.constant dense<0.000000e+00> : vector<30x8xf32>
    %44 = tpu.matmul %41, %43, %cst_32 {dimension_numbers = #tpu.dot_dimension_numbers<[1], [0], [0], [1], [0, 0, 1, 1], [], []>} : vector<30x8xbf16>, vector<8x8xbf16>, vector<30x8xf32> -> vector<30x8xf32>
    %45 = arith.addf %30, %44 : vector<30x8xf32>
    %c0_33 = arith.constant 0 : index
    %c8 = arith.constant 8 : index
    %c0_34 = arith.constant 0 : index
    %46 = vector.load %arg1[%c0_33, %c8, %c0_34] : memref<1x48x8xf32, #tpu.memory_space<vmem>>, vector<1x30x8xf32>
    %47 = vector.shape_cast %46 : vector<1x30x8xf32> to vector<30x8xf32>
    %c0_35 = arith.constant 0 : index
    %c0_36 = arith.constant 0 : index
    %48 = vector.load %arg3[%c0_35, %c0_36] : memref<1x8xf32, #tpu.memory_space<vmem>>, vector<1x8xf32>
    %49 = vector.broadcast %48 : vector<1x8xf32> to vector<30x8xf32>
    %50 = arith.mulf %47, %49 : vector<30x8xf32>
    %c0_37 = arith.constant 0 : index
    %c0_38 = arith.constant 0 : index
    %51 = vector.load %arg4[%c0_37, %c0_38] : memref<1x8xf32, #tpu.memory_space<vmem>>, vector<1x8xf32>
    %52 = vector.broadcast %51 : vector<1x8xf32> to vector<30x8xf32>
    %53 = arith.addf %50, %52 : vector<30x8xf32>
    %cst_39 = arith.constant 0.000000e+00 : f32
    %54 = vector.broadcast %cst_39 : f32 to vector<30x8xf32>
    %55 = arith.maximumf %53, %54 : vector<30x8xf32>
    %56 = arith.truncf %55 : vector<30x8xf32> to vector<30x8xbf16>
    %c3 = arith.constant 3 : index
    %c0_40 = arith.constant 0 : index
    %c0_41 = arith.constant 0 : index
    %57 = vector.load %arg2[%c3, %c0_40, %c0_41] : memref<9x8x8xbf16, #tpu.memory_space<vmem>>, vector<1x8x8xbf16>
    %58 = vector.shape_cast %57 : vector<1x8x8xbf16> to vector<8x8xbf16>
    %cst_42 = arith.constant dense<0.000000e+00> : vector<30x8xf32>
    %59 = tpu.matmul %56, %58, %cst_42 {dimension_numbers = #tpu.dot_dimension_numbers<[1], [0], [0], [1], [0, 0, 1, 1], [], []>} : vector<30x8xbf16>, vector<8x8xbf16>, vector<30x8xf32> -> vector<30x8xf32>
    %60 = arith.addf %45, %59 : vector<30x8xf32>
    %c0_43 = arith.constant 0 : index
    %c9 = arith.constant 9 : index
    %c0_44 = arith.constant 0 : index
    %61 = vector.load %arg1[%c0_43, %c9, %c0_44] : memref<1x48x8xf32, #tpu.memory_space<vmem>>, vector<1x30x8xf32>
    %62 = vector.shape_cast %61 : vector<1x30x8xf32> to vector<30x8xf32>
    %c0_45 = arith.constant 0 : index
    %c0_46 = arith.constant 0 : index
    %63 = vector.load %arg3[%c0_45, %c0_46] : memref<1x8xf32, #tpu.memory_space<vmem>>, vector<1x8xf32>
    %64 = vector.broadcast %63 : vector<1x8xf32> to vector<30x8xf32>
    %65 = arith.mulf %62, %64 : vector<30x8xf32>
    %c0_47 = arith.constant 0 : index
    %c0_48 = arith.constant 0 : index
    %66 = vector.load %arg4[%c0_47, %c0_48] : memref<1x8xf32, #tpu.memory_space<vmem>>, vector<1x8xf32>
    %67 = vector.broadcast %66 : vector<1x8xf32> to vector<30x8xf32>
    %68 = arith.addf %65, %67 : vector<30x8xf32>
    %cst_49 = arith.constant 0.000000e+00 : f32
    %69 = vector.broadcast %cst_49 : f32 to vector<30x8xf32>
    %70 = arith.maximumf %68, %69 : vector<30x8xf32>
    %71 = arith.truncf %70 : vector<30x8xf32> to vector<30x8xbf16>
    %c4 = arith.constant 4 : index
    %c0_50 = arith.constant 0 : index
    %c0_51 = arith.constant 0 : index
    %72 = vector.load %arg2[%c4, %c0_50, %c0_51] : memref<9x8x8xbf16, #tpu.memory_space<vmem>>, vector<1x8x8xbf16>
    %73 = vector.shape_cast %72 : vector<1x8x8xbf16> to vector<8x8xbf16>
    %cst_52 = arith.constant dense<0.000000e+00> : vector<30x8xf32>
    %74 = tpu.matmul %71, %73, %cst_52 {dimension_numbers = #tpu.dot_dimension_numbers<[1], [0], [0], [1], [0, 0, 1, 1], [], []>} : vector<30x8xbf16>, vector<8x8xbf16>, vector<30x8xf32> -> vector<30x8xf32>
    %75 = arith.addf %60, %74 : vector<30x8xf32>
    %c0_53 = arith.constant 0 : index
    %c10 = arith.constant 10 : index
    %c0_54 = arith.constant 0 : index
    %76 = vector.load %arg1[%c0_53, %c10, %c0_54] : memref<1x48x8xf32, #tpu.memory_space<vmem>>, vector<1x30x8xf32>
    %77 = vector.shape_cast %76 : vector<1x30x8xf32> to vector<30x8xf32>
    %c0_55 = arith.constant 0 : index
    %c0_56 = arith.constant 0 : index
    %78 = vector.load %arg3[%c0_55, %c0_56] : memref<1x8xf32, #tpu.memory_space<vmem>>, vector<1x8xf32>
    %79 = vector.broadcast %78 : vector<1x8xf32> to vector<30x8xf32>
    %80 = arith.mulf %77, %79 : vector<30x8xf32>
    %c0_57 = arith.constant 0 : index
    %c0_58 = arith.constant 0 : index
    %81 = vector.load %arg4[%c0_57, %c0_58] : memref<1x8xf32, #tpu.memory_space<vmem>>, vector<1x8xf32>
    %82 = vector.broadcast %81 : vector<1x8xf32> to vector<30x8xf32>
    %83 = arith.addf %80, %82 : vector<30x8xf32>
    %cst_59 = arith.constant 0.000000e+00 : f32
    %84 = vector.broadcast %cst_59 : f32 to vector<30x8xf32>
    %85 = arith.maximumf %83, %84 : vector<30x8xf32>
    %86 = arith.truncf %85 : vector<30x8xf32> to vector<30x8xbf16>
    %c5 = arith.constant 5 : index
    %c0_60 = arith.constant 0 : index
    %c0_61 = arith.constant 0 : index
    %87 = vector.load %arg2[%c5, %c0_60, %c0_61] : memref<9x8x8xbf16, #tpu.memory_space<vmem>>, vector<1x8x8xbf16>
    %88 = vector.shape_cast %87 : vector<1x8x8xbf16> to vector<8x8xbf16>
    %cst_62 = arith.constant dense<0.000000e+00> : vector<30x8xf32>
    %89 = tpu.matmul %86, %88, %cst_62 {dimension_numbers = #tpu.dot_dimension_numbers<[1], [0], [0], [1], [0, 0, 1, 1], [], []>} : vector<30x8xbf16>, vector<8x8xbf16>, vector<30x8xf32> -> vector<30x8xf32>
    %90 = arith.addf %75, %89 : vector<30x8xf32>
    %c0_63 = arith.constant 0 : index
    %c16 = arith.constant 16 : index
    %c0_64 = arith.constant 0 : index
    %91 = vector.load %arg1[%c0_63, %c16, %c0_64] : memref<1x48x8xf32, #tpu.memory_space<vmem>>, vector<1x30x8xf32>
    %92 = vector.shape_cast %91 : vector<1x30x8xf32> to vector<30x8xf32>
    %c0_65 = arith.constant 0 : index
    %c0_66 = arith.constant 0 : index
    %93 = vector.load %arg3[%c0_65, %c0_66] : memref<1x8xf32, #tpu.memory_space<vmem>>, vector<1x8xf32>
    %94 = vector.broadcast %93 : vector<1x8xf32> to vector<30x8xf32>
    %95 = arith.mulf %92, %94 : vector<30x8xf32>
    %c0_67 = arith.constant 0 : index
    %c0_68 = arith.constant 0 : index
    %96 = vector.load %arg4[%c0_67, %c0_68] : memref<1x8xf32, #tpu.memory_space<vmem>>, vector<1x8xf32>
    %97 = vector.broadcast %96 : vector<1x8xf32> to vector<30x8xf32>
    %98 = arith.addf %95, %97 : vector<30x8xf32>
    %cst_69 = arith.constant 0.000000e+00 : f32
    %99 = vector.broadcast %cst_69 : f32 to vector<30x8xf32>
    %100 = arith.maximumf %98, %99 : vector<30x8xf32>
    %101 = arith.truncf %100 : vector<30x8xf32> to vector<30x8xbf16>
    %c6 = arith.constant 6 : index
    %c0_70 = arith.constant 0 : index
    %c0_71 = arith.constant 0 : index
    %102 = vector.load %arg2[%c6, %c0_70, %c0_71] : memref<9x8x8xbf16, #tpu.memory_space<vmem>>, vector<1x8x8xbf16>
    %103 = vector.shape_cast %102 : vector<1x8x8xbf16> to vector<8x8xbf16>
    %cst_72 = arith.constant dense<0.000000e+00> : vector<30x8xf32>
    %104 = tpu.matmul %101, %103, %cst_72 {dimension_numbers = #tpu.dot_dimension_numbers<[1], [0], [0], [1], [0, 0, 1, 1], [], []>} : vector<30x8xbf16>, vector<8x8xbf16>, vector<30x8xf32> -> vector<30x8xf32>
    %105 = arith.addf %90, %104 : vector<30x8xf32>
    %c0_73 = arith.constant 0 : index
    %c17 = arith.constant 17 : index
    %c0_74 = arith.constant 0 : index
    %106 = vector.load %arg1[%c0_73, %c17, %c0_74] : memref<1x48x8xf32, #tpu.memory_space<vmem>>, vector<1x30x8xf32>
    %107 = vector.shape_cast %106 : vector<1x30x8xf32> to vector<30x8xf32>
    %c0_75 = arith.constant 0 : index
    %c0_76 = arith.constant 0 : index
    %108 = vector.load %arg3[%c0_75, %c0_76] : memref<1x8xf32, #tpu.memory_space<vmem>>, vector<1x8xf32>
    %109 = vector.broadcast %108 : vector<1x8xf32> to vector<30x8xf32>
    %110 = arith.mulf %107, %109 : vector<30x8xf32>
    %c0_77 = arith.constant 0 : index
    %c0_78 = arith.constant 0 : index
    %111 = vector.load %arg4[%c0_77, %c0_78] : memref<1x8xf32, #tpu.memory_space<vmem>>, vector<1x8xf32>
    %112 = vector.broadcast %111 : vector<1x8xf32> to vector<30x8xf32>
    %113 = arith.addf %110, %112 : vector<30x8xf32>
    %cst_79 = arith.constant 0.000000e+00 : f32
    %114 = vector.broadcast %cst_79 : f32 to vector<30x8xf32>
    %115 = arith.maximumf %113, %114 : vector<30x8xf32>
    %116 = arith.truncf %115 : vector<30x8xf32> to vector<30x8xbf16>
    %c7 = arith.constant 7 : index
    %c0_80 = arith.constant 0 : index
    %c0_81 = arith.constant 0 : index
    %117 = vector.load %arg2[%c7, %c0_80, %c0_81] : memref<9x8x8xbf16, #tpu.memory_space<vmem>>, vector<1x8x8xbf16>
    %118 = vector.shape_cast %117 : vector<1x8x8xbf16> to vector<8x8xbf16>
    %cst_82 = arith.constant dense<0.000000e+00> : vector<30x8xf32>
    %119 = tpu.matmul %116, %118, %cst_82 {dimension_numbers = #tpu.dot_dimension_numbers<[1], [0], [0], [1], [0, 0, 1, 1], [], []>} : vector<30x8xbf16>, vector<8x8xbf16>, vector<30x8xf32> -> vector<30x8xf32>
    %120 = arith.addf %105, %119 : vector<30x8xf32>
    %c0_83 = arith.constant 0 : index
    %c18 = arith.constant 18 : index
    %c0_84 = arith.constant 0 : index
    %121 = vector.load %arg1[%c0_83, %c18, %c0_84] : memref<1x48x8xf32, #tpu.memory_space<vmem>>, vector<1x30x8xf32>
    %122 = vector.shape_cast %121 : vector<1x30x8xf32> to vector<30x8xf32>
    %c0_85 = arith.constant 0 : index
    %c0_86 = arith.constant 0 : index
    %123 = vector.load %arg3[%c0_85, %c0_86] : memref<1x8xf32, #tpu.memory_space<vmem>>, vector<1x8xf32>
    %124 = vector.broadcast %123 : vector<1x8xf32> to vector<30x8xf32>
    %125 = arith.mulf %122, %124 : vector<30x8xf32>
    %c0_87 = arith.constant 0 : index
    %c0_88 = arith.constant 0 : index
    %126 = vector.load %arg4[%c0_87, %c0_88] : memref<1x8xf32, #tpu.memory_space<vmem>>, vector<1x8xf32>
    %127 = vector.broadcast %126 : vector<1x8xf32> to vector<30x8xf32>
    %128 = arith.addf %125, %127 : vector<30x8xf32>
    %cst_89 = arith.constant 0.000000e+00 : f32
    %129 = vector.broadcast %cst_89 : f32 to vector<30x8xf32>
    %130 = arith.maximumf %128, %129 : vector<30x8xf32>
    %131 = arith.truncf %130 : vector<30x8xf32> to vector<30x8xbf16>
    %c8_90 = arith.constant 8 : index
    %c0_91 = arith.constant 0 : index
    %c0_92 = arith.constant 0 : index
    %132 = vector.load %arg2[%c8_90, %c0_91, %c0_92] : memref<9x8x8xbf16, #tpu.memory_space<vmem>>, vector<1x8x8xbf16>
    %133 = vector.shape_cast %132 : vector<1x8x8xbf16> to vector<8x8xbf16>
    %cst_93 = arith.constant dense<0.000000e+00> : vector<30x8xf32>
    %134 = tpu.matmul %131, %133, %cst_93 {dimension_numbers = #tpu.dot_dimension_numbers<[1], [0], [0], [1], [0, 0, 1, 1], [], []>} : vector<30x8xbf16>, vector<8x8xbf16>, vector<30x8xf32> -> vector<30x8xf32>
    %135 = arith.addf %120, %134 : vector<30x8xf32>
    %cst_94 = arith.constant 0.000000e+00 : f32
    %136 = vector.broadcast %cst_94 : f32 to vector<32x8xf32>
    %c0_95 = arith.constant 0 : index
    %c0_96 = arith.constant 0 : index
    %c0_97 = arith.constant 0 : index
    %137 = vector.load %arg5[%c0_95, %c0_96, %c0_97] : memref<1x32x8xf32, #tpu.memory_space<vmem>>, vector<1x32x8xf32>
    %138 = vector.shape_cast %137 : vector<1x32x8xf32> to vector<32x8xf32>
    %139 = vector.shape_cast %136 : vector<32x8xf32> to vector<1x32x8xf32>
    tpu.vector_store %arg5[%c0_95, %c0_96, %c0_97], %139 {strides = array<i32>} : memref<1x32x8xf32, #tpu.memory_space<vmem>>, vector<1x32x8xf32>,
    %c0_98 = arith.constant 0 : index
    %c0_99 = arith.constant 0 : index
    %c0_100 = arith.constant 0 : index
    %140 = vector.load %arg5[%c0_98, %c0_99, %c0_100] : memref<1x32x8xf32, #tpu.memory_space<vmem>>, vector<1x30x8xf32>
    %141 = vector.shape_cast %140 : vector<1x30x8xf32> to vector<30x8xf32>
    %142 = vector.shape_cast %135 : vector<30x8xf32> to vector<1x30x8xf32>
    tpu.vector_store %arg5[%c0_98, %c0_99, %c0_100], %142 {strides = array<i32>} : memref<1x32x8xf32, #tpu.memory_space<vmem>>, vector<1x30x8xf32>,
    %143 = tpu.iota {dimensions = array<i32: 0>} : vector<30x8xi32>
    %c8_i32 = arith.constant 8 : i32
    %c0_i32 = arith.constant 0 : i32
    %144 = arith.cmpi eq, %c8_i32, %c0_i32 : i32
    %c1_i32 = arith.constant 1 : i32
    %145 = arith.select %144, %c1_i32, %c8_i32 : i32
    %146 = vector.broadcast %145 : i32 to vector<30x8xi32>
    %147 = arith.remsi %143, %146 : vector<30x8xi32>
    %c0_i32_101 = arith.constant 0 : i32
    %148 = vector.broadcast %c0_i32_101 : i32 to vector<30x8xi32>
    %149 = arith.cmpi ne, %147, %148 : vector<30x8xi32>
    %c0_i32_102 = arith.constant 0 : i32
    %150 = vector.broadcast %c0_i32_102 : i32 to vector<30x8xi32>
    %151 = arith.cmpi slt, %147, %150 : vector<30x8xi32>
    %c0_i32_103 = arith.constant 0 : i32
    %152 = arith.cmpi slt, %145, %c0_i32_103 : i32
    %153 = vector.broadcast %152 : i1 to vector<30x8xi1>
    %154 = vector.broadcast %153 : vector<30x8xi1> to vector<30x8xi1>
    %155 = arith.xori %151, %154 : vector<30x8xi1>
    %156 = arith.andi %155, %149 : vector<30x8xi1>
    %157 = vector.broadcast %145 : i32 to vector<30x8xi32>
    %158 = arith.addi %147, %157 : vector<30x8xi32>
    %159 = arith.select %156, %158, %147 : vector<30x8xi1>, vector<30x8xi32>
    %c4_i32 = arith.constant 4 : i32
    %160 = vector.broadcast %c4_i32 : i32 to vector<30x8xi32>
    %161 = arith.cmpi slt, %159, %160 : vector<30x8xi32>
    %cst_104 = arith.constant 0.000000e+00 : f32
    %162 = vector.broadcast %cst_104 : f32 to vector<30x8xf32>
    %163 = arith.select %161, %135, %162 : vector<30x8xi1>, vector<30x8xf32>
    %cst_105 = arith.constant dense<0.000000e+00> : vector<8xf32>
    %164 = vector.multi_reduction <add>, %163, %cst_105 [0] : vector<30x8xf32> to vector<8xf32>
    %165 = vector.shape_cast %164 : vector<8xf32> to vector<1x8xf32>
    %c0_106 = arith.constant 0 : index
    %c0_107 = arith.constant 0 : index
    %c0_108 = arith.constant 0 : index
    %166 = vector.load %arg6[%c0_106, %c0_107, %c0_108] : memref<1x1x8xf32, #tpu.memory_space<vmem>>, vector<1x1x8xf32>
    %167 = vector.shape_cast %166 : vector<1x1x8xf32> to vector<1x8xf32>
    %168 = vector.shape_cast %165 : vector<1x8xf32> to vector<1x1x8xf32>
    tpu.vector_store %arg6[%c0_106, %c0_107, %c0_108], %168 {strides = array<i32>} : memref<1x1x8xf32, #tpu.memory_space<vmem>>, vector<1x1x8xf32>,
    %169 = arith.mulf %163, %163 : vector<30x8xf32>
    %cst_109 = arith.constant dense<0.000000e+00> : vector<8xf32>
    %170 = vector.multi_reduction <add>, %169, %cst_109 [0] : vector<30x8xf32> to vector<8xf32>
    %171 = vector.shape_cast %170 : vector<8xf32> to vector<1x8xf32>
    %c0_110 = arith.constant 0 : index
    %c0_111 = arith.constant 0 : index
    %c0_112 = arith.constant 0 : index
    %172 = vector.load %arg7[%c0_110, %c0_111, %c0_112] : memref<1x1x8xf32, #tpu.memory_space<vmem>>, vector<1x1x8xf32>
    %173 = vector.shape_cast %172 : vector<1x1x8xf32> to vector<1x8xf32>
    %174 = vector.shape_cast %171 : vector<1x8xf32> to vector<1x1x8xf32>
    tpu.vector_store %arg7[%c0_110, %c0_111, %c0_112], %174 {strides = array<i32>} : memref<1x1x8xf32, #tpu.memory_space<vmem>>, vector<1x1x8xf32>,
    return
  }
  func.func @transform_0(%arg0: i32) -> (i32, i32, i32) {
    %c0_i32 = arith.constant 0 : i32
    %c0_i32_0 = arith.constant 0 : i32
    %c0_i32_1 = arith.constant 0 : i32
    return %arg0, %c0_i32, %c0_i32_0 : i32, i32, i32
  }
  func.func @transform_1(%arg0: i32) -> (i32, i32, i32) {
    %c0_i32 = arith.constant 0 : i32
    %c0_i32_0 = arith.constant 0 : i32
    %c0_i32_1 = arith.constant 0 : i32
    %c0_i32_2 = arith.constant 0 : i32
    return %c0_i32, %c0_i32_0, %c0_i32_1 : i32, i32, i32
  }
  func.func @transform_2(%arg0: i32) -> (i32, i32) {
    %c0_i32 = arith.constant 0 : i32
    %c0_i32_0 = arith.constant 0 : i32
    %c0_i32_1 = arith.constant 0 : i32
    return %c0_i32, %c0_i32_0 : i32, i32
  }
  func.func @transform_3(%arg0: i32) -> (i32, i32) {
    %c0_i32 = arith.constant 0 : i32
    %c0_i32_0 = arith.constant 0 : i32
    %c0_i32_1 = arith.constant 0 : i32
    return %c0_i32, %c0_i32_0 : i32, i32
  }
  func.func @transform_4(%arg0: i32) -> (i32, i32, i32) {
    %c0_i32 = arith.constant 0 : i32
    %c0_i32_0 = arith.constant 0 : i32
    %c0_i32_1 = arith.constant 0 : i32
    return %arg0, %c0_i32, %c0_i32_0 : i32, i32, i32
  }
  func.func @transform_5(%arg0: i32) -> (i32, i32, i32) {
    %c0_i32 = arith.constant 0 : i32
    %c0_i32_0 = arith.constant 0 : i32
    %c0_i32_1 = arith.constant 0 : i32
    return %arg0, %c0_i32, %c0_i32_0 : i32, i32, i32
  }
  func.func @transform_6(%arg0: i32) -> (i32, i32, i32) {
    %c0_i32 = arith.constant 0 : i32
    %c0_i32_0 = arith.constant 0 : i32
    %c0_i32_1 = arith.constant 0 : i32
    return %arg0, %c0_i32, %c0_i32_0 : i32, i32, i32
  }
}

</mosaic_0001>

<llo_original>
// kernel: down_step.7
$region0: #{down_step.7}
  #allocation0 [shape = 'u32[]', space=smem, size = 0x4, offset = 0x4, fixed_abs, tag = 'smem constant byte address 0x4 - core index']
  #allocation1 [shape = 'u32[72,128]{1,0:T(1,128)}', space=vmem, size = 0x9000, scoped, tag = 'internal scratch']
  %s0 = inlined_call_operand.vmem [shape: f32[2,32,8], index: 0, kind: input, shape index: {}]
  %s1 = inlined_call_operand.vmem [shape: f32[1,8], index: 1, kind: input, shape index: {}]
  %s2 = inlined_call_operand.vmem [shape: f32[1,8], index: 2, kind: input, shape index: {}]
  %s3 = inlined_call_operand.hbm [shape: f32[2,4,4,8], index: 3, kind: output, shape index: {}]
  %s4 = sld [smem:[#allocation0]]
  $region45: #{down_step.7} parent=0
    _
  %s6 = ssub.s32 1, %s4
  %s7 = scalar_select 0, %s6, %s4
  $region1: #{down_step.7} parent=0
    #allocation2 [shape = 'u8[4096]{0}', space=vmem, size = 0x1000, scoped, tag = 'output window, operand 0']
    #allocation3 [shape = 's32[2]{0}', space=sflag, size = 0x8, scoped, tag = 'scoped memory for down_step.7']
    %8 = vsyncpa [#allocation3], 0
    %s9 = scalar_lea.sflag [#allocation3], 1
    %10 = vsyncpa %s9, 0
    loop: start=0, step=1, limit=10
    $region2: #{down_step.7} parent=1 // loop_pre_header
      _
    $region3: #{down_step.7} parent=1 // loop_header
      %s12 = sphi 0, %s16
      %p13 = scmp.ge.s32.totalorder %s12, 10
      %s19 = sphi 0, %s31
      %s20 = sphi 0, %s27
      %s21 = sphi 0, %s19
      %s22 = sphi 0, %s20
      %s23 = sphi 0, %s21
      %s24 = sphi 0, %s22
      %s36 = sphi 0, %s38
      %s39 = sphi 0, %s36
      %s40 = sphi 0, %s39
      %s56 = sphi 0, %s40
      %s60 = sphi 0, %s60
      %s62 = sphi 0, %s60
      %s63 = sphi 0, %s62
      %s77 = sphi 0, %s63
      %s81 = sphi 0, %s81
      %s83 = sphi 0, %s81
      %s84 = sphi 0, %s83
      %s98 = sphi 0, %s84
      %s106 = sphi 0, %s108
      %s109 = sphi 0, %s106
      %s110 = sphi 0, %s109
      %s126 = sphi 0, %s110
    $region4: #{down_step.7} parent=1 // loop_header_branch
      %15 = sbr.rel (%p13) target = $region8
    $region5: #{down_step.7} parent=1 // loop_body
      %s17 = ssub.s32 %s12, 1
      %s18 = ssub.s32 %s12, 2
      %s25 = sadd.s32 1, %s20
      %p26 = scmp.ge.s32.totalorder %s25, 4
      %s27 = scalar_select %p26, 0, %s25
      %s28 = sadd.s32 1, %s19
      %s29 = scalar_select %p26, %s28, %s19
      %p30 = scmp.ge.s32.totalorder %s29, 2
      %s31 = scalar_select %p30, 0, %s29
      %s32 = ssub.s32 %s19, %s31
      %s33 = ssub.s32 %s20, %s27
      %s34 = sor.u32 %s32, %s33
      %p35 = scmp.eq.s32.totalorder %s34, 0
      %s37 = sadd.s32 %s36, 1
      %s38 = scalar_select %p35, %s36, %s37
      %p41 = pneg %p35
      %p42 = scmp.eq.s32.totalorder %s12, 7
      %p43 = por %p41, %p42
      %p44 = scmp.ne.s32.totalorder %s36, %s39
      %p45 = scmp.eq.s32.totalorder %s12, 0
      %p46 = por %p44, %p45
      %p47 = scmp.ne.s32.totalorder %s36, %s39
      %p48 = scmp.eq.s32.totalorder %s17, 7
      %p49 = por %p47, %p48
      %p50 = scmp.ne.s32.totalorder %s39, %s40
      %p51 = scmp.eq.s32.totalorder %s17, 0
      %p52 = por %p50, %p51
      %p53 = scmp.ne.s32.totalorder %s39, %s40
      %p54 = scmp.eq.s32.totalorder %s18, 7
      %p55 = por %p53, %p54
      %p57 = scmp.ne.s32.totalorder %s40, %s56
      %p58 = scmp.eq.s32.totalorder %s18, 0
      %p59 = por %p57, %p58
      %s61 = sadd.s32 %s60, 1
      %p64 = scmp.eq.s32.totalorder %s12, 7
      %p65 = scmp.ne.s32.totalorder %s60, %s62
      %p66 = scmp.eq.s32.totalorder %s12, 0
      %p67 = por %p65, %p66
      %p68 = scmp.ne.s32.totalorder %s60, %s62
      %p69 = scmp.eq.s32.totalorder %s17, 7
      %p70 = por %p68, %p69
      %p71 = scmp.ne.s32.totalorder %s62, %s63
      %p72 = scmp.eq.s32.totalorder %s17, 0
      %p73 = por %p71, %p72
      %p74 = scmp.ne.s32.totalorder %s62, %s63
      %p75 = scmp.eq.s32.totalorder %s18, 7
      %p76 = por %p74, %p75
      %p78 = scmp.ne.s32.totalorder %s63, %s77
      %p79 = scmp.eq.s32.totalorder %s18, 0
      %p80 = por %p78, %p79
      %s82 = sadd.s32 %s81, 1
      %p85 = scmp.eq.s32.totalorder %s12, 7
      %p86 = scmp.ne.s32.totalorder %s81, %s83
      %p87 = scmp.eq.s32.totalorder %s12, 0
      %p88 = por %p86, %p87
      %p89 = scmp.ne.s32.totalorder %s81, %s83
      %p90 = scmp.eq.s32.totalorder %s17, 7
      %p91 = por %p89, %p90
      %p92 = scmp.ne.s32.totalorder %s83, %s84
      %p93 = scmp.eq.s32.totalorder %s17, 0
      %p94 = por %p92, %p93
      %p95 = scmp.ne.s32.totalorder %s83, %s84
      %p96 = scmp.eq.s32.totalorder %s18, 7
      %p97 = por %p95, %p96
      %p99 = scmp.ne.s32.totalorder %s84, %s98
      %p100 = scmp.eq.s32.totalorder %s18, 0
      %p101 = por %p99, %p100
      %s102 = ssub.s32 %s19, %s31
      %s103 = ssub.s32 %s20, %s27
      %s104 = sor.u32 %s102, %s103
      %p105 = scmp.eq.s32.totalorder %s104, 0
      %s107 = sadd.s32 %s106, 1
      %s108 = scalar_select %p105, %s106, %s107
      %p111 = pneg %p105
      %p112 = scmp.eq.s32.totalorder %s12, 7
      %p113 = por %p111, %p112
      %p114 = scmp.ne.s32.totalorder %s106, %s109
      %p115 = scmp.eq.s32.totalorder %s12, 0
      %p116 = por %p114, %p115
      %p117 = scmp.ne.s32.totalorder %s106, %s109
      %p118 = scmp.eq.s32.totalorder %s17, 7
      %p119 = por %p117, %p118
      %p120 = scmp.ne.s32.totalorder %s109, %s110
      %p121 = scmp.eq.s32.totalorder %s17, 0
      %p122 = por %p120, %p121
      %p123 = scmp.ne.s32.totalorder %s109, %s110
      %p124 = scmp.eq.s32.totalorder %s18, 7
      %p125 = por %p123, %p124
      %p127 = scmp.ne.s32.totalorder %s110, %s126
      %p128 = scmp.eq.s32.totalorder %s18, 0
      %p129 = por %p127, %p128
      %p130 = scmp.le.s32.totalorder 1, %s12
      %p131 = scmp.lt.s32.totalorder %s12, 9
      %p132 = pnand %p130, %p131
      %p133 = pneg %p132
      // Predicated region
      $region9: #{down_step.7} parent=5 // pred_check
        _
      $region10: #{down_step.7} parent=5 // pred_check_branch
        %135 = sbr.rel (%p132) target = $region12
      $region11: #{down_step.7} parent=5 // pred_region
        %s136 = ssub.s32 %s12, 1
        // Predicated region
        $region13: #{down_step.7} parent=11 // pred_check
          %p137 = pneg %p73
        $region14: #{down_step.7} parent=11 // pred_check_branch
          %139 = sbr.rel (%p137) target = $region16
        $region15: #{down_step.7} parent=11 // pred_region
          _
        $region16: #{down_step.7} parent=11 // pred_fallthru
          _
        // Predicated region
        $region17: #{down_step.7} parent=11 // pred_check
          %p140 = pneg %p94
        $region18: #{down_step.7} parent=11 // pred_check_branch
          %142 = sbr.rel (%p140) target = $region20
        $region19: #{down_step.7} parent=11 // pred_region
          _
        $region20: #{down_step.7} parent=11 // pred_fallthru
          _
      $region12: #{down_step.7} parent=5 // pred_fallthru
        _
      %p143 = scmp.lt.s32.totalorder %s12, 8
      // Predicated region
      $region21: #{down_step.7} parent=5 // pred_check
        %p144 = pneg %p143
      $region22: #{down_step.7} parent=5 // pred_check_branch
        %146 = sbr.rel (%p144) target = $region24
      $region23: #{down_step.7} parent=5 // pred_region
        // Predicated region
        $region25: #{down_step.7} parent=23 // pred_check
          %p147 = pneg %p46
        $region26: #{down_step.7} parent=23 // pred_check_branch
          %149 = sbr.rel (%p147) target = $region28
        $region27: #{down_step.7} parent=23 // pred_region
          %p150 = scmp.lt.s32.totalorder %s19, 1
          %s151 = scalar_select %p150, %s19, 1
          %p152 = scmp.lt.s32.totalorder %s20, 3
          %s153 = scalar_select %p152, %s20, 3
          %s154 = smul.addr %s151, 4
          %s155 = sadd.s32 %s153, %s154
          %s156 = smul.addr %s155, 8
          %s157 = scalar_lea.vmem %s0, %s156
        $region28: #{down_step.7} parent=23 // pred_fallthru
          _
      $region24: #{down_step.7} parent=5 // pred_fallthru
        _
      %p158 = scmp.le.s32.totalorder 1, %s12
      %p159 = scmp.lt.s32.totalorder %s12, 9
      %p160 = pnand %p158, %p159
      %p161 = pneg %p160
      // Predicated region
      $region29: #{down_step.7} parent=5 // pred_check
        _
      $region30: #{down_step.7} parent=5 // pred_check_branch
        %163 = sbr.rel (%p160) target = $region32
      $region31: #{down_step.7} parent=5 // pred_region
        %s164 = ssub.s32 %s12, 1
        %p165 = scmp.lt.s32.totalorder %s21, 1
        %s166 = scalar_select %p165, %s21, 1
        %p167 = scmp.lt.s32.totalorder %s22, 3
        %s168 = scalar_select %p167, %s22, 3
        %s169 = smul.addr %s166, 4
        %s170 = sadd.s32 %s168, %s169
        %s171 = smul.addr %s170, 8
        %s172 = scalar_lea.vmem %s0, %s171
        %p173 = pneg %p52
        %p174 = pneg %p49
        %p175 = pneg %p73
        %p176 = pneg %p70
        %p177 = pneg %p94
        %p178 = pneg %p91
        %p179 = pneg %p122
        %p180 = pneg %p119
        %s181 = sand.u32 %s109, 1
        %s182 = scalar_lea.sflag [#allocation3], %s181
        %s183 = sand.u32 %s109, 1
        %s184 = smul.addr %s183, 4
        %s185 = scalar_lea.vmem [#allocation2], %s184
        %p186 = scmp.lt.s32.totalorder %s21, 1
        %s187 = scalar_select %p186, %s21, 1
        %p188 = scmp.lt.s32.totalorder %s22, 3
        %s189 = scalar_select %p188, %s22, 3
        %s190 = smul.addr %s187, 4
        %s191 = sadd.s32 %s189, %s190
        %s192 = smul.addr %s191, 8
        %s193 = scalar_lea.vmem %s0, %s192
        %v194 = vld [vmem:[%s193] sm:$0xf]
        %v195 = vld [vmem:[%s1] sm:$0x1]
        %v197 = vperm.slane %v195, 0
        %v199 = vmul.f32 %v194, %v197
        %v200 = vld [vmem:[%s2] sm:$0x1]
        %v202 = vperm.slane %v200, 0
        %v204 = vadd.f32 %v199, %v202
        %v205 = vmax.f32 %v204, 0.0
        %vm206 = vcmask 60416
        %207 = vst.msk [vmem:[%s185] sm:$0xf] %vm206, %v205
        %s208 = sand.u32 %s109, 1
        %s209 = scalar_lea.sflag [#allocation3], %s208
        %s210 = sand.u32 %s109, 1
        %s211 = smul.addr %s210, 4
        %s212 = scalar_lea.vmem [#allocation2], %s211
        // Predicated region
        $region33: #{down_step.7} parent=31 // pred_check
          %p213 = pneg %p119
        $region34: #{down_step.7} parent=31 // pred_check_branch
          %215 = sbr.rel (%p213) target = $region36
        $region35: #{down_step.7} parent=31 // pred_region
          %217 = vsyncadd %s209, 0
          %s218 = smul.addr %s21, 4
          %s219 = sadd.s32 %s22, %s218
          %s220 = smul.addr %s219, 4
          %s221 = scalar_lea.hbm %s3, %s220
          %s223 = sshll.u32 %s212, 4
          %s224 = int_to_ptr.vmem [resolvable:$true] %s223
          %s225 = sshll.u32 %s221, 4
          %s226 = int_to_ptr.hbm [resolvable:$true] %s225
          %228 = dma.vmem_to_hbm [thread:$0]  %s224, 64, %s226, %s209
        $region36: #{down_step.7} parent=31 // pred_fallthru
          _
      $region32: #{down_step.7} parent=5 // pred_fallthru
        _
      %p229 = scmp.le.s32.totalorder 2, %s12
      // Predicated region
      $region37: #{down_step.7} parent=5 // pred_check
        %p230 = pneg %p229
      $region38: #{down_step.7} parent=5 // pred_check_branch
        %232 = sbr.rel (%p230) target = $region40
      $region39: #{down_step.7} parent=5 // pred_region
        %s233 = ssub.s32 %s12, 2
        // Predicated region
        $region41: #{down_step.7} parent=39 // pred_check
          %p234 = pneg %p125
        $region42: #{down_step.7} parent=39 // pred_check_branch
          %236 = sbr.rel (%p234) target = $region44
        $region43: #{down_step.7} parent=39 // pred_region
          %s237 = sand.u32 %s110, 1
          %s238 = scalar_lea.sflag [#allocation3], %s237
          %s239 = sand.u32 %s110, 1
          %s240 = smul.addr %s239, 4
          %s241 = scalar_lea.vmem [#allocation2], %s240
          %243 = dma.done %s238, 64
        $region44: #{down_step.7} parent=39 // pred_fallthru
          _
      $region40: #{down_step.7} parent=5 // pred_fallthru
        _
    $region6: #{down_step.7} parent=1 // loop_footer
      %s16 = sadd.s32 1, %s12
    $region7: #{down_step.7} parent=1 // loop_footer_branch
      %11 = sbr.rel target = $region3
    $region8: #{down_step.7} parent=1 // loop_exit
      _
    %244 = vsyncpa [#allocation3], 1
    %s245 = scalar_lea.sflag [#allocation3], 1
    %246 = vsyncpa %s245, 1

// kernel: down_step.4
$region0: #{down_step.4}
  #allocation0 [shape = 'u32[]', space=smem, size = 0x4, offset = 0x4, fixed_abs, tag = 'smem constant byte address 0x4 - core index']
  #allocation1 [shape = 'u32[72,128]{1,0:T(1,128)}', space=vmem, size = 0x9000, scoped, tag = 'internal scratch']
  %s0 = inlined_call_operand.vmem [shape: f32[16,2,8,2,4], index: 0, kind: input, shape index: {}]
  %s1 = inlined_call_operand.vmem [shape: f32[16,8,1,4], index: 1, kind: output, shape index: {}]
  %s2 = sld [smem:[#allocation0]]
  $region37: #{down_step.4} parent=0
    _
  %s4 = ssub.s32 1, %s2
  %s5 = scalar_select 0, %s4, %s2
  loop: start=0, step=1, limit=4
  $region2: #{down_step.4} parent=0 // loop_pre_header
    _
  $region3: #{down_step.4} parent=0 // loop_header
    %s7 = sphi 0, %s11
    %p8 = scmp.ge.s32.totalorder %s7, 4
    %s17 = sphi 0, %s19
    %s20 = sphi 0, %s17
    %s21 = sphi 0, %s20
    %s37 = sphi 0, %s21
    %s43 = sphi 0, %s45
    %s46 = sphi 0, %s43
    %s47 = sphi 0, %s46
    %s63 = sphi 0, %s47
  $region4: #{down_step.4} parent=0 // loop_header_branch
    %10 = sbr.rel (%p8) target = $region8
  $region5: #{down_step.4} parent=0 // loop_body
    %s12 = ssub.s32 %s7, 1
    %s13 = ssub.s32 %s7, 2
    %s14 = sadd.s32 %s7, 1
    %s15 = ssub.s32 %s7, %s14
    %p16 = scmp.eq.s32.totalorder %s15, 0
    %s18 = sadd.s32 %s17, 1
    %s19 = scalar_select %p16, %s17, %s18
    %p22 = pneg %p16
    %p23 = scmp.eq.s32.totalorder %s7, 1
    %p24 = por %p22, %p23
    %p25 = scmp.ne.s32.totalorder %s17, %s20
    %p26 = scmp.eq.s32.totalorder %s7, 0
    %p27 = por %p25, %p26
    %p28 = scmp.ne.s32.totalorder %s17, %s20
    %p29 = scmp.eq.s32.totalorder %s12, 1
    %p30 = por %p28, %p29
    %p31 = scmp.ne.s32.totalorder %s20, %s21
    %p32 = scmp.eq.s32.totalorder %s12, 0
    %p33 = por %p31, %p32
    %p34 = scmp.ne.s32.totalorder %s20, %s21
    %p35 = scmp.eq.s32.totalorder %s13, 1
    %p36 = por %p34, %p35
    %p38 = scmp.ne.s32.totalorder %s21, %s37
    %p39 = scmp.eq.s32.totalorder %s13, 0
    %p40 = por %p38, %p39
    %s41 = ssub.s32 %s7, %s14
    %p42 = scmp.eq.s32.totalorder %s41, 0
    %s44 = sadd.s32 %s43, 1
    %s45 = scalar_select %p42, %s43, %s44
    %p48 = pneg %p42
    %p49 = scmp.eq.s32.totalorder %s7, 1
    %p50 = por %p48, %p49
    %p51 = scmp.ne.s32.totalorder %s43, %s46
    %p52 = scmp.eq.s32.totalorder %s7, 0
    %p53 = por %p51, %p52
    %p54 = scmp.ne.s32.totalorder %s43, %s46
    %p55 = scmp.eq.s32.totalorder %s12, 1
    %p56 = por %p54, %p55
    %p57 = scmp.ne.s32.totalorder %s46, %s47
    %p58 = scmp.eq.s32.totalorder %s12, 0
    %p59 = por %p57, %p58
    %p60 = scmp.ne.s32.totalorder %s46, %s47
    %p61 = scmp.eq.s32.totalorder %s13, 1
    %p62 = por %p60, %p61
    %p64 = scmp.ne.s32.totalorder %s47, %s63
    %p65 = scmp.eq.s32.totalorder %s13, 0
    %p66 = por %p64, %p65
    %p67 = scmp.le.s32.totalorder 1, %s7
    %p68 = scmp.lt.s32.totalorder %s7, 3
    %p69 = pnand %p67, %p68
    %p70 = pneg %p69
    // Predicated region
    $region9: #{down_step.4} parent=5 // pred_check
      _
    $region10: #{down_step.4} parent=5 // pred_check_branch
      %72 = sbr.rel (%p69) target = $region12
    $region11: #{down_step.4} parent=5 // pred_region
      %s73 = ssub.s32 %s7, 1
    $region12: #{down_step.4} parent=5 // pred_fallthru
      _
    %p74 = scmp.lt.s32.totalorder %s7, 2
    // Predicated region
    $region13: #{down_step.4} parent=5 // pred_check
      %p75 = pneg %p74
    $region14: #{down_step.4} parent=5 // pred_check_branch
      %77 = sbr.rel (%p75) target = $region16
    $region15: #{down_step.4} parent=5 // pred_region
      // Predicated region
      $region17: #{down_step.4} parent=15 // pred_check
        %p78 = pneg %p27
      $region18: #{down_step.4} parent=15 // pred_check_branch
        %80 = sbr.rel (%p78) target = $region20
      $region19: #{down_step.4} parent=15 // pred_region
        %s81 = smul.u32 8, %s7
        %p82 = scmp.lt.s32.totalorder %s81, 15
        %s83 = scalar_select %p82, %s81, 15
        %s84 = smul.addr %s83, 16
        %s85 = smul.addr %s84, 2
        %s86 = scalar_lea.vmem %s0, %s85
        %s87 = smul.u32 8, %s7
      $region20: #{down_step.4} parent=15 // pred_fallthru
        _
    $region16: #{down_step.4} parent=5 // pred_fallthru
      _
    %p88 = scmp.le.s32.totalorder 1, %s7
    %p89 = scmp.lt.s32.totalorder %s7, 3
    %p90 = pnand %p88, %p89
    %p91 = pneg %p90
    // Predicated region
    $region21: #{down_step.4} parent=5 // pred_check
      _
    $region22: #{down_step.4} parent=5 // pred_check_branch
      %93 = sbr.rel (%p90) target = $region24
    $region23: #{down_step.4} parent=5 // pred_region
      %s94 = ssub.s32 %s7, 1
      %s95 = smul.u32 8, %s12
      %p96 = scmp.lt.s32.totalorder %s95, 15
      %s97 = scalar_select %p96, %s95, 15
      %s98 = smul.addr %s97, 16
      %s99 = smul.addr %s98, 2
      %s100 = scalar_lea.vmem %s0, %s99
      %p101 = pneg %p33
      %p102 = pneg %p30
      %p103 = pneg %p59
      %p104 = pneg %p56
      %s105 = smul.u32 8, %s12
      %p106 = scmp.lt.s32.totalorder %s105, 15
      %s107 = scalar_select %p106, %s105, 15
      %s108 = smul.addr %s107, 8
      %s109 = scalar_lea.vmem %s1, %s108
      %s110 = smul.u32 8, %s12
      %p111 = scmp.lt.s32.totalorder %s110, 15
      %s112 = scalar_select %p111, %s110, 15
      %s113 = smul.addr %s112, 16
      %s114 = smul.addr %s113, 2
      %s115 = scalar_lea.vmem %s0, %s114
      %s116 = smul.u32 8, %s12
      %s117 = smul.u32 8, %s12
      %p118 = scmp.lt.s32.totalorder %s117, 15
      %s119 = scalar_select %p118, %s117, 15
      %s120 = smul.addr %s119, 8
      %s121 = scalar_lea.vmem %s1, %s120
      %s122 = smul.u32 8, %s12
      %v123 = vld [vmem:[%s115] sm:$0x3]
      %v124 = vld [vmem:[%s115 + $0x2] sm:$0x3]
      %v125 = vld [vmem:[%s115 + $0x4] sm:$0x3]
      %v126 = vld [vmem:[%s115 + $0x6] sm:$0x3]
      %v127 = vld [vmem:[%s115 + $0x8] sm:$0x3]
      %v128 = vld [vmem:[%s115 + $0xa] sm:$0x3]
      %v129 = vld [vmem:[%s115 + $0xc] sm:$0x3]
      %v130 = vld [vmem:[%s115 + $0xe] sm:$0x3]
      %v131 = vld [vmem:[%s115 + $0x10] sm:$0x3]
      %v132 = vld [vmem:[%s115 + $0x12] sm:$0x3]
      %v133 = vld [vmem:[%s115 + $0x14] sm:$0x3]
      %v134 = vld [vmem:[%s115 + $0x16] sm:$0x3]
      %v135 = vld [vmem:[%s115 + $0x18] sm:$0x3]
      %v136 = vld [vmem:[%s115 + $0x1a] sm:$0x3]
      %v137 = vld [vmem:[%s115 + $0x1c] sm:$0x3]
      %v138 = vld [vmem:[%s115 + $0x1e] sm:$0x3]
      %v139 = vld [vmem:[%s115 + $0x20] sm:$0x3]
      %v140 = vld [vmem:[%s115 + $0x22] sm:$0x3]
      %v141 = vld [vmem:[%s115 + $0x24] sm:$0x3]
      %v142 = vld [vmem:[%s115 + $0x26] sm:$0x3]
      %v143 = vld [vmem:[%s115 + $0x28] sm:$0x3]
      %v144 = vld [vmem:[%s115 + $0x2a] sm:$0x3]
      %v145 = vld [vmem:[%s115 + $0x2c] sm:$0x3]
      %v146 = vld [vmem:[%s115 + $0x2e] sm:$0x3]
      %v147 = vld [vmem:[%s115 + $0x30] sm:$0x3]
      %v148 = vld [vmem:[%s115 + $0x32] sm:$0x3]
      %v149 = vld [vmem:[%s115 + $0x34] sm:$0x3]
      %v150 = vld [vmem:[%s115 + $0x36] sm:$0x3]
      %v151 = vld [vmem:[%s115 + $0x38] sm:$0x3]
      %v152 = vld [vmem:[%s115 + $0x3a] sm:$0x3]
      %v153 = vld [vmem:[%s115 + $0x3c] sm:$0x3]
      %v154 = vld [vmem:[%s115 + $0x3e] sm:$0x3]
      %v155 = vld [vmem:[%s115 + $0x40] sm:$0x3]
      %v156 = vld [vmem:[%s115 + $0x42] sm:$0x3]
      %v157 = vld [vmem:[%s115 + $0x44] sm:$0x3]
      %v158 = vld [vmem:[%s115 + $0x46] sm:$0x3]
      %v159 = vld [vmem:[%s115 + $0x48] sm:$0x3]
      %v160 = vld [vmem:[%s115 + $0x4a] sm:$0x3]
      %v161 = vld [vmem:[%s115 + $0x4c] sm:$0x3]
      %v162 = vld [vmem:[%s115 + $0x4e] sm:$0x3]
      %v163 = vld [vmem:[%s115 + $0x50] sm:$0x3]
      %v164 = vld [vmem:[%s115 + $0x52] sm:$0x3]
      %v165 = vld [vmem:[%s115 + $0x54] sm:$0x3]
      %v166 = vld [vmem:[%s115 + $0x56] sm:$0x3]
      %v167 = vld [vmem:[%s115 + $0x58] sm:$0x3]
      %v168 = vld [vmem:[%s115 + $0x5a] sm:$0x3]
      %v169 = vld [vmem:[%s115 + $0x5c] sm:$0x3]
      %v170 = vld [vmem:[%s115 + $0x5e] sm:$0x3]
      %v171 = vld [vmem:[%s115 + $0x60] sm:$0x3]
      %v172 = vld [vmem:[%s115 + $0x62] sm:$0x3]
      %v173 = vld [vmem:[%s115 + $0x64] sm:$0x3]
      %v174 = vld [vmem:[%s115 + $0x66] sm:$0x3]
      %v175 = vld [vmem:[%s115 + $0x68] sm:$0x3]
      %v176 = vld [vmem:[%s115 + $0x6a] sm:$0x3]
      %v177 = vld [vmem:[%s115 + $0x6c] sm:$0x3]
      %v178 = vld [vmem:[%s115 + $0x6e] sm:$0x3]
      %v179 = vld [vmem:[%s115 + $0x70] sm:$0x3]
      %v180 = vld [vmem:[%s115 + $0x72] sm:$0x3]
      %v181 = vld [vmem:[%s115 + $0x74] sm:$0x3]
      %v182 = vld [vmem:[%s115 + $0x76] sm:$0x3]
      %v183 = vld [vmem:[%s115 + $0x78] sm:$0x3]
      %v184 = vld [vmem:[%s115 + $0x7a] sm:$0x3]
      %v185 = vld [vmem:[%s115 + $0x7c] sm:$0x3]
      %v186 = vld [vmem:[%s115 + $0x7e] sm:$0x3]
      %v187 = vld [vmem:[%s115 + $0x80] sm:$0x3]
      %v188 = vld [vmem:[%s115 + $0x82] sm:$0x3]
      %v189 = vld [vmem:[%s115 + $0x84] sm:$0x3]
      %v190 = vld [vmem:[%s115 + $0x86] sm:$0x3]
      %v191 = vld [vmem:[%s115 + $0x88] sm:$0x3]
      %v192 = vld [vmem:[%s115 + $0x8a] sm:$0x3]
      %v193 = vld [vmem:[%s115 + $0x8c] sm:$0x3]
      %v194 = vld [vmem:[%s115 + $0x8e] sm:$0x3]
      %v195 = vld [vmem:[%s115 + $0x90] sm:$0x3]
      %v196 = vld [vmem:[%s115 + $0x92] sm:$0x3]
      %v197 = vld [vmem:[%s115 + $0x94] sm:$0x3]
      %v198 = vld [vmem:[%s115 + $0x96] sm:$0x3]
      %v199 = vld [vmem:[%s115 + $0x98] sm:$0x3]
      %v200 = vld [vmem:[%s115 + $0x9a] sm:$0x3]
      %v201 = vld [vmem:[%s115 + $0x9c] sm:$0x3]
      %v202 = vld [vmem:[%s115 + $0x9e] sm:$0x3]
      %v203 = vld [vmem:[%s115 + $0xa0] sm:$0x3]
      %v204 = vld [vmem:[%s115 + $0xa2] sm:$0x3]
      %v205 = vld [vmem:[%s115 + $0xa4] sm:$0x3]
      %v206 = vld [vmem:[%s115 + $0xa6] sm:$0x3]
      %v207 = vld [vmem:[%s115 + $0xa8] sm:$0x3]
      %v208 = vld [vmem:[%s115 + $0xaa] sm:$0x3]
      %v209 = vld [vmem:[%s115 + $0xac] sm:$0x3]
      %v210 = vld [vmem:[%s115 + $0xae] sm:$0x3]
      %v211 = vld [vmem:[%s115 + $0xb0] sm:$0x3]
      %v212 = vld [vmem:[%s115 + $0xb2] sm:$0x3]
      %v213 = vld [vmem:[%s115 + $0xb4] sm:$0x3]
      %v214 = vld [vmem:[%s115 + $0xb6] sm:$0x3]
      %v215 = vld [vmem:[%s115 + $0xb8] sm:$0x3]
      %v216 = vld [vmem:[%s115 + $0xba] sm:$0x3]
      %v217 = vld [vmem:[%s115 + $0xbc] sm:$0x3]
      %v218 = vld [vmem:[%s115 + $0xbe] sm:$0x3]
      %v219 = vld [vmem:[%s115 + $0xc0] sm:$0x3]
      %v220 = vld [vmem:[%s115 + $0xc2] sm:$0x3]
      %v221 = vld [vmem:[%s115 + $0xc4] sm:$0x3]
      %v222 = vld [vmem:[%s115 + $0xc6] sm:$0x3]
      %v223 = vld [vmem:[%s115 + $0xc8] sm:$0x3]
      %v224 = vld [vmem:[%s115 + $0xca] sm:$0x3]
      %v225 = vld [vmem:[%s115 + $0xcc] sm:$0x3]
      %v226 = vld [vmem:[%s115 + $0xce] sm:$0x3]
      %v227 = vld [vmem:[%s115 + $0xd0] sm:$0x3]
      %v228 = vld [vmem:[%s115 + $0xd2] sm:$0x3]
      %v229 = vld [vmem:[%s115 + $0xd4] sm:$0x3]
      %v230 = vld [vmem:[%s115 + $0xd6] sm:$0x3]
      %v231 = vld [vmem:[%s115 + $0xd8] sm:$0x3]
      %v232 = vld [vmem:[%s115 + $0xda] sm:$0x3]
      %v233 = vld [vmem:[%s115 + $0xdc] sm:$0x3]
      %v234 = vld [vmem:[%s115 + $0xde] sm:$0x3]
      %v235 = vld [vmem:[%s115 + $0xe0] sm:$0x3]
      %v236 = vld [vmem:[%s115 + $0xe2] sm:$0x3]
      %v237 = vld [vmem:[%s115 + $0xe4] sm:$0x3]
      %v238 = vld [vmem:[%s115 + $0xe6] sm:$0x3]
      %v239 = vld [vmem:[%s115 + $0xe8] sm:$0x3]
      %v240 = vld [vmem:[%s115 + $0xea] sm:$0x3]
      %v241 = vld [vmem:[%s115 + $0xec] sm:$0x3]
      %v242 = vld [vmem:[%s115 + $0xee] sm:$0x3]
      %v243 = vld [vmem:[%s115 + $0xf0] sm:$0x3]
      %v244 = vld [vmem:[%s115 + $0xf2] sm:$0x3]
      %v245 = vld [vmem:[%s115 + $0xf4] sm:$0x3]
      %v246 = vld [vmem:[%s115 + $0xf6] sm:$0x3]
      %v247 = vld [vmem:[%s115 + $0xf8] sm:$0x3]
      %v248 = vld [vmem:[%s115 + $0xfa] sm:$0x3]
      %v249 = vld [vmem:[%s115 + $0xfc] sm:$0x3]
      %v250 = vld [vmem:[%s115 + $0xfe] sm:$0x3]
      %v251 = vmax.f32 %v123, %v131
      %v252 = vmax.f32 %v124, %v132
      %v253 = vmax.f32 %v125, %v133
      %v254 = vmax.f32 %v126, %v134
      %v255 = vmax.f32 %v127, %v135
      %v256 = vmax.f32 %v128, %v136
      %v257 = vmax.f32 %v129, %v137
      %v258 = vmax.f32 %v130, %v138
      %v259 = vmax.f32 %v139, %v147
      %v260 = vmax.f32 %v140, %v148
      %v261 = vmax.f32 %v141, %v149
      %v262 = vmax.f32 %v142, %v150
      %v263 = vmax.f32 %v143, %v151
      %v264 = vmax.f32 %v144, %v152
      %v265 = vmax.f32 %v145, %v153
      %v266 = vmax.f32 %v146, %v154
      %v267 = vmax.f32 %v155, %v163
      %v268 = vmax.f32 %v156, %v164
      %v269 = vmax.f32 %v157, %v165
      %v270 = vmax.f32 %v158, %v166
      %v271 = vmax.f32 %v159, %v167
      %v272 = vmax.f32 %v160, %v168
      %v273 = vmax.f32 %v161, %v169
      %v274 = vmax.f32 %v162, %v170
      %v275 = vmax.f32 %v171, %v179
      %v276 = vmax.f32 %v172, %v180
      %v277 = vmax.f32 %v173, %v181
      %v278 = vmax.f32 %v174, %v182
      %v279 = vmax.f32 %v175, %v183
      %v280 = vmax.f32 %v176, %v184
      %v281 = vmax.f32 %v177, %v185
      %v282 = vmax.f32 %v178, %v186
      %v283 = vmax.f32 %v187, %v195
      %v284 = vmax.f32 %v188, %v196
      %v285 = vmax.f32 %v189, %v197
      %v286 = vmax.f32 %v190, %v198
      %v287 = vmax.f32 %v191, %v199
      %v288 = vmax.f32 %v192, %v200
      %v289 = vmax.f32 %v193, %v201
      %v290 = vmax.f32 %v194, %v202
      %v291 = vmax.f32 %v203, %v211
      %v292 = vmax.f32 %v204, %v212
      %v293 = vmax.f32 %v205, %v213
      %v294 = vmax.f32 %v206, %v214
      %v295 = vmax.f32 %v207, %v215
      %v296 = vmax.f32 %v208, %v216
      %v297 = vmax.f32 %v209, %v217
      %v298 = vmax.f32 %v210, %v218
      %v299 = vmax.f32 %v219, %v227
      %v300 = vmax.f32 %v220, %v228
      %v301 = vmax.f32 %v221, %v229
      %v302 = vmax.f32 %v222, %v230
      %v303 = vmax.f32 %v223, %v231
      %v304 = vmax.f32 %v224, %v232
      %v305 = vmax.f32 %v225, %v233
      %v306 = vmax.f32 %v226, %v234
      %v307 = vmax.f32 %v235, %v243
      %v308 = vmax.f32 %v236, %v244
      %v309 = vmax.f32 %v237, %v245
      %v310 = vmax.f32 %v238, %v246
      %v311 = vmax.f32 %v239, %v247
      %v312 = vmax.f32 %v240, %v248
      %v313 = vmax.f32 %v241, %v249
      %v314 = vmax.f32 %v242, %v250
      %vm315 = vcmask 25600
      %v316 = vsel %vm315, %v251, -inf
      %v317 = vrot.slane %v316, 4
      %v318 = vmax.f32 %v316, %v317
      %v319 = vrot.slane %v318, 2
      %v320 = vmax.f32 %v318, %v319
      %v321 = vrot.slane %v320, 1
      %v322 = vmax.f32 %v320, %v321
      %v323 = vsel %vm315, %v252, -inf
      %v324 = vrot.slane %v323, 4
      %v325 = vmax.f32 %v323, %v324
      %v326 = vrot.slane %v325, 2
      %v327 = vmax.f32 %v325, %v326
      %v328 = vrot.slane %v327, 1
      %v329 = vmax.f32 %v327, %v328
      %v330 = vsel %vm315, %v253, -inf
      %v331 = vrot.slane %v330, 4
      %v332 = vmax.f32 %v330, %v331
      %v333 = vrot.slane %v332, 2
      %v334 = vmax.f32 %v332, %v333
      %v335 = vrot.slane %v334, 1
      %v336 = vmax.f32 %v334, %v335
      %v337 = vsel %vm315, %v254, -inf
      %v338 = vrot.slane %v337, 4
      %v339 = vmax.f32 %v337, %v338
      %v340 = vrot.slane %v339, 2
      %v341 = vmax.f32 %v339, %v340
      %v342 = vrot.slane %v341, 1
      %v343 = vmax.f32 %v341, %v342
      %v344 = vsel %vm315, %v255, -inf
      %v345 = vrot.slane %v344, 4
      %v346 = vmax.f32 %v344, %v345
      %v347 = vrot.slane %v346, 2
      %v348 = vmax.f32 %v346, %v347
      %v349 = vrot.slane %v348, 1
      %v350 = vmax.f32 %v348, %v349
      %v351 = vsel %vm315, %v256, -inf
      %v352 = vrot.slane %v351, 4
      %v353 = vmax.f32 %v351, %v352
      %v354 = vrot.slane %v353, 2
      %v355 = vmax.f32 %v353, %v354
      %v356 = vrot.slane %v355, 1
      %v357 = vmax.f32 %v355, %v356
      %v358 = vsel %vm315, %v257, -inf
      %v359 = vrot.slane %v358, 4
      %v360 = vmax.f32 %v358, %v359
      %v361 = vrot.slane %v360, 2
      %v362 = vmax.f32 %v360, %v361
      %v363 = vrot.slane %v362, 1
      %v364 = vmax.f32 %v362, %v363
      %v365 = vsel %vm315, %v258, -inf
      %v366 = vrot.slane %v365, 4
      %v367 = vmax.f32 %v365, %v366
      %v368 = vrot.slane %v367, 2
      %v369 = vmax.f32 %v367, %v368
      %v370 = vrot.slane %v369, 1
      %v371 = vmax.f32 %v369, %v370
      %v372 = vsel %vm315, %v259, -inf
      %v373 = vrot.slane %v372, 4
      %v374 = vmax.f32 %v372, %v373
      %v375 = vrot.slane %v374, 2
      %v376 = vmax.f32 %v374, %v375
      %v377 = vrot.slane %v376, 1
      %v378 = vmax.f32 %v376, %v377
      %v379 = vsel %vm315, %v260, -inf
      %v380 = vrot.slane %v379, 4
      %v381 = vmax.f32 %v379, %v380
      %v382 = vrot.slane %v381, 2
      %v383 = vmax.f32 %v381, %v382
      %v384 = vrot.slane %v383, 1
      %v385 = vmax.f32 %v383, %v384
      %v386 = vsel %vm315, %v261, -inf
      %v387 = vrot.slane %v386, 4
      %v388 = vmax.f32 %v386, %v387
      %v389 = vrot.slane %v388, 2
      %v390 = vmax.f32 %v388, %v389
      %v391 = vrot.slane %v390, 1
      %v392 = vmax.f32 %v390, %v391
      %v393 = vsel %vm315, %v262, -inf
      %v394 = vrot.slane %v393, 4
      %v395 = vmax.f32 %v393, %v394
      %v396 = vrot.slane %v395, 2
      %v397 = vmax.f32 %v395, %v396
      %v398 = vrot.slane %v397, 1
      %v399 = vmax.f32 %v397, %v398
      %v400 = vsel %vm315, %v263, -inf
      %v401 = vrot.slane %v400, 4
      %v402 = vmax.f32 %v400, %v401
      %v403 = vrot.slane %v402, 2
      %v404 = vmax.f32 %v402, %v403
      %v405 = vrot.slane %v404, 1
      %v406 = vmax.f32 %v404, %v405
      %v407 = vsel %vm315, %v264, -inf
      %v408 = vrot.slane %v407, 4
      %v409 = vmax.f32 %v407, %v408
      %v410 = vrot.slane %v409, 2
      %v411 = vmax.f32 %v409, %v410
      %v412 = vrot.slane %v411, 1
      %v413 = vmax.f32 %v411, %v412
      %v414 = vsel %vm315, %v265, -inf
      %v415 = vrot.slane %v414, 4
      %v416 = vmax.f32 %v414, %v415
      %v417 = vrot.slane %v416, 2
      %v418 = vmax.f32 %v416, %v417
      %v419 = vrot.slane %v418, 1
      %v420 = vmax.f32 %v418, %v419
      %v421 = vsel %vm315, %v266, -inf
      %v422 = vrot.slane %v421, 4
      %v423 = vmax.f32 %v421, %v422
      %v424 = vrot.slane %v423, 2
      %v425 = vmax.f32 %v423, %v424
      %v426 = vrot.slane %v425, 1
      %v427 = vmax.f32 %v425, %v426
      %v428 = vsel %vm315, %v267, -inf
      %v429 = vrot.slane %v428, 4
      %v430 = vmax.f32 %v428, %v429
      %v431 = vrot.slane %v430, 2
      %v432 = vmax.f32 %v430, %v431
      %v433 = vrot.slane %v432, 1
      %v434 = vmax.f32 %v432, %v433
      %v435 = vsel %vm315, %v268, -inf
      %v436 = vrot.slane %v435, 4
      %v437 = vmax.f32 %v435, %v436
      %v438 = vrot.slane %v437, 2
      %v439 = vmax.f32 %v437, %v438
      %v440 = vrot.slane %v439, 1
      %v441 = vmax.f32 %v439, %v440
      %v442 = vsel %vm315, %v269, -inf
      %v443 = vrot.slane %v442, 4
      %v444 = vmax.f32 %v442, %v443
      %v445 = vrot.slane %v444, 2
      %v446 = vmax.f32 %v444, %v445
      %v447 = vrot.slane %v446, 1
      %v448 = vmax.f32 %v446, %v447
      %v449 = vsel %vm315, %v270, -inf
      %v450 = vrot.slane %v449, 4
      %v451 = vmax.f32 %v449, %v450
      %v452 = vrot.slane %v451, 2
      %v453 = vmax.f32 %v451, %v452
      %v454 = vrot.slane %v453, 1
      %v455 = vmax.f32 %v453, %v454
      %v456 = vsel %vm315, %v271, -inf
      %v457 = vrot.slane %v456, 4
      %v458 = vmax.f32 %v456, %v457
      %v459 = vrot.slane %v458, 2
      %v460 = vmax.f32 %v458, %v459
      %v461 = vrot.slane %v460, 1
      %v462 = vmax.f32 %v460, %v461
      %v463 = vsel %vm315, %v272, -inf
      %v464 = vrot.slane %v463, 4
      %v465 = vmax.f32 %v463, %v464
      %v466 = vrot.slane %v465, 2
      %v467 = vmax.f32 %v465, %v466
      %v468 = vrot.slane %v467, 1
      %v469 = vmax.f32 %v467, %v468
      %v470 = vsel %vm315, %v273, -inf
      %v471 = vrot.slane %v470, 4
      %v472 = vmax.f32 %v470, %v471
      %v473 = vrot.slane %v472, 2
      %v474 = vmax.f32 %v472, %v473
      %v475 = vrot.slane %v474, 1
      %v476 = vmax.f32 %v474, %v475
      %v477 = vsel %vm315, %v274, -inf
      %v478 = vrot.slane %v477, 4
      %v479 = vmax.f32 %v477, %v478
      %v480 = vrot.slane %v479, 2
      %v481 = vmax.f32 %v479, %v480
      %v482 = vrot.slane %v481, 1
      %v483 = vmax.f32 %v481, %v482
      %v484 = vsel %vm315, %v275, -inf
      %v485 = vrot.slane %v484, 4
      %v486 = vmax.f32 %v484, %v485
      %v487 = vrot.slane %v486, 2
      %v488 = vmax.f32 %v486, %v487
      %v489 = vrot.slane %v488, 1
      %v490 = vmax.f32 %v488, %v489
      %v491 = vsel %vm315, %v276, -inf
      %v492 = vrot.slane %v491, 4
      %v493 = vmax.f32 %v491, %v492
      %v494 = vrot.slane %v493, 2
      %v495 = vmax.f32 %v493, %v494
      %v496 = vrot.slane %v495, 1
      %v497 = vmax.f32 %v495, %v496
      %v498 = vsel %vm315, %v277, -inf
      %v499 = vrot.slane %v498, 4
      %v500 = vmax.f32 %v498, %v499
      %v501 = vrot.slane %v500, 2
      %v502 = vmax.f32 %v500, %v501
      %v503 = vrot.slane %v502, 1
      %v504 = vmax.f32 %v502, %v503
      %v505 = vsel %vm315, %v278, -inf
      %v506 = vrot.slane %v505, 4
      %v507 = vmax.f32 %v505, %v506
      %v508 = vrot.slane %v507, 2
      %v509 = vmax.f32 %v507, %v508
      %v510 = vrot.slane %v509, 1
      %v511 = vmax.f32 %v509, %v510
      %v512 = vsel %vm315, %v279, -inf
      %v513 = vrot.slane %v512, 4
      %v514 = vmax.f32 %v512, %v513
      %v515 = vrot.slane %v514, 2
      %v516 = vmax.f32 %v514, %v515
      %v517 = vrot.slane %v516, 1
      %v518 = vmax.f32 %v516, %v517
      %v519 = vsel %vm315, %v280, -inf
      %v520 = vrot.slane %v519, 4
      %v521 = vmax.f32 %v519, %v520
      %v522 = vrot.slane %v521, 2
      %v523 = vmax.f32 %v521, %v522
      %v524 = vrot.slane %v523, 1
      %v525 = vmax.f32 %v523, %v524
      %v526 = vsel %vm315, %v281, -inf
      %v527 = vrot.slane %v526, 4
      %v528 = vmax.f32 %v526, %v527
      %v529 = vrot.slane %v528, 2
      %v530 = vmax.f32 %v528, %v529
      %v531 = vrot.slane %v530, 1
      %v532 = vmax.f32 %v530, %v531
      %v533 = vsel %vm315, %v282, -inf
      %v534 = vrot.slane %v533, 4
      %v535 = vmax.f32 %v533, %v534
      %v536 = vrot.slane %v535, 2
      %v537 = vmax.f32 %v535, %v536
      %v538 = vrot.slane %v537, 1
      %v539 = vmax.f32 %v537, %v538
      %v540 = vsel %vm315, %v283, -inf
      %v541 = vrot.slane %v540, 4
      %v542 = vmax.f32 %v540, %v541
      %v543 = vrot.slane %v542, 2
      %v544 = vmax.f32 %v542, %v543
      %v545 = vrot.slane %v544, 1
      %v546 = vmax.f32 %v544, %v545
      %v547 = vsel %vm315, %v284, -inf
      %v548 = vrot.slane %v547, 4
      %v549 = vmax.f32 %v547, %v548
      %v550 = vrot.slane %v549, 2
      %v551 = vmax.f32 %v549, %v550
      %v552 = vrot.slane %v551, 1
      %v553 = vmax.f32 %v551, %v552
      %v554 = vsel %vm315, %v285, -inf
      %v555 = vrot.slane %v554, 4
      %v556 = vmax.f32 %v554, %v555
      %v557 = vrot.slane %v556, 2
      %v558 = vmax.f32 %v556, %v557
      %v559 = vrot.slane %v558, 1
      %v560 = vmax.f32 %v558, %v559
      %v561 = vsel %vm315, %v286, -inf
      %v562 = vrot.slane %v561, 4
      %v563 = vmax.f32 %v561, %v562
      %v564 = vrot.slane %v563, 2
      %v565 = vmax.f32 %v563, %v564
      %v566 = vrot.slane %v565, 1
      %v567 = vmax.f32 %v565, %v566
      %v568 = vsel %vm315, %v287, -inf
      %v569 = vrot.slane %v568, 4
      %v570 = vmax.f32 %v568, %v569
      %v571 = vrot.slane %v570, 2
      %v572 = vmax.f32 %v570, %v571
      %v573 = vrot.slane %v572, 1
      %v574 = vmax.f32 %v572, %v573
      %v575 = vsel %vm315, %v288, -inf
      %v576 = vrot.slane %v575, 4
      %v577 = vmax.f32 %v575, %v576
      %v578 = vrot.slane %v577, 2
      %v579 = vmax.f32 %v577, %v578
      %v580 = vrot.slane %v579, 1
      %v581 = vmax.f32 %v579, %v580
      %v582 = vsel %vm315, %v289, -inf
      %v583 = vrot.slane %v582, 4
      %v584 = vmax.f32 %v582, %v583
      %v585 = vrot.slane %v584, 2
      %v586 = vmax.f32 %v584, %v585
      %v587 = vrot.slane %v586, 1
      %v588 = vmax.f32 %v586, %v587
      %v589 = vsel %vm315, %v290, -inf
      %v590 = vrot.slane %v589, 4
      %v591 = vmax.f32 %v589, %v590
      %v592 = vrot.slane %v591, 2
      %v593 = vmax.f32 %v591, %v592
      %v594 = vrot.slane %v593, 1
      %v595 = vmax.f32 %v593, %v594
      %v596 = vsel %vm315, %v291, -inf
      %v597 = vrot.slane %v596, 4
      %v598 = vmax.f32 %v596, %v597
      %v599 = vrot.slane %v598, 2
      %v600 = vmax.f32 %v598, %v599
      %v601 = vrot.slane %v600, 1
      %v602 = vmax.f32 %v600, %v601
      %v603 = vsel %vm315, %v292, -inf
      %v604 = vrot.slane %v603, 4
      %v605 = vmax.f32 %v603, %v604
      %v606 = vrot.slane %v605, 2
      %v607 = vmax.f32 %v605, %v606
      %v608 = vrot.slane %v607, 1
      %v609 = vmax.f32 %v607, %v608
      %v610 = vsel %vm315, %v293, -inf
      %v611 = vrot.slane %v610, 4
      %v612 = vmax.f32 %v610, %v611
      %v613 = vrot.slane %v612, 2
      %v614 = vmax.f32 %v612, %v613
      %v615 = vrot.slane %v614, 1
      %v616 = vmax.f32 %v614, %v615
      %v617 = vsel %vm315, %v294, -inf
      %v618 = vrot.slane %v617, 4
      %v619 = vmax.f32 %v617, %v618
      %v620 = vrot.slane %v619, 2
      %v621 = vmax.f32 %v619, %v620
      %v622 = vrot.slane %v621, 1
      %v623 = vmax.f32 %v621, %v622
      %v624 = vsel %vm315, %v295, -inf
      %v625 = vrot.slane %v624, 4
      %v626 = vmax.f32 %v624, %v625
      %v627 = vrot.slane %v626, 2
      %v628 = vmax.f32 %v626, %v627
      %v629 = vrot.slane %v628, 1
      %v630 = vmax.f32 %v628, %v629
      %v631 = vsel %vm315, %v296, -inf
      %v632 = vrot.slane %v631, 4
      %v633 = vmax.f32 %v631, %v632
      %v634 = vrot.slane %v633, 2
      %v635 = vmax.f32 %v633, %v634
      %v636 = vrot.slane %v635, 1
      %v637 = vmax.f32 %v635, %v636
      %v638 = vsel %vm315, %v297, -inf
      %v639 = vrot.slane %v638, 4
      %v640 = vmax.f32 %v638, %v639
      %v641 = vrot.slane %v640, 2
      %v642 = vmax.f32 %v640, %v641
      %v643 = vrot.slane %v642, 1
      %v644 = vmax.f32 %v642, %v643
      %v645 = vsel %vm315, %v298, -inf
      %v646 = vrot.slane %v645, 4
      %v647 = vmax.f32 %v645, %v646
      %v648 = vrot.slane %v647, 2
      %v649 = vmax.f32 %v647, %v648
      %v650 = vrot.slane %v649, 1
      %v651 = vmax.f32 %v649, %v650
      %v652 = vsel %vm315, %v299, -inf
      %v653 = vrot.slane %v652, 4
      %v654 = vmax.f32 %v652, %v653
      %v655 = vrot.slane %v654, 2
      %v656 = vmax.f32 %v654, %v655
      %v657 = vrot.slane %v656, 1
      %v658 = vmax.f32 %v656, %v657
      %v659 = vsel %vm315, %v300, -inf
      %v660 = vrot.slane %v659, 4
      %v661 = vmax.f32 %v659, %v660
      %v662 = vrot.slane %v661, 2
      %v663 = vmax.f32 %v661, %v662
      %v664 = vrot.slane %v663, 1
      %v665 = vmax.f32 %v663, %v664
      %v666 = vsel %vm315, %v301, -inf
      %v667 = vrot.slane %v666, 4
      %v668 = vmax.f32 %v666, %v667
      %v669 = vrot.slane %v668, 2
      %v670 = vmax.f32 %v668, %v669
      %v671 = vrot.slane %v670, 1
      %v672 = vmax.f32 %v670, %v671
      %v673 = vsel %vm315, %v302, -inf
      %v674 = vrot.slane %v673, 4
      %v675 = vmax.f32 %v673, %v674
      %v676 = vrot.slane %v675, 2
      %v677 = vmax.f32 %v675, %v676
      %v678 = vrot.slane %v677, 1
      %v679 = vmax.f32 %v677, %v678
      %v680 = vsel %vm315, %v303, -inf
      %v681 = vrot.slane %v680, 4
      %v682 = vmax.f32 %v680, %v681
      %v683 = vrot.slane %v682, 2
      %v684 = vmax.f32 %v682, %v683
      %v685 = vrot.slane %v684, 1
      %v686 = vmax.f32 %v684, %v685
      %v687 = vsel %vm315, %v304, -inf
      %v688 = vrot.slane %v687, 4
      %v689 = vmax.f32 %v687, %v688
      %v690 = vrot.slane %v689, 2
      %v691 = vmax.f32 %v689, %v690
      %v692 = vrot.slane %v691, 1
      %v693 = vmax.f32 %v691, %v692
      %v694 = vsel %vm315, %v305, -inf
      %v695 = vrot.slane %v694, 4
      %v696 = vmax.f32 %v694, %v695
      %v697 = vrot.slane %v696, 2
      %v698 = vmax.f32 %v696, %v697
      %v699 = vrot.slane %v698, 1
      %v700 = vmax.f32 %v698, %v699
      %v701 = vsel %vm315, %v306, -inf
      %v702 = vrot.slane %v701, 4
      %v703 = vmax.f32 %v701, %v702
      %v704 = vrot.slane %v703, 2
      %v705 = vmax.f32 %v703, %v704
      %v706 = vrot.slane %v705, 1
      %v707 = vmax.f32 %v705, %v706
      %v708 = vsel %vm315, %v307, -inf
      %v709 = vrot.slane %v708, 4
      %v710 = vmax.f32 %v708, %v709
      %v711 = vrot.slane %v710, 2
      %v712 = vmax.f32 %v710, %v711
      %v713 = vrot.slane %v712, 1
      %v714 = vmax.f32 %v712, %v713
      %v715 = vsel %vm315, %v308, -inf
      %v716 = vrot.slane %v715, 4
      %v717 = vmax.f32 %v715, %v716
      %v718 = vrot.slane %v717, 2
      %v719 = vmax.f32 %v717, %v718
      %v720 = vrot.slane %v719, 1
      %v721 = vmax.f32 %v719, %v720
      %v722 = vsel %vm315, %v309, -inf
      %v723 = vrot.slane %v722, 4
      %v724 = vmax.f32 %v722, %v723
      %v725 = vrot.slane %v724, 2
      %v726 = vmax.f32 %v724, %v725
      %v727 = vrot.slane %v726, 1
      %v728 = vmax.f32 %v726, %v727
      %v729 = vsel %vm315, %v310, -inf
      %v730 = vrot.slane %v729, 4
      %v731 = vmax.f32 %v729, %v730
      %v732 = vrot.slane %v731, 2
      %v733 = vmax.f32 %v731, %v732
      %v734 = vrot.slane %v733, 1
      %v735 = vmax.f32 %v733, %v734
      %v736 = vsel %vm315, %v311, -inf
      %v737 = vrot.slane %v736, 4
      %v738 = vmax.f32 %v736, %v737
      %v739 = vrot.slane %v738, 2
      %v740 = vmax.f32 %v738, %v739
      %v741 = vrot.slane %v740, 1
      %v742 = vmax.f32 %v740, %v741
      %v743 = vsel %vm315, %v312, -inf
      %v744 = vrot.slane %v743, 4
      %v745 = vmax.f32 %v743, %v744
      %v746 = vrot.slane %v745, 2
      %v747 = vmax.f32 %v745, %v746
      %v748 = vrot.slane %v747, 1
      %v749 = vmax.f32 %v747, %v748
      %v750 = vsel %vm315, %v313, -inf
      %v751 = vrot.slane %v750, 4
      %v752 = vmax.f32 %v750, %v751
      %v753 = vrot.slane %v752, 2
      %v754 = vmax.f32 %v752, %v753
      %v755 = vrot.slane %v754, 1
      %v756 = vmax.f32 %v754, %v755
      %v757 = vsel %vm315, %v314, -inf
      %v758 = vrot.slane %v757, 4
      %v759 = vmax.f32 %v757, %v758
      %v760 = vrot.slane %v759, 2
      %v761 = vmax.f32 %v759, %v760
      %v762 = vrot.slane %v761, 1
      %v763 = vmax.f32 %v761, %v762
      %vm764 = vcmask 24576
      %765 = vst.msk [vmem:[%s121] sm:$0x1] %vm764, %v322
      %766 = vst.msk [vmem:[%s121 + $0x1] sm:$0x1] %vm764, %v329
      %767 = vst.msk [vmem:[%s121 + $0x2] sm:$0x1] %vm764, %v336
      %768 = vst.msk [vmem:[%s121 + $0x3] sm:$0x1] %vm764, %v343
      %769 = vst.msk [vmem:[%s121 + $0x4] sm:$0x1] %vm764, %v350
      %770 = vst.msk [vmem:[%s121 + $0x5] sm:$0x1] %vm764, %v357
      %771 = vst.msk [vmem:[%s121 + $0x6] sm:$0x1] %vm764, %v364
      %772 = vst.msk [vmem:[%s121 + $0x7] sm:$0x1] %vm764, %v371
      %773 = vst.msk [vmem:[%s121 + $0x8] sm:$0x1] %vm764, %v378
      %774 = vst.msk [vmem:[%s121 + $0x9] sm:$0x1] %vm764, %v385
      %775 = vst.msk [vmem:[%s121 + $0xa] sm:$0x1] %vm764, %v392
      %776 = vst.msk [vmem:[%s121 + $0xb] sm:$0x1] %vm764, %v399
      %777 = vst.msk [vmem:[%s121 + $0xc] sm:$0x1] %vm764, %v406
      %778 = vst.msk [vmem:[%s121 + $0xd] sm:$0x1] %vm764, %v413
      %779 = vst.msk [vmem:[%s121 + $0xe] sm:$0x1] %vm764, %v420
      %780 = vst.msk [vmem:[%s121 + $0xf] sm:$0x1] %vm764, %v427
      %781 = vst.msk [vmem:[%s121 + $0x10] sm:$0x1] %vm764, %v434
      %782 = vst.msk [vmem:[%s121 + $0x11] sm:$0x1] %vm764, %v441
      %783 = vst.msk [vmem:[%s121 + $0x12] sm:$0x1] %vm764, %v448
      %784 = vst.msk [vmem:[%s121 + $0x13] sm:$0x1] %vm764, %v455
      %785 = vst.msk [vmem:[%s121 + $0x14] sm:$0x1] %vm764, %v462
      %786 = vst.msk [vmem:[%s121 + $0x15] sm:$0x1] %vm764, %v469
      %787 = vst.msk [vmem:[%s121 + $0x16] sm:$0x1] %vm764, %v476
      %788 = vst.msk [vmem:[%s121 + $0x17] sm:$0x1] %vm764, %v483
      %789 = vst.msk [vmem:[%s121 + $0x18] sm:$0x1] %vm764, %v490
      %790 = vst.msk [vmem:[%s121 + $0x19] sm:$0x1] %vm764, %v497
      %791 = vst.msk [vmem:[%s121 + $0x1a] sm:$0x1] %vm764, %v504
      %792 = vst.msk [vmem:[%s121 + $0x1b] sm:$0x1] %vm764, %v511
      %793 = vst.msk [vmem:[%s121 + $0x1c] sm:$0x1] %vm764, %v518
      %794 = vst.msk [vmem:[%s121 + $0x1d] sm:$0x1] %vm764, %v525
      %795 = vst.msk [vmem:[%s121 + $0x1e] sm:$0x1] %vm764, %v532
      %796 = vst.msk [vmem:[%s121 + $0x1f] sm:$0x1] %vm764, %v539
      %797 = vst.msk [vmem:[%s121 + $0x20] sm:$0x1] %vm764, %v546
      %798 = vst.msk [vmem:[%s121 + $0x21] sm:$0x1] %vm764, %v553
      %799 = vst.msk [vmem:[%s121 + $0x22] sm:$0x1] %vm764, %v560
      %800 = vst.msk [vmem:[%s121 + $0x23] sm:$0x1] %vm764, %v567
      %801 = vst.msk [vmem:[%s121 + $0x24] sm:$0x1] %vm764, %v574
      %802 = vst.msk [vmem:[%s121 + $0x25] sm:$0x1] %vm764, %v581
      %803 = vst.msk [vmem:[%s121 + $0x26] sm:$0x1] %vm764, %v588
      %804 = vst.msk [vmem:[%s121 + $0x27] sm:$0x1] %vm764, %v595
      %805 = vst.msk [vmem:[%s121 + $0x28] sm:$0x1] %vm764, %v602
      %806 = vst.msk [vmem:[%s121 + $0x29] sm:$0x1] %vm764, %v609
      %807 = vst.msk [vmem:[%s121 + $0x2a] sm:$0x1] %vm764, %v616
      %808 = vst.msk [vmem:[%s121 + $0x2b] sm:$0x1] %vm764, %v623
      %809 = vst.msk [vmem:[%s121 + $0x2c] sm:$0x1] %vm764, %v630
      %810 = vst.msk [vmem:[%s121 + $0x2d] sm:$0x1] %vm764, %v637
      %811 = vst.msk [vmem:[%s121 + $0x2e] sm:$0x1] %vm764, %v644
      %812 = vst.msk [vmem:[%s121 + $0x2f] sm:$0x1] %vm764, %v651
      %813 = vst.msk [vmem:[%s121 + $0x30] sm:$0x1] %vm764, %v658
      %814 = vst.msk [vmem:[%s121 + $0x31] sm:$0x1] %vm764, %v665
      %815 = vst.msk [vmem:[%s121 + $0x32] sm:$0x1] %vm764, %v672
      %816 = vst.msk [vmem:[%s121 + $0x33] sm:$0x1] %vm764, %v679
      %817 = vst.msk [vmem:[%s121 + $0x34] sm:$0x1] %vm764, %v686
      %818 = vst.msk [vmem:[%s121 + $0x35] sm:$0x1] %vm764, %v693
      %819 = vst.msk [vmem:[%s121 + $0x36] sm:$0x1] %vm764, %v700
      %820 = vst.msk [vmem:[%s121 + $0x37] sm:$0x1] %vm764, %v707
      %821 = vst.msk [vmem:[%s121 + $0x38] sm:$0x1] %vm764, %v714
      %822 = vst.msk [vmem:[%s121 + $0x39] sm:$0x1] %vm764, %v721
      %823 = vst.msk [vmem:[%s121 + $0x3a] sm:$0x1] %vm764, %v728
      %824 = vst.msk [vmem:[%s121 + $0x3b] sm:$0x1] %vm764, %v735
      %825 = vst.msk [vmem:[%s121 + $0x3c] sm:$0x1] %vm764, %v742
      %826 = vst.msk [vmem:[%s121 + $0x3d] sm:$0x1] %vm764, %v749
      %827 = vst.msk [vmem:[%s121 + $0x3e] sm:$0x1] %vm764, %v756
      %828 = vst.msk [vmem:[%s121 + $0x3f] sm:$0x1] %vm764, %v763
      %s829 = smul.u32 8, %s12
      %p830 = scmp.lt.s32.totalorder %s829, 15
      %s831 = scalar_select %p830, %s829, 15
      %s832 = smul.addr %s831, 8
      %s833 = scalar_lea.vmem %s1, %s832
      // Predicated region
      $region25: #{down_step.4} parent=23 // pred_check
        %p834 = pneg %p56
      $region26: #{down_step.4} parent=23 // pred_check_branch
        %836 = sbr.rel (%p834) target = $region28
      $region27: #{down_step.4} parent=23 // pred_region
        %s837 = smul.u32 8, %s12
      $region28: #{down_step.4} parent=23 // pred_fallthru
        _
    $region24: #{down_step.4} parent=5 // pred_fallthru
      _
    %p838 = scmp.le.s32.totalorder 2, %s7
    // Predicated region
    $region29: #{down_step.4} parent=5 // pred_check
      %p839 = pneg %p838
    $region30: #{down_step.4} parent=5 // pred_check_branch
      %841 = sbr.rel (%p839) target = $region32
    $region31: #{down_step.4} parent=5 // pred_region
      %s842 = ssub.s32 %s7, 2
      // Predicated region
      $region33: #{down_step.4} parent=31 // pred_check
        %p843 = pneg %p62
      $region34: #{down_step.4} parent=31 // pred_check_branch
        %845 = sbr.rel (%p843) target = $region36
      $region35: #{down_step.4} parent=31 // pred_region
        %s846 = smul.u32 8, %s13
        %p847 = scmp.lt.s32.totalorder %s846, 15
        %s848 = scalar_select %p847, %s846, 15
        %s849 = smul.addr %s848, 8
        %s850 = scalar_lea.vmem %s1, %s849
      $region36: #{down_step.4} parent=31 // pred_fallthru
        _
    $region32: #{down_step.4} parent=5 // pred_fallthru
      _
  $region6: #{down_step.4} parent=0 // loop_footer
    %s11 = sadd.s32 1, %s7
  $region7: #{down_step.4} parent=0 // loop_footer_branch
    %6 = sbr.rel target = $region3
  $region8: #{down_step.4} parent=0 // loop_exit
    _

// kernel: down_step.5
$region0: #{down_step.5}
  #allocation0 [shape = 'u32[]', space=smem, size = 0x4, offset = 0x4, fixed_abs, tag = 'smem constant byte address 0x4 - core index']
  #allocation1 [shape = 'u32[72,128]{1,0:T(1,128)}', space=vmem, size = 0x9000, scoped, tag = 'internal scratch']
  %s0 = inlined_call_operand.vmem [shape: f32[2,64,4], index: 0, kind: input, shape index: {}]
  %s1 = inlined_call_operand.vmem [shape: bf16[9,4,8], index: 1, kind: input, shape index: {}]
  %s2 = inlined_call_operand.vmem [shape: f32[1,4], index: 2, kind: input, shape index: {}]
  %s3 = inlined_call_operand.vmem [shape: f32[1,4], index: 3, kind: input, shape index: {}]
  %s4 = inlined_call_operand.vmem [shape: f32[2,48,8], index: 4, kind: output, shape index: {0}]
  %s5 = inlined_call_operand.vmem [shape: f32[2,1,8], index: 5, kind: output, shape index: {1}]
  %s6 = inlined_call_operand.vmem [shape: f32[2,1,8], index: 6, kind: output, shape index: {2}]
  %7 = xla_tuple %s4, %s5, %s6
  %s8 = sld [smem:[#allocation0]]
  $region65: #{down_step.5} parent=0
    _
  %s10 = ssub.s32 1, %s8
  %s11 = scalar_select 0, %s10, %s8
  loop: start=0, step=1, limit=4
  $region2: #{down_step.5} parent=0 // loop_pre_header
    _
  $region3: #{down_step.5} parent=0 // loop_header
    %s13 = sphi 0, %s17
    %p14 = scmp.ge.s32.totalorder %s13, 4
    %s23 = sphi 0, %s25
    %s26 = sphi 0, %s23
    %s27 = sphi 0, %s26
    %s43 = sphi 0, %s27
    %s47 = sphi 0, %s47
    %s49 = sphi 0, %s47
    %s50 = sphi 0, %s49
    %s64 = sphi 0, %s50
    %s68 = sphi 0, %s68
    %s70 = sphi 0, %s68
    %s71 = sphi 0, %s70
    %s85 = sphi 0, %s71
    %s89 = sphi 0, %s89
    %s91 = sphi 0, %s89
    %s92 = sphi 0, %s91
    %s106 = sphi 0, %s92
    %s112 = sphi 0, %s114
    %s115 = sphi 0, %s112
    %s116 = sphi 0, %s115
    %s132 = sphi 0, %s116
    %s138 = sphi 0, %s140
    %s141 = sphi 0, %s138
    %s142 = sphi 0, %s141
    %s158 = sphi 0, %s142
    %s164 = sphi 0, %s166
    %s167 = sphi 0, %s164
    %s168 = sphi 0, %s167
    %s184 = sphi 0, %s168
  $region4: #{down_step.5} parent=0 // loop_header_branch
    %16 = sbr.rel (%p14) target = $region8
  $region5: #{down_step.5} parent=0 // loop_body
    %s18 = ssub.s32 %s13, 1
    %s19 = ssub.s32 %s13, 2
    %s20 = sadd.s32 %s13, 1
    %s21 = ssub.s32 %s13, %s20
    %p22 = scmp.eq.s32.totalorder %s21, 0
    %s24 = sadd.s32 %s23, 1
    %s25 = scalar_select %p22, %s23, %s24
    %p28 = pneg %p22
    %p29 = scmp.eq.s32.totalorder %s13, 1
    %p30 = por %p28, %p29
    %p31 = scmp.ne.s32.totalorder %s23, %s26
    %p32 = scmp.eq.s32.totalorder %s13, 0
    %p33 = por %p31, %p32
    %p34 = scmp.ne.s32.totalorder %s23, %s26
    %p35 = scmp.eq.s32.totalorder %s18, 1
    %p36 = por %p34, %p35
    %p37 = scmp.ne.s32.totalorder %s26, %s27
    %p38 = scmp.eq.s32.totalorder %s18, 0
    %p39 = por %p37, %p38
    %p40 = scmp.ne.s32.totalorder %s26, %s27
    %p41 = scmp.eq.s32.totalorder %s19, 1
    %p42 = por %p40, %p41
    %p44 = scmp.ne.s32.totalorder %s27, %s43
    %p45 = scmp.eq.s32.totalorder %s19, 0
    %p46 = por %p44, %p45
    %s48 = sadd.s32 %s47, 1
    %p51 = scmp.eq.s32.totalorder %s13, 1
    %p52 = scmp.ne.s32.totalorder %s47, %s49
    %p53 = scmp.eq.s32.totalorder %s13, 0
    %p54 = por %p52, %p53
    %p55 = scmp.ne.s32.totalorder %s47, %s49
    %p56 = scmp.eq.s32.totalorder %s18, 1
    %p57 = por %p55, %p56
    %p58 = scmp.ne.s32.totalorder %s49, %s50
    %p59 = scmp.eq.s32.totalorder %s18, 0
    %p60 = por %p58, %p59
    %p61 = scmp.ne.s32.totalorder %s49, %s50
    %p62 = scmp.eq.s32.totalorder %s19, 1
    %p63 = por %p61, %p62
    %p65 = scmp.ne.s32.totalorder %s50, %s64
    %p66 = scmp.eq.s32.totalorder %s19, 0
    %p67 = por %p65, %p66
    %s69 = sadd.s32 %s68, 1
    %p72 = scmp.eq.s32.totalorder %s13, 1
    %p73 = scmp.ne.s32.totalorder %s68, %s70
    %p74 = scmp.eq.s32.totalorder %s13, 0
    %p75 = por %p73, %p74
    %p76 = scmp.ne.s32.totalorder %s68, %s70
    %p77 = scmp.eq.s32.totalorder %s18, 1
    %p78 = por %p76, %p77
    %p79 = scmp.ne.s32.totalorder %s70, %s71
    %p80 = scmp.eq.s32.totalorder %s18, 0
    %p81 = por %p79, %p80
    %p82 = scmp.ne.s32.totalorder %s70, %s71
    %p83 = scmp.eq.s32.totalorder %s19, 1
    %p84 = por %p82, %p83
    %p86 = scmp.ne.s32.totalorder %s71, %s85
    %p87 = scmp.eq.s32.totalorder %s19, 0
    %p88 = por %p86, %p87
    %s90 = sadd.s32 %s89, 1
    %p93 = scmp.eq.s32.totalorder %s13, 1
    %p94 = scmp.ne.s32.totalorder %s89, %s91
    %p95 = scmp.eq.s32.totalorder %s13, 0
    %p96 = por %p94, %p95
    %p97 = scmp.ne.s32.totalorder %s89, %s91
    %p98 = scmp.eq.s32.totalorder %s18, 1
    %p99 = por %p97, %p98
    %p100 = scmp.ne.s32.totalorder %s91, %s92
    %p101 = scmp.eq.s32.totalorder %s18, 0
    %p102 = por %p100, %p101
    %p103 = scmp.ne.s32.totalorder %s91, %s92
    %p104 = scmp.eq.s32.totalorder %s19, 1
    %p105 = por %p103, %p104
    %p107 = scmp.ne.s32.totalorder %s92, %s106
    %p108 = scmp.eq.s32.totalorder %s19, 0
    %p109 = por %p107, %p108
    %s110 = ssub.s32 %s13, %s20
    %p111 = scmp.eq.s32.totalorder %s110, 0
    %s113 = sadd.s32 %s112, 1
    %s114 = scalar_select %p111, %s112, %s113
    %p117 = pneg %p111
    %p118 = scmp.eq.s32.totalorder %s13, 1
    %p119 = por %p117, %p118
    %p120 = scmp.ne.s32.totalorder %s112, %s115
    %p121 = scmp.eq.s32.totalorder %s13, 0
    %p122 = por %p120, %p121
    %p123 = scmp.ne.s32.totalorder %s112, %s115
    %p124 = scmp.eq.s32.totalorder %s18, 1
    %p125 = por %p123, %p124
    %p126 = scmp.ne.s32.totalorder %s115, %s116
    %p127 = scmp.eq.s32.totalorder %s18, 0
    %p128 = por %p126, %p127
    %p129 = scmp.ne.s32.totalorder %s115, %s116
    %p130 = scmp.eq.s32.totalorder %s19, 1
    %p131 = por %p129, %p130
    %p133 = scmp.ne.s32.totalorder %s116, %s132
    %p134 = scmp.eq.s32.totalorder %s19, 0
    %p135 = por %p133, %p134
    %s136 = ssub.s32 %s13, %s20
    %p137 = scmp.eq.s32.totalorder %s136, 0
    %s139 = sadd.s32 %s138, 1
    %s140 = scalar_select %p137, %s138, %s139
    %p143 = pneg %p137
    %p144 = scmp.eq.s32.totalorder %s13, 1
    %p145 = por %p143, %p144
    %p146 = scmp.ne.s32.totalorder %s138, %s141
    %p147 = scmp.eq.s32.totalorder %s13, 0
    %p148 = por %p146, %p147
    %p149 = scmp.ne.s32.totalorder %s138, %s141
    %p150 = scmp.eq.s32.totalorder %s18, 1
    %p151 = por %p149, %p150
    %p152 = scmp.ne.s32.totalorder %s141, %s142
    %p153 = scmp.eq.s32.totalorder %s18, 0
    %p154 = por %p152, %p153
    %p155 = scmp.ne.s32.totalorder %s141, %s142
    %p156 = scmp.eq.s32.totalorder %s19, 1
    %p157 = por %p155, %p156
    %p159 = scmp.ne.s32.totalorder %s142, %s158
    %p160 = scmp.eq.s32.totalorder %s19, 0
    %p161 = por %p159, %p160
    %s162 = ssub.s32 %s13, %s20
    %p163 = scmp.eq.s32.totalorder %s162, 0
    %s165 = sadd.s32 %s164, 1
    %s166 = scalar_select %p163, %s164, %s165
    %p169 = pneg %p163
    %p170 = scmp.eq.s32.totalorder %s13, 1
    %p171 = por %p169, %p170
    %p172 = scmp.ne.s32.totalorder %s164, %s167
    %p173 = scmp.eq.s32.totalorder %s13, 0
    %p174 = por %p172, %p173
    %p175 = scmp.ne.s32.totalorder %s164, %s167
    %p176 = scmp.eq.s32.totalorder %s18, 1
    %p177 = por %p175, %p176
    %p178 = scmp.ne.s32.totalorder %s167, %s168
    %p179 = scmp.eq.s32.totalorder %s18, 0
    %p180 = por %p178, %p179
    %p181 = scmp.ne.s32.totalorder %s167, %s168
    %p182 = scmp.eq.s32.totalorder %s19, 1
    %p183 = por %p181, %p182
    %p185 = scmp.ne.s32.totalorder %s168, %s184
    %p186 = scmp.eq.s32.totalorder %s19, 0
    %p187 = por %p185, %p186
    %p188 = scmp.le.s32.totalorder 1, %s13
    %p189 = scmp.lt.s32.totalorder %s13, 3
    %p190 = pnand %p188, %p189
    %p191 = pneg %p190
    // Predicated region
    $region9: #{down_step.5} parent=5 // pred_check
      _
    $region10: #{down_step.5} parent=5 // pred_check_branch
      %193 = sbr.rel (%p190) target = $region12
    $region11: #{down_step.5} parent=5 // pred_region
      %s194 = ssub.s32 %s13, 1
      // Predicated region
      $region13: #{down_step.5} parent=11 // pred_check
        %p195 = pneg %p60
      $region14: #{down_step.5} parent=11 // pred_check_branch
        %197 = sbr.rel (%p195) target = $region16
      $region15: #{down_step.5} parent=11 // pred_region
        _
      $region16: #{down_step.5} parent=11 // pred_fallthru
        _
      // Predicated region
      $region17: #{down_step.5} parent=11 // pred_check
        %p198 = pneg %p81
      $region18: #{down_step.5} parent=11 // pred_check_branch
        %200 = sbr.rel (%p198) target = $region20
      $region19: #{down_step.5} parent=11 // pred_region
        _
      $region20: #{down_step.5} parent=11 // pred_fallthru
        _
      // Predicated region
      $region21: #{down_step.5} parent=11 // pred_check
        %p201 = pneg %p102
      $region22: #{down_step.5} parent=11 // pred_check_branch
        %203 = sbr.rel (%p201) target = $region24
      $region23: #{down_step.5} parent=11 // pred_region
        _
      $region24: #{down_step.5} parent=11 // pred_fallthru
        _
    $region12: #{down_step.5} parent=5 // pred_fallthru
      _
    %p204 = scmp.lt.s32.totalorder %s13, 2
    // Predicated region
    $region25: #{down_step.5} parent=5 // pred_check
      %p205 = pneg %p204
    $region26: #{down_step.5} parent=5 // pred_check_branch
      %207 = sbr.rel (%p205) target = $region28
    $region27: #{down_step.5} parent=5 // pred_region
      // Predicated region
      $region29: #{down_step.5} parent=27 // pred_check
        %p208 = pneg %p33
      $region30: #{down_step.5} parent=27 // pred_check_branch
        %210 = sbr.rel (%p208) target = $region32
      $region31: #{down_step.5} parent=27 // pred_region
        %p211 = scmp.lt.s32.totalorder %s13, 1
        %s212 = scalar_select %p211, %s13, 1
        %s213 = smul.addr %s212, 8
        %s214 = smul.addr %s213, 8
        %s215 = scalar_lea.vmem %s0, %s214
      $region32: #{down_step.5} parent=27 // pred_fallthru
        _
    $region28: #{down_step.5} parent=5 // pred_fallthru
      _
    %p216 = scmp.le.s32.totalorder 1, %s13
    %p217 = scmp.lt.s32.totalorder %s13, 3
    %p218 = pnand %p216, %p217
    %p219 = pneg %p218
    // Predicated region
    $region33: #{down_step.5} parent=5 // pred_check
      _
    $region34: #{down_step.5} parent=5 // pred_check_branch
      %221 = sbr.rel (%p218) target = $region36
    $region35: #{down_step.5} parent=5 // pred_region
      %s222 = ssub.s32 %s13, 1
      %p223 = scmp.lt.s32.totalorder %s18, 1
      %s224 = scalar_select %p223, %s18, 1
      %s225 = smul.addr %s224, 8
      %s226 = smul.addr %s225, 8
      %s227 = scalar_lea.vmem %s0, %s226
      %p228 = pneg %p39
      %p229 = pneg %p36
      %p230 = pneg %p60
      %p231 = pneg %p57
      %p232 = pneg %p81
      %p233 = pneg %p78
      %p234 = pneg %p102
      %p235 = pneg %p99
      %p236 = pneg %p128
      %p237 = pneg %p125
      %p238 = scmp.lt.s32.totalorder %s18, 1
      %s239 = scalar_select %p238, %s18, 1
      %s240 = smul.addr %s239, 6
      %s241 = smul.addr %s240, 8
      %s242 = scalar_lea.vmem %s4, %s241
      %p243 = pneg %p154
      %p244 = pneg %p151
      %p245 = scmp.lt.s32.totalorder %s18, 1
      %s246 = scalar_select %p245, %s18, 1
      %s247 = scalar_lea.vmem %s5, %s246
      %p248 = pneg %p180
      %p249 = pneg %p177
      %p250 = scmp.lt.s32.totalorder %s18, 1
      %s251 = scalar_select %p250, %s18, 1
      %s252 = scalar_lea.vmem %s6, %s251
      %p253 = scmp.lt.s32.totalorder %s18, 1
      %s254 = scalar_select %p253, %s18, 1
      %s255 = smul.addr %s254, 8
      %s256 = smul.addr %s255, 8
      %s257 = scalar_lea.vmem %s0, %s256
      %p258 = scmp.lt.s32.totalorder %s18, 1
      %s259 = scalar_select %p258, %s18, 1
      %s260 = smul.addr %s259, 6
      %s261 = smul.addr %s260, 8
      %s262 = scalar_lea.vmem %s4, %s261
      %p263 = scmp.lt.s32.totalorder %s18, 1
      %s264 = scalar_select %p263, %s18, 1
      %s265 = scalar_lea.vmem %s5, %s264
      %p266 = scmp.lt.s32.totalorder %s18, 1
      %s267 = scalar_select %p266, %s18, 1
      %s268 = scalar_lea.vmem %s6, %s267
      %v270 = vld [vmem:[%s257] sm:$0xff]
      %v271 = vld [vmem:[%s257 + $0x8] sm:$0xff]
      %v272 = vld [vmem:[%s257 + $0x10] sm:$0xff]
      %v273 = vld [vmem:[%s257 + $0x18] sm:$0xff]
      %v274 = vld [vmem:[%s257 + $0x20] sm:$0xff]
      %v275 = vld [vmem:[%s257 + $0x28] sm:$0x3f]
      %v276 = vpack.c.bf16 %v271, %v270
      %v277 = vpack.c.bf16 %v273, %v272
      %v278 = vpack.c.bf16 %v275, %v274
      %v279 = vld [vmem:[%s1] sm:$0x3]
      %v280 = vld [vmem:[%s257 + $0x1] sm:$0xff]
      %v281 = vld [vmem:[%s257 + $0x9] sm:$0xff]
      %v282 = vld [vmem:[%s257 + $0x11] sm:$0xff]
      %v283 = vld [vmem:[%s257 + $0x19] sm:$0xff]
      %v284 = vld [vmem:[%s257 + $0x21] sm:$0xff]
      %v285 = vld [vmem:[%s257 + $0x29] sm:$0x3f]
      %v286 = vpack.c.bf16 %v281, %v280
      %v287 = vpack.c.bf16 %v283, %v282
      %v288 = vpack.c.bf16 %v285, %v284
      %s289 = scalar_lea.vmem %s1, 2
      %v290 = vld [vmem:[%s289] sm:$0x3]
      %vm291 = vcmask 31744
      %v293 = vsel %vm291, %v286, 0
      %v296 = vsel %vm291, %v287, 0
      %v299 = vsel %vm291, %v288, 0
      %vm301 = vcmask 1041408
      %v303 = vsel %vm301, %v290, 0
      %305 = vmatpush.bf16.msra.mxu0 0
      %306 = vmatpush.bf16.msra.mxu0 0
      %307 = vmatpush.bf16.msra.mxu0 0
      %308 = vmatpush.bf16.msra.mxu0 0
      %309 = vmatpush.bf16.msra.mxu0 0
      %310 = vmatpush.bf16.msra.mxu0 0
      %311 = vmatpush.bf16.msra.mxu0 0
      %312 = vmatpush.bf16.msra.mxu0 %v303
      %313 = vmatmul.bf16.gmra.mxu0 %v293
      %v314 = vpop.f32.mrf.mxu0
      %v315 = vadd.f32 0.0, %v314
      %v316 = vpop.f32.mrf.mxu0
      %v317 = vadd.f32 0.0, %v316
      %318 = vmatmul.bf16.gmra.mxu0 %v296
      %v319 = vpop.f32.mrf.mxu0
      %v320 = vadd.f32 0.0, %v319
      %v321 = vpop.f32.mrf.mxu0
      %v322 = vadd.f32 0.0, %v321
      %323 = vmatmul.bf16.gmra.mxu0 %v299
      %v324 = vpop.f32.mrf.mxu0
      %v325 = vadd.f32 0.0, %v324
      %v326 = vpop.f32.mrf.mxu0
      %v327 = vadd.f32 0.0, %v326
      %328 = vdwg.mxu0
      %v330 = vsel %vm291, %v276, 0
      %v333 = vsel %vm291, %v277, 0
      %v336 = vsel %vm291, %v278, 0
      %v339 = vsel %vm301, %v279, 0
      %341 = vmatpush.bf16.msra.mxu0 0
      %342 = vmatpush.bf16.msra.mxu0 0
      %343 = vmatpush.bf16.msra.mxu0 0
      %344 = vmatpush.bf16.msra.mxu0 0
      %345 = vmatpush.bf16.msra.mxu0 0
      %346 = vmatpush.bf16.msra.mxu0 0
      %347 = vmatpush.bf16.msra.mxu0 0
      %348 = vmatpush.bf16.msra.mxu0 %v339
      %349 = vmatmul.bf16.gmra.mxu0 %v330
      %v350 = vpop.f32.mrf.mxu0
      %v351 = vadd.f32 %v315, %v350
      %v352 = vpop.f32.mrf.mxu0
      %v353 = vadd.f32 %v317, %v352
      %354 = vmatmul.bf16.gmra.mxu0 %v333
      %v355 = vpop.f32.mrf.mxu0
      %v356 = vadd.f32 %v320, %v355
      %v357 = vpop.f32.mrf.mxu0
      %v358 = vadd.f32 %v322, %v357
      %359 = vmatmul.bf16.gmra.mxu0 %v336
      %v360 = vpop.f32.mrf.mxu0
      %v361 = vadd.f32 %v325, %v360
      %v362 = vpop.f32.mrf.mxu0
      %v363 = vadd.f32 %v327, %v362
      %364 = vdwg.mxu0
      %v365 = vld [vmem:[%s257 + $0x2] sm:$0xff]
      %v366 = vld [vmem:[%s257 + $0xa] sm:$0xff]
      %v367 = vld [vmem:[%s257 + $0x12] sm:$0xff]
      %v368 = vld [vmem:[%s257 + $0x1a] sm:$0xff]
      %v369 = vld [vmem:[%s257 + $0x22] sm:$0xff]
      %v370 = vld [vmem:[%s257 + $0x2a] sm:$0x3f]
      %v371 = vpack.c.bf16 %v366, %v365
      %v372 = vpack.c.bf16 %v368, %v367
      %v373 = vpack.c.bf16 %v370, %v369
      %s374 = scalar_lea.vmem %s1, 4
      %v375 = vld [vmem:[%s374] sm:$0x3]
      %v377 = vsel %vm291, %v371, 0
      %v380 = vsel %vm291, %v372, 0
      %v383 = vsel %vm291, %v373, 0
      %v386 = vsel %vm301, %v375, 0
      %388 = vmatpush.bf16.msra.mxu0 0
      %389 = vmatpush.bf16.msra.mxu0 0
      %390 = vmatpush.bf16.msra.mxu0 0
      %391 = vmatpush.bf16.msra.mxu0 0
      %392 = vmatpush.bf16.msra.mxu0 0
      %393 = vmatpush.bf16.msra.mxu0 0
      %394 = vmatpush.bf16.msra.mxu0 0
      %395 = vmatpush.bf16.msra.mxu0 %v386
      %396 = vmatmul.bf16.gmra.mxu0 %v377
      %v397 = vpop.f32.mrf.mxu0
      %v398 = vadd.f32 0.0, %v397
      %v399 = vpop.f32.mrf.mxu0
      %v400 = vadd.f32 0.0, %v399
      %401 = vmatmul.bf16.gmra.mxu0 %v380
      %v402 = vpop.f32.mrf.mxu0
      %v403 = vadd.f32 0.0, %v402
      %v404 = vpop.f32.mrf.mxu0
      %v405 = vadd.f32 0.0, %v404
      %406 = vmatmul.bf16.gmra.mxu0 %v383
      %v407 = vpop.f32.mrf.mxu0
      %v408 = vadd.f32 0.0, %v407
      %v409 = vpop.f32.mrf.mxu0
      %v410 = vadd.f32 0.0, %v409
      %411 = vdwg.mxu0
      %v412 = vadd.f32 %v351, %v398
      %v413 = vadd.f32 %v353, %v400
      %v414 = vadd.f32 %v356, %v403
      %v415 = vadd.f32 %v358, %v405
      %v416 = vadd.f32 %v361, %v408
      %v417 = vadd.f32 %v363, %v410
      %v418 = vld [vmem:[%s257 + $0x8] sm:$0xff]
      %v419 = vld [vmem:[%s257 + $0x10] sm:$0xff]
      %v420 = vld [vmem:[%s257 + $0x18] sm:$0xff]
      %v421 = vld [vmem:[%s257 + $0x20] sm:$0xff]
      %v422 = vld [vmem:[%s257 + $0x28] sm:$0xff]
      %v423 = vld [vmem:[%s257 + $0x30] sm:$0x3f]
      %v424 = vpack.c.bf16 %v419, %v418
      %v425 = vpack.c.bf16 %v421, %v420
      %v426 = vpack.c.bf16 %v423, %v422
      %s427 = scalar_lea.vmem %s1, 6
      %v428 = vld [vmem:[%s427] sm:$0x3]
      %v430 = vsel %vm291, %v424, 0
      %v433 = vsel %vm291, %v425, 0
      %v436 = vsel %vm291, %v426, 0
      %v439 = vsel %vm301, %v428, 0
      %441 = vmatpush.bf16.msra.mxu0 0
      %442 = vmatpush.bf16.msra.mxu0 0
      %443 = vmatpush.bf16.msra.mxu0 0
      %444 = vmatpush.bf16.msra.mxu0 0
      %445 = vmatpush.bf16.msra.mxu0 0
      %446 = vmatpush.bf16.msra.mxu0 0
      %447 = vmatpush.bf16.msra.mxu0 0
      %448 = vmatpush.bf16.msra.mxu0 %v439
      %449 = vmatmul.bf16.gmra.mxu0 %v430
      %v450 = vpop.f32.mrf.mxu0
      %v451 = vadd.f32 0.0, %v450
      %v452 = vpop.f32.mrf.mxu0
      %v453 = vadd.f32 0.0, %v452
      %454 = vmatmul.bf16.gmra.mxu0 %v433
      %v455 = vpop.f32.mrf.mxu0
      %v456 = vadd.f32 0.0, %v455
      %v457 = vpop.f32.mrf.mxu0
      %v458 = vadd.f32 0.0, %v457
      %459 = vmatmul.bf16.gmra.mxu0 %v436
      %v460 = vpop.f32.mrf.mxu0
      %v461 = vadd.f32 0.0, %v460
      %v462 = vpop.f32.mrf.mxu0
      %v463 = vadd.f32 0.0, %v462
      %464 = vdwg.mxu0
      %v465 = vadd.f32 %v412, %v451
      %v466 = vadd.f32 %v413, %v453
      %v467 = vadd.f32 %v414, %v456
      %v468 = vadd.f32 %v415, %v458
      %v469 = vadd.f32 %v416, %v461
      %v470 = vadd.f32 %v417, %v463
      %v471 = vld [vmem:[%s257 + $0x9] sm:$0xff]
      %v472 = vld [vmem:[%s257 + $0x11] sm:$0xff]
      %v473 = vld [vmem:[%s257 + $0x19] sm:$0xff]
      %v474 = vld [vmem:[%s257 + $0x21] sm:$0xff]
      %v475 = vld [vmem:[%s257 + $0x29] sm:$0xff]
      %v476 = vld [vmem:[%s257 + $0x31] sm:$0x3f]
      %v477 = vpack.c.bf16 %v472, %v471
      %v478 = vpack.c.bf16 %v474, %v473
      %v479 = vpack.c.bf16 %v476, %v475
      %s480 = scalar_lea.vmem %s1, 8
      %v481 = vld [vmem:[%s480] sm:$0x3]
      %v483 = vsel %vm291, %v477, 0
      %v486 = vsel %vm291, %v478, 0
      %v489 = vsel %vm291, %v479, 0
      %v492 = vsel %vm301, %v481, 0
      %494 = vmatpush.bf16.msra.mxu0 0
      %495 = vmatpush.bf16.msra.mxu0 0
      %496 = vmatpush.bf16.msra.mxu0 0
      %497 = vmatpush.bf16.msra.mxu0 0
      %498 = vmatpush.bf16.msra.mxu0 0
      %499 = vmatpush.bf16.msra.mxu0 0
      %500 = vmatpush.bf16.msra.mxu0 0
      %501 = vmatpush.bf16.msra.mxu0 %v492
      %502 = vmatmul.bf16.gmra.mxu0 %v483
      %v503 = vpop.f32.mrf.mxu0
      %v504 = vadd.f32 0.0, %v503
      %v505 = vpop.f32.mrf.mxu0
      %v506 = vadd.f32 0.0, %v505
      %507 = vmatmul.bf16.gmra.mxu0 %v486
      %v508 = vpop.f32.mrf.mxu0
      %v509 = vadd.f32 0.0, %v508
      %v510 = vpop.f32.mrf.mxu0
      %v511 = vadd.f32 0.0, %v510
      %512 = vmatmul.bf16.gmra.mxu0 %v489
      %v513 = vpop.f32.mrf.mxu0
      %v514 = vadd.f32 0.0, %v513
      %v515 = vpop.f32.mrf.mxu0
      %v516 = vadd.f32 0.0, %v515
      %517 = vdwg.mxu0
      %v518 = vadd.f32 %v465, %v504
      %v519 = vadd.f32 %v466, %v506
      %v520 = vadd.f32 %v467, %v509
      %v521 = vadd.f32 %v468, %v511
      %v522 = vadd.f32 %v469, %v514
      %v523 = vadd.f32 %v470, %v516
      %v524 = vld [vmem:[%s257 + $0xa] sm:$0xff]
      %v525 = vld [vmem:[%s257 + $0x12] sm:$0xff]
      %v526 = vld [vmem:[%s257 + $0x1a] sm:$0xff]
      %v527 = vld [vmem:[%s257 + $0x22] sm:$0xff]
      %v528 = vld [vmem:[%s257 + $0x2a] sm:$0xff]
      %v529 = vld [vmem:[%s257 + $0x32] sm:$0x3f]
      %v530 = vpack.c.bf16 %v525, %v524
      %v531 = vpack.c.bf16 %v527, %v526
      %v532 = vpack.c.bf16 %v529, %v528
      %s533 = scalar_lea.vmem %s1, 10
      %v534 = vld [vmem:[%s533] sm:$0x3]
      %v536 = vsel %vm291, %v530, 0
      %v539 = vsel %vm291, %v531, 0
      %v542 = vsel %vm291, %v532, 0
      %v545 = vsel %vm301, %v534, 0
      %547 = vmatpush.bf16.msra.mxu0 0
      %548 = vmatpush.bf16.msra.mxu0 0
      %549 = vmatpush.bf16.msra.mxu0 0
      %550 = vmatpush.bf16.msra.mxu0 0
      %551 = vmatpush.bf16.msra.mxu0 0
      %552 = vmatpush.bf16.msra.mxu0 0
      %553 = vmatpush.bf16.msra.mxu0 0
      %554 = vmatpush.bf16.msra.mxu0 %v545
      %555 = vmatmul.bf16.gmra.mxu0 %v536
      %v556 = vpop.f32.mrf.mxu0
      %v557 = vadd.f32 0.0, %v556
      %v558 = vpop.f32.mrf.mxu0
      %v559 = vadd.f32 0.0, %v558
      %560 = vmatmul.bf16.gmra.mxu0 %v539
      %v561 = vpop.f32.mrf.mxu0
      %v562 = vadd.f32 0.0, %v561
      %v563 = vpop.f32.mrf.mxu0
      %v564 = vadd.f32 0.0, %v563
      %565 = vmatmul.bf16.gmra.mxu0 %v542
      %v566 = vpop.f32.mrf.mxu0
      %v567 = vadd.f32 0.0, %v566
      %v568 = vpop.f32.mrf.mxu0
      %v569 = vadd.f32 0.0, %v568
      %570 = vdwg.mxu0
      %v571 = vadd.f32 %v518, %v557
      %v572 = vadd.f32 %v519, %v559
      %v573 = vadd.f32 %v520, %v562
      %v574 = vadd.f32 %v521, %v564
      %v575 = vadd.f32 %v522, %v567
      %v576 = vadd.f32 %v523, %v569
      %v577 = vld [vmem:[%s257 + $0x10] sm:$0xff]
      %v578 = vld [vmem:[%s257 + $0x18] sm:$0xff]
      %v579 = vld [vmem:[%s257 + $0x20] sm:$0xff]
      %v580 = vld [vmem:[%s257 + $0x28] sm:$0xff]
      %v581 = vld [vmem:[%s257 + $0x30] sm:$0xff]
      %v582 = vld [vmem:[%s257 + $0x38] sm:$0x3f]
      %v583 = vpack.c.bf16 %v578, %v577
      %v584 = vpack.c.bf16 %v580, %v579
      %v585 = vpack.c.bf16 %v582, %v581
      %s586 = scalar_lea.vmem %s1, 12
      %v587 = vld [vmem:[%s586] sm:$0x3]
      %v589 = vsel %vm291, %v583, 0
      %v592 = vsel %vm291, %v584, 0
      %v595 = vsel %vm291, %v585, 0
      %v598 = vsel %vm301, %v587, 0
      %600 = vmatpush.bf16.msra.mxu0 0
      %601 = vmatpush.bf16.msra.mxu0 0
      %602 = vmatpush.bf16.msra.mxu0 0
      %603 = vmatpush.bf16.msra.mxu0 0
      %604 = vmatpush.bf16.msra.mxu0 0
      %605 = vmatpush.bf16.msra.mxu0 0
      %606 = vmatpush.bf16.msra.mxu0 0
      %607 = vmatpush.bf16.msra.mxu0 %v598
      %608 = vmatmul.bf16.gmra.mxu0 %v589
      %v609 = vpop.f32.mrf.mxu0
      %v610 = vadd.f32 0.0, %v609
      %v611 = vpop.f32.mrf.mxu0
      %v612 = vadd.f32 0.0, %v611
      %613 = vmatmul.bf16.gmra.mxu0 %v592
      %v614 = vpop.f32.mrf.mxu0
      %v615 = vadd.f32 0.0, %v614
      %v616 = vpop.f32.mrf.mxu0
      %v617 = vadd.f32 0.0, %v616
      %618 = vmatmul.bf16.gmra.mxu0 %v595
      %v619 = vpop.f32.mrf.mxu0
      %v620 = vadd.f32 0.0, %v619
      %v621 = vpop.f32.mrf.mxu0
      %v622 = vadd.f32 0.0, %v621
      %623 = vdwg.mxu0
      %v624 = vadd.f32 %v571, %v610
      %v625 = vadd.f32 %v572, %v612
      %v626 = vadd.f32 %v573, %v615
      %v627 = vadd.f32 %v574, %v617
      %v628 = vadd.f32 %v575, %v620
      %v629 = vadd.f32 %v576, %v622
      %v630 = vld [vmem:[%s257 + $0x11] sm:$0xff]
      %v631 = vld [vmem:[%s257 + $0x19] sm:$0xff]
      %v632 = vld [vmem:[%s257 + $0x21] sm:$0xff]
      %v633 = vld [vmem:[%s257 + $0x29] sm:$0xff]
      %v634 = vld [vmem:[%s257 + $0x31] sm:$0xff]
      %v635 = vld [vmem:[%s257 + $0x39] sm:$0x3f]
      %v636 = vpack.c.bf16 %v631, %v630
      %v637 = vpack.c.bf16 %v633, %v632
      %v638 = vpack.c.bf16 %v635, %v634
      %s639 = scalar_lea.vmem %s1, 14
      %v640 = vld [vmem:[%s639] sm:$0x3]
      %v642 = vsel %vm291, %v636, 0
      %v645 = vsel %vm291, %v637, 0
      %v648 = vsel %vm291, %v638, 0
      %v651 = vsel %vm301, %v640, 0
      %653 = vmatpush.bf16.msra.mxu0 0
      %654 = vmatpush.bf16.msra.mxu0 0
      %655 = vmatpush.bf16.msra.mxu0 0
      %656 = vmatpush.bf16.msra.mxu0 0
      %657 = vmatpush.bf16.msra.mxu0 0
      %658 = vmatpush.bf16.msra.mxu0 0
      %659 = vmatpush.bf16.msra.mxu0 0
      %660 = vmatpush.bf16.msra.mxu0 %v651
      %661 = vmatmul.bf16.gmra.mxu0 %v642
      %v662 = vpop.f32.mrf.mxu0
      %v663 = vadd.f32 0.0, %v662
      %v664 = vpop.f32.mrf.mxu0
      %v665 = vadd.f32 0.0, %v664
      %666 = vmatmul.bf16.gmra.mxu0 %v645
      %v667 = vpop.f32.mrf.mxu0
      %v668 = vadd.f32 0.0, %v667
      %v669 = vpop.f32.mrf.mxu0
      %v670 = vadd.f32 0.0, %v669
      %671 = vmatmul.bf16.gmra.mxu0 %v648
      %v672 = vpop.f32.mrf.mxu0
      %v673 = vadd.f32 0.0, %v672
      %v674 = vpop.f32.mrf.mxu0
      %v675 = vadd.f32 0.0, %v674
      %676 = vdwg.mxu0
      %v677 = vadd.f32 %v624, %v663
      %v678 = vadd.f32 %v625, %v665
      %v679 = vadd.f32 %v626, %v668
      %v680 = vadd.f32 %v627, %v670
      %v681 = vadd.f32 %v628, %v673
      %v682 = vadd.f32 %v629, %v675
      %v683 = vld [vmem:[%s257 + $0x12] sm:$0xff]
      %v684 = vld [vmem:[%s257 + $0x1a] sm:$0xff]
      %v685 = vld [vmem:[%s257 + $0x22] sm:$0xff]
      %v686 = vld [vmem:[%s257 + $0x2a] sm:$0xff]
      %v687 = vld [vmem:[%s257 + $0x32] sm:$0xff]
      %v688 = vld [vmem:[%s257 + $0x3a] sm:$0x3f]
      %v689 = vpack.c.bf16 %v684, %v683
      %v690 = vpack.c.bf16 %v686, %v685
      %v691 = vpack.c.bf16 %v688, %v687
      %s692 = scalar_lea.vmem %s1, 16
      %v693 = vld [vmem:[%s692] sm:$0x3]
      %v695 = vsel %vm291, %v689, 0
      %v698 = vsel %vm291, %v690, 0
      %v701 = vsel %vm291, %v691, 0
      %v704 = vsel %vm301, %v693, 0
      %706 = vmatpush.bf16.msra.mxu0 0
      %707 = vmatpush.bf16.msra.mxu0 0
      %708 = vmatpush.bf16.msra.mxu0 0
      %709 = vmatpush.bf16.msra.mxu0 0
      %710 = vmatpush.bf16.msra.mxu0 0
      %711 = vmatpush.bf16.msra.mxu0 0
      %712 = vmatpush.bf16.msra.mxu0 0
      %713 = vmatpush.bf16.msra.mxu0 %v704
      %714 = vmatmul.bf16.gmra.mxu0 %v695
      %v715 = vpop.f32.mrf.mxu0
      %v716 = vadd.f32 0.0, %v715
      %v717 = vpop.f32.mrf.mxu0
      %v718 = vadd.f32 0.0, %v717
      %719 = vmatmul.bf16.gmra.mxu0 %v698
      %v720 = vpop.f32.mrf.mxu0
      %v721 = vadd.f32 0.0, %v720
      %v722 = vpop.f32.mrf.mxu0
      %v723 = vadd.f32 0.0, %v722
      %724 = vmatmul.bf16.gmra.mxu0 %v701
      %v725 = vpop.f32.mrf.mxu0
      %v726 = vadd.f32 0.0, %v725
      %v727 = vpop.f32.mrf.mxu0
      %v728 = vadd.f32 0.0, %v727
      %729 = vdwg.mxu0
      %v730 = vadd.f32 %v677, %v716
      %v731 = vadd.f32 %v678, %v718
      %v732 = vadd.f32 %v679, %v721
      %v733 = vadd.f32 %v680, %v723
      %v734 = vadd.f32 %v681, %v726
      %v735 = vadd.f32 %v682, %v728
      %vm736 = vcmask 64512
      %737 = vst.msk [vmem:[%s262] sm:$0xff] %vm736, 0.0
      %738 = vst.msk [vmem:[%s262 + $0x8] sm:$0xff] %vm736, 0.0
      %739 = vst.msk [vmem:[%s262 + $0x10] sm:$0xff] %vm736, 0.0
      %740 = vst.msk [vmem:[%s262 + $0x18] sm:$0xff] %vm736, 0.0
      %741 = vst.msk [vmem:[%s262 + $0x20] sm:$0xff] %vm736, 0.0
      %742 = vst.msk [vmem:[%s262 + $0x28] sm:$0xff] %vm736, 0.0
      %743 = vst.msk [vmem:[%s262] sm:$0xff] %vm736, %v730
      %744 = vst.msk [vmem:[%s262 + $0x8] sm:$0xff] %vm736, %v731
      %745 = vst.msk [vmem:[%s262 + $0x10] sm:$0xff] %vm736, %v732
      %746 = vst.msk [vmem:[%s262 + $0x18] sm:$0xff] %vm736, %v733
      %747 = vst.msk [vmem:[%s262 + $0x20] sm:$0xff] %vm736, %v734
      %vm748 = vcmask 62464
      %749 = vst.msk [vmem:[%s262 + $0x28] sm:$0x3f] %vm748, %v735
      %v750 = vlaneseq
      %v751 = vshrl.u32 %v750, 7
      %v752 = vadd.s32 %v751, 8
      %v753 = vadd.s32 %v751, 16
      %v754 = vadd.s32 %v751, 24
      %v755 = vadd.s32 %v751, 32
      %v756 = vadd.s32 %v751, 40
      %vm757 = vcmp.lt.s32.totalorder %v751, 0
      %v758 = vsub.s32 0, %v751
      %v759 = vsel %vm757, %v758, %v751
      %v760 = vshrl.u32 %v759, 3
      %v761 = vand.u32 %v759, 7
      %v762 = vsub.s32 0, %v761
      %v763 = vsel %vm757, %v762, %v761
      %vm764 = vcmp.lt.s32.totalorder %v752, 0
      %v765 = vsub.s32 0, %v752
      %v766 = vsel %vm764, %v765, %v752
      %v767 = vshrl.u32 %v766, 3
      %v768 = vand.u32 %v766, 7
      %v769 = vsub.s32 0, %v768
      %v770 = vsel %vm764, %v769, %v768
      %vm771 = vcmp.lt.s32.totalorder %v753, 0
      %v772 = vsub.s32 0, %v753
      %v773 = vsel %vm771, %v772, %v753
      %v774 = vshrl.u32 %v773, 3
      %v775 = vand.u32 %v773, 7
      %v776 = vsub.s32 0, %v775
      %v777 = vsel %vm771, %v776, %v775
      %vm778 = vcmp.lt.s32.totalorder %v754, 0
      %v779 = vsub.s32 0, %v754
      %v780 = vsel %vm778, %v779, %v754
      %v781 = vshrl.u32 %v780, 3
      %v782 = vand.u32 %v780, 7
      %v783 = vsub.s32 0, %v782
      %v784 = vsel %vm778, %v783, %v782
      %vm785 = vcmp.lt.s32.totalorder %v755, 0
      %v786 = vsub.s32 0, %v755
      %v787 = vsel %vm785, %v786, %v755
      %v788 = vshrl.u32 %v787, 3
      %v789 = vand.u32 %v787, 7
      %v790 = vsub.s32 0, %v789
      %v791 = vsel %vm785, %v790, %v789
      %vm792 = vcmp.lt.s32.totalorder %v756, 0
      %v793 = vsub.s32 0, %v756
      %v794 = vsel %vm792, %v793, %v756
      %v795 = vshrl.u32 %v794, 3
      %v796 = vand.u32 %v794, 7
      %v797 = vsub.s32 0, %v796
      %v798 = vsel %vm792, %v797, %v796
      %vm799 = vcmp.ne.s32.totalorder %v763, 0
      %vm800 = vcmp.ne.s32.totalorder %v770, 0
      %vm801 = vcmp.ne.s32.totalorder %v777, 0
      %vm802 = vcmp.ne.s32.totalorder %v784, 0
      %vm803 = vcmp.ne.s32.totalorder %v791, 0
      %vm804 = vcmp.ne.s32.totalorder %v798, 0
      %vm805 = vcmp.lt.s32.totalorder %v763, 0
      %vm806 = vcmp.lt.s32.totalorder %v770, 0
      %vm807 = vcmp.lt.s32.totalorder %v777, 0
      %vm808 = vcmp.lt.s32.totalorder %v784, 0
      %vm809 = vcmp.lt.s32.totalorder %v791, 0
      %vm810 = vcmp.lt.s32.totalorder %v798, 0
      %vm811 = vmand %vm805, %vm799
      %vm812 = vmand %vm806, %vm800
      %vm813 = vmand %vm807, %vm801
      %vm814 = vmand %vm808, %vm802
      %vm815 = vmand %vm809, %vm803
      %vm816 = vmand %vm810, %vm804
      %v817 = vadd.s32 %v763, 8
      %v818 = vadd.s32 %v770, 8
      %v819 = vadd.s32 %v777, 8
      %v820 = vadd.s32 %v784, 8
      %v821 = vadd.s32 %v791, 8
      %v822 = vadd.s32 %v798, 8
      %v823 = vsel %vm811, %v817, %v763
      %v824 = vsel %vm812, %v818, %v770
      %v825 = vsel %vm813, %v819, %v777
      %v826 = vsel %vm814, %v820, %v784
      %v827 = vsel %vm815, %v821, %v791
      %v828 = vsel %vm816, %v822, %v798
      %vm829 = vcmp.lt.s32.totalorder %v823, 6
      %vm830 = vcmp.lt.s32.totalorder %v824, 6
      %vm831 = vcmp.lt.s32.totalorder %v825, 6
      %vm832 = vcmp.lt.s32.totalorder %v826, 6
      %vm833 = vcmp.lt.s32.totalorder %v827, 6
      %vm834 = vcmp.lt.s32.totalorder %v828, 6
      %v835 = vsel %vm829, %v730, 0.0
      %v836 = vsel %vm830, %v731, 0.0
      %v837 = vsel %vm831, %v732, 0.0
      %v838 = vsel %vm832, %v733, 0.0
      %v839 = vsel %vm833, %v734, 0.0
      %v840 = vsel %vm834, %v735, 0.0
      %v841 = vsel %vm736, %v835, 0.0
      %v842 = vsel %vm736, %v836, 0.0
      %v843 = vadd.f32 %v841, %v842
      %v844 = vsel %vm736, %v837, 0.0
      %v845 = vadd.f32 %v843, %v844
      %v846 = vsel %vm736, %v838, 0.0
      %v847 = vadd.f32 %v845, %v846
      %v848 = vsel %vm736, %v839, 0.0
      %v849 = vadd.f32 %v847, %v848
      %v850 = vsel %vm748, %v840, 0.0
      %v851 = vadd.f32 %v849, %v850
      %v852 = vrot.slane %v851, 4
      %v853 = vadd.f32 %v851, %v852
      %v854 = vrot.slane %v853, 2
      %v855 = vadd.f32 %v853, %v854
      %v856 = vrot.slane %v855, 1
      %v857 = vadd.f32 %v855, %v856
      %vm858 = vcmask 57344
      %859 = vst.msk [vmem:[%s265] sm:$0x1] %vm858, %v857
      %v860 = vmul.f32 %v835, %v835
      %v861 = vmul.f32 %v836, %v836
      %v862 = vmul.f32 %v837, %v837
      %v863 = vmul.f32 %v838, %v838
      %v864 = vmul.f32 %v839, %v839
      %v865 = vmul.f32 %v840, %v840
      %v866 = vsel %vm736, %v860, 0.0
      %v867 = vsel %vm736, %v861, 0.0
      %v868 = vadd.f32 %v866, %v867
      %v869 = vsel %vm736, %v862, 0.0
      %v870 = vadd.f32 %v868, %v869
      %v871 = vsel %vm736, %v863, 0.0
      %v872 = vadd.f32 %v870, %v871
      %v873 = vsel %vm736, %v864, 0.0
      %v874 = vadd.f32 %v872, %v873
      %v875 = vsel %vm748, %v865, 0.0
      %v876 = vadd.f32 %v874, %v875
      %v877 = vrot.slane %v876, 4
      %v878 = vadd.f32 %v876, %v877
      %v879 = vrot.slane %v878, 2
      %v880 = vadd.f32 %v878, %v879
      %v881 = vrot.slane %v880, 1
      %v882 = vadd.f32 %v880, %v881
      %883 = vst.msk [vmem:[%s268] sm:$0x1] %vm858, %v882
      %p884 = scmp.lt.s32.totalorder %s18, 1
      %s885 = scalar_select %p884, %s18, 1
      %s886 = smul.addr %s885, 6
      %s887 = smul.addr %s886, 8
      %s888 = scalar_lea.vmem %s4, %s887
      %p889 = scmp.lt.s32.totalorder %s18, 1
      %s890 = scalar_select %p889, %s18, 1
      %s891 = scalar_lea.vmem %s5, %s890
      %p892 = scmp.lt.s32.totalorder %s18, 1
      %s893 = scalar_select %p892, %s18, 1
      %s894 = scalar_lea.vmem %s6, %s893
      // Predicated region
      $region37: #{down_step.5} parent=35 // pred_check
        %p895 = pneg %p125
      $region38: #{down_step.5} parent=35 // pred_check_branch
        %897 = sbr.rel (%p895) target = $region40
      $region39: #{down_step.5} parent=35 // pred_region
        _
      $region40: #{down_step.5} parent=35 // pred_fallthru
        _
      // Predicated region
      $region41: #{down_step.5} parent=35 // pred_check
        %p898 = pneg %p151
      $region42: #{down_step.5} parent=35 // pred_check_branch
        %900 = sbr.rel (%p898) target = $region44
      $region43: #{down_step.5} parent=35 // pred_region
        _
      $region44: #{down_step.5} parent=35 // pred_fallthru
        _
      // Predicated region
      $region45: #{down_step.5} parent=35 // pred_check
        %p901 = pneg %p177
      $region46: #{down_step.5} parent=35 // pred_check_branch
        %903 = sbr.rel (%p901) target = $region48
      $region47: #{down_step.5} parent=35 // pred_region
        _
      $region48: #{down_step.5} parent=35 // pred_fallthru
        _
    $region36: #{down_step.5} parent=5 // pred_fallthru
      _
    %p904 = scmp.le.s32.totalorder 2, %s13
    // Predicated region
    $region49: #{down_step.5} parent=5 // pred_check
      %p905 = pneg %p904
    $region50: #{down_step.5} parent=5 // pred_check_branch
      %907 = sbr.rel (%p905) target = $region52
    $region51: #{down_step.5} parent=5 // pred_region
      %s908 = ssub.s32 %s13, 2
      // Predicated region
      $region53: #{down_step.5} parent=51 // pred_check
        %p909 = pneg %p131
      $region54: #{down_step.5} parent=51 // pred_check_branch
        %911 = sbr.rel (%p909) target = $region56
      $region55: #{down_step.5} parent=51 // pred_region
        %p912 = scmp.lt.s32.totalorder %s19, 1
        %s913 = scalar_select %p912, %s19, 1
        %s914 = smul.addr %s913, 6
        %s915 = smul.addr %s914, 8
        %s916 = scalar_lea.vmem %s4, %s915
      $region56: #{down_step.5} parent=51 // pred_fallthru
        _
      // Predicated region
      $region57: #{down_step.5} parent=51 // pred_check
        %p917 = pneg %p157
      $region58: #{down_step.5} parent=51 // pred_check_branch
        %919 = sbr.rel (%p917) target = $region60
      $region59: #{down_step.5} parent=51 // pred_region
        %p920 = scmp.lt.s32.totalorder %s19, 1
        %s921 = scalar_select %p920, %s19, 1
        %s922 = scalar_lea.vmem %s5, %s921
      $region60: #{down_step.5} parent=51 // pred_fallthru
        _
      // Predicated region
      $region61: #{down_step.5} parent=51 // pred_check
        %p923 = pneg %p183
      $region62: #{down_step.5} parent=51 // pred_check_branch
        %925 = sbr.rel (%p923) target = $region64
      $region63: #{down_step.5} parent=51 // pred_region
        %p926 = scmp.lt.s32.totalorder %s19, 1
        %s927 = scalar_select %p926, %s19, 1
        %s928 = scalar_lea.vmem %s6, %s927
      $region64: #{down_step.5} parent=51 // pred_fallthru
        _
    $region52: #{down_step.5} parent=5 // pred_fallthru
      _
  $region6: #{down_step.5} parent=0 // loop_footer
    %s17 = sadd.s32 1, %s13
  $region7: #{down_step.5} parent=0 // loop_footer_branch
    %12 = sbr.rel target = $region3
  $region8: #{down_step.5} parent=0 // loop_exit
    _

// kernel: down_step.6
$region0: #{down_step.6}
  #allocation0 [shape = 'u32[]', space=smem, size = 0x4, offset = 0x4, fixed_abs, tag = 'smem constant byte address 0x4 - core index']
  #allocation1 [shape = 'u32[72,128]{1,0:T(1,128)}', space=vmem, size = 0x9000, scoped, tag = 'internal scratch']
  %s0 = inlined_call_operand.vmem [shape: f32[2,48,8], index: 0, kind: input, shape index: {}]
  %s1 = inlined_call_operand.vmem [shape: bf16[9,8,8], index: 1, kind: input, shape index: {}]
  %s2 = inlined_call_operand.vmem [shape: f32[1,8], index: 2, kind: input, shape index: {}]
  %s3 = inlined_call_operand.vmem [shape: f32[1,8], index: 3, kind: input, shape index: {}]
  %s4 = inlined_call_operand.vmem [shape: f32[2,32,8], index: 4, kind: output, shape index: {0}]
  %s5 = inlined_call_operand.vmem [shape: f32[2,1,8], index: 5, kind: output, shape index: {1}]
  %s6 = inlined_call_operand.vmem [shape: f32[2,1,8], index: 6, kind: output, shape index: {2}]
  %7 = xla_tuple %s4, %s5, %s6
  %s8 = sld [smem:[#allocation0]]
  $region65: #{down_step.6} parent=0
    _
  %s10 = ssub.s32 1, %s8
  %s11 = scalar_select 0, %s10, %s8
  loop: start=0, step=1, limit=4
  $region2: #{down_step.6} parent=0 // loop_pre_header
    _
  $region3: #{down_step.6} parent=0 // loop_header
    %s13 = sphi 0, %s17
    %p14 = scmp.ge.s32.totalorder %s13, 4
    %s23 = sphi 0, %s25
    %s26 = sphi 0, %s23
    %s27 = sphi 0, %s26
    %s43 = sphi 0, %s27
    %s47 = sphi 0, %s47
    %s49 = sphi 0, %s47
    %s50 = sphi 0, %s49
    %s64 = sphi 0, %s50
    %s68 = sphi 0, %s68
    %s70 = sphi 0, %s68
    %s71 = sphi 0, %s70
    %s85 = sphi 0, %s71
    %s89 = sphi 0, %s89
    %s91 = sphi 0, %s89
    %s92 = sphi 0, %s91
    %s106 = sphi 0, %s92
    %s112 = sphi 0, %s114
    %s115 = sphi 0, %s112
    %s116 = sphi 0, %s115
    %s132 = sphi 0, %s116
    %s138 = sphi 0, %s140
    %s141 = sphi 0, %s138
    %s142 = sphi 0, %s141
    %s158 = sphi 0, %s142
    %s164 = sphi 0, %s166
    %s167 = sphi 0, %s164
    %s168 = sphi 0, %s167
    %s184 = sphi 0, %s168
  $region4: #{down_step.6} parent=0 // loop_header_branch
    %16 = sbr.rel (%p14) target = $region8
  $region5: #{down_step.6} parent=0 // loop_body
    %s18 = ssub.s32 %s13, 1
    %s19 = ssub.s32 %s13, 2
    %s20 = sadd.s32 %s13, 1
    %s21 = ssub.s32 %s13, %s20
    %p22 = scmp.eq.s32.totalorder %s21, 0
    %s24 = sadd.s32 %s23, 1
    %s25 = scalar_select %p22, %s23, %s24
    %p28 = pneg %p22
    %p29 = scmp.eq.s32.totalorder %s13, 1
    %p30 = por %p28, %p29
    %p31 = scmp.ne.s32.totalorder %s23, %s26
    %p32 = scmp.eq.s32.totalorder %s13, 0
    %p33 = por %p31, %p32
    %p34 = scmp.ne.s32.totalorder %s23, %s26
    %p35 = scmp.eq.s32.totalorder %s18, 1
    %p36 = por %p34, %p35
    %p37 = scmp.ne.s32.totalorder %s26, %s27
    %p38 = scmp.eq.s32.totalorder %s18, 0
    %p39 = por %p37, %p38
    %p40 = scmp.ne.s32.totalorder %s26, %s27
    %p41 = scmp.eq.s32.totalorder %s19, 1
    %p42 = por %p40, %p41
    %p44 = scmp.ne.s32.totalorder %s27, %s43
    %p45 = scmp.eq.s32.totalorder %s19, 0
    %p46 = por %p44, %p45
    %s48 = sadd.s32 %s47, 1
    %p51 = scmp.eq.s32.totalorder %s13, 1
    %p52 = scmp.ne.s32.totalorder %s47, %s49
    %p53 = scmp.eq.s32.totalorder %s13, 0
    %p54 = por %p52, %p53
    %p55 = scmp.ne.s32.totalorder %s47, %s49
    %p56 = scmp.eq.s32.totalorder %s18, 1
    %p57 = por %p55, %p56
    %p58 = scmp.ne.s32.totalorder %s49, %s50
    %p59 = scmp.eq.s32.totalorder %s18, 0
    %p60 = por %p58, %p59
    %p61 = scmp.ne.s32.totalorder %s49, %s50
    %p62 = scmp.eq.s32.totalorder %s19, 1
    %p63 = por %p61, %p62
    %p65 = scmp.ne.s32.totalorder %s50, %s64
    %p66 = scmp.eq.s32.totalorder %s19, 0
    %p67 = por %p65, %p66
    %s69 = sadd.s32 %s68, 1
    %p72 = scmp.eq.s32.totalorder %s13, 1
    %p73 = scmp.ne.s32.totalorder %s68, %s70
    %p74 = scmp.eq.s32.totalorder %s13, 0
    %p75 = por %p73, %p74
    %p76 = scmp.ne.s32.totalorder %s68, %s70
    %p77 = scmp.eq.s32.totalorder %s18, 1
    %p78 = por %p76, %p77
    %p79 = scmp.ne.s32.totalorder %s70, %s71
    %p80 = scmp.eq.s32.totalorder %s18, 0
    %p81 = por %p79, %p80
    %p82 = scmp.ne.s32.totalorder %s70, %s71
    %p83 = scmp.eq.s32.totalorder %s19, 1
    %p84 = por %p82, %p83
    %p86 = scmp.ne.s32.totalorder %s71, %s85
    %p87 = scmp.eq.s32.totalorder %s19, 0
    %p88 = por %p86, %p87
    %s90 = sadd.s32 %s89, 1
    %p93 = scmp.eq.s32.totalorder %s13, 1
    %p94 = scmp.ne.s32.totalorder %s89, %s91
    %p95 = scmp.eq.s32.totalorder %s13, 0
    %p96 = por %p94, %p95
    %p97 = scmp.ne.s32.totalorder %s89, %s91
    %p98 = scmp.eq.s32.totalorder %s18, 1
    %p99 = por %p97, %p98
    %p100 = scmp.ne.s32.totalorder %s91, %s92
    %p101 = scmp.eq.s32.totalorder %s18, 0
    %p102 = por %p100, %p101
    %p103 = scmp.ne.s32.totalorder %s91, %s92
    %p104 = scmp.eq.s32.totalorder %s19, 1
    %p105 = por %p103, %p104
    %p107 = scmp.ne.s32.totalorder %s92, %s106
    %p108 = scmp.eq.s32.totalorder %s19, 0
    %p109 = por %p107, %p108
    %s110 = ssub.s32 %s13, %s20
    %p111 = scmp.eq.s32.totalorder %s110, 0
    %s113 = sadd.s32 %s112, 1
    %s114 = scalar_select %p111, %s112, %s113
    %p117 = pneg %p111
    %p118 = scmp.eq.s32.totalorder %s13, 1
    %p119 = por %p117, %p118
    %p120 = scmp.ne.s32.totalorder %s112, %s115
    %p121 = scmp.eq.s32.totalorder %s13, 0
    %p122 = por %p120, %p121
    %p123 = scmp.ne.s32.totalorder %s112, %s115
    %p124 = scmp.eq.s32.totalorder %s18, 1
    %p125 = por %p123, %p124
    %p126 = scmp.ne.s32.totalorder %s115, %s116
    %p127 = scmp.eq.s32.totalorder %s18, 0
    %p128 = por %p126, %p127
    %p129 = scmp.ne.s32.totalorder %s115, %s116
    %p130 = scmp.eq.s32.totalorder %s19, 1
    %p131 = por %p129, %p130
    %p133 = scmp.ne.s32.totalorder %s116, %s132
    %p134 = scmp.eq.s32.totalorder %s19, 0
    %p135 = por %p133, %p134
    %s136 = ssub.s32 %s13, %s20
    %p137 = scmp.eq.s32.totalorder %s136, 0
    %s139 = sadd.s32 %s138, 1
    %s140 = scalar_select %p137, %s138, %s139
    %p143 = pneg %p137
    %p144 = scmp.eq.s32.totalorder %s13, 1
    %p145 = por %p143, %p144
    %p146 = scmp.ne.s32.totalorder %s138, %s141
    %p147 = scmp.eq.s32.totalorder %s13, 0
    %p148 = por %p146, %p147
    %p149 = scmp.ne.s32.totalorder %s138, %s141
    %p150 = scmp.eq.s32.totalorder %s18, 1
    %p151 = por %p149, %p150
    %p152 = scmp.ne.s32.totalorder %s141, %s142
    %p153 = scmp.eq.s32.totalorder %s18, 0
    %p154 = por %p152, %p153
    %p155 = scmp.ne.s32.totalorder %s141, %s142
    %p156 = scmp.eq.s32.totalorder %s19, 1
    %p157 = por %p155, %p156
    %p159 = scmp.ne.s32.totalorder %s142, %s158
    %p160 = scmp.eq.s32.totalorder %s19, 0
    %p161 = por %p159, %p160
    %s162 = ssub.s32 %s13, %s20
    %p163 = scmp.eq.s32.totalorder %s162, 0
    %s165 = sadd.s32 %s164, 1
    %s166 = scalar_select %p163, %s164, %s165
    %p169 = pneg %p163
    %p170 = scmp.eq.s32.totalorder %s13, 1
    %p171 = por %p169, %p170
    %p172 = scmp.ne.s32.totalorder %s164, %s167
    %p173 = scmp.eq.s32.totalorder %s13, 0
    %p174 = por %p172, %p173
    %p175 = scmp.ne.s32.totalorder %s164, %s167
    %p176 = scmp.eq.s32.totalorder %s18, 1
    %p177 = por %p175, %p176
    %p178 = scmp.ne.s32.totalorder %s167, %s168
    %p179 = scmp.eq.s32.totalorder %s18, 0
    %p180 = por %p178, %p179
    %p181 = scmp.ne.s32.totalorder %s167, %s168
    %p182 = scmp.eq.s32.totalorder %s19, 1
    %p183 = por %p181, %p182
    %p185 = scmp.ne.s32.totalorder %s168, %s184
    %p186 = scmp.eq.s32.totalorder %s19, 0
    %p187 = por %p185, %p186
    %p188 = scmp.le.s32.totalorder 1, %s13
    %p189 = scmp.lt.s32.totalorder %s13, 3
    %p190 = pnand %p188, %p189
    %p191 = pneg %p190
    // Predicated region
    $region9: #{down_step.6} parent=5 // pred_check
      _
    $region10: #{down_step.6} parent=5 // pred_check_branch
      %193 = sbr.rel (%p190) target = $region12
    $region11: #{down_step.6} parent=5 // pred_region
      %s194 = ssub.s32 %s13, 1
      // Predicated region
      $region13: #{down_step.6} parent=11 // pred_check
        %p195 = pneg %p60
      $region14: #{down_step.6} parent=11 // pred_check_branch
        %197 = sbr.rel (%p195) target = $region16
      $region15: #{down_step.6} parent=11 // pred_region
        _
      $region16: #{down_step.6} parent=11 // pred_fallthru
        _
      // Predicated region
      $region17: #{down_step.6} parent=11 // pred_check
        %p198 = pneg %p81
      $region18: #{down_step.6} parent=11 // pred_check_branch
        %200 = sbr.rel (%p198) target = $region20
      $region19: #{down_step.6} parent=11 // pred_region
        _
      $region20: #{down_step.6} parent=11 // pred_fallthru
        _
      // Predicated region
      $region21: #{down_step.6} parent=11 // pred_check
        %p201 = pneg %p102
      $region22: #{down_step.6} parent=11 // pred_check_branch
        %203 = sbr.rel (%p201) target = $region24
      $region23: #{down_step.6} parent=11 // pred_region
        _
      $region24: #{down_step.6} parent=11 // pred_fallthru
        _
    $region12: #{down_step.6} parent=5 // pred_fallthru
      _
    %p204 = scmp.lt.s32.totalorder %s13, 2
    // Predicated region
    $region25: #{down_step.6} parent=5 // pred_check
      %p205 = pneg %p204
    $region26: #{down_step.6} parent=5 // pred_check_branch
      %207 = sbr.rel (%p205) target = $region28
    $region27: #{down_step.6} parent=5 // pred_region
      // Predicated region
      $region29: #{down_step.6} parent=27 // pred_check
        %p208 = pneg %p33
      $region30: #{down_step.6} parent=27 // pred_check_branch
        %210 = sbr.rel (%p208) target = $region32
      $region31: #{down_step.6} parent=27 // pred_region
        %p211 = scmp.lt.s32.totalorder %s13, 1
        %s212 = scalar_select %p211, %s13, 1
        %s213 = smul.addr %s212, 6
        %s214 = smul.addr %s213, 8
        %s215 = scalar_lea.vmem %s0, %s214
      $region32: #{down_step.6} parent=27 // pred_fallthru
        _
    $region28: #{down_step.6} parent=5 // pred_fallthru
      _
    %p216 = scmp.le.s32.totalorder 1, %s13
    %p217 = scmp.lt.s32.totalorder %s13, 3
    %p218 = pnand %p216, %p217
    %p219 = pneg %p218
    // Predicated region
    $region33: #{down_step.6} parent=5 // pred_check
      _
    $region34: #{down_step.6} parent=5 // pred_check_branch
      %221 = sbr.rel (%p218) target = $region36
    $region35: #{down_step.6} parent=5 // pred_region
      %s222 = ssub.s32 %s13, 1
      %p223 = scmp.lt.s32.totalorder %s18, 1
      %s224 = scalar_select %p223, %s18, 1
      %s225 = smul.addr %s224, 6
      %s226 = smul.addr %s225, 8
      %s227 = scalar_lea.vmem %s0, %s226
      %p228 = pneg %p39
      %p229 = pneg %p36
      %p230 = pneg %p60
      %p231 = pneg %p57
      %p232 = pneg %p81
      %p233 = pneg %p78
      %p234 = pneg %p102
      %p235 = pneg %p99
      %p236 = pneg %p128
      %p237 = pneg %p125
      %p238 = scmp.lt.s32.totalorder %s18, 1
      %s239 = scalar_select %p238, %s18, 1
      %s240 = smul.addr %s239, 4
      %s241 = smul.addr %s240, 8
      %s242 = scalar_lea.vmem %s4, %s241
      %p243 = pneg %p154
      %p244 = pneg %p151
      %p245 = scmp.lt.s32.totalorder %s18, 1
      %s246 = scalar_select %p245, %s18, 1
      %s247 = scalar_lea.vmem %s5, %s246
      %p248 = pneg %p180
      %p249 = pneg %p177
      %p250 = scmp.lt.s32.totalorder %s18, 1
      %s251 = scalar_select %p250, %s18, 1
      %s252 = scalar_lea.vmem %s6, %s251
      %p253 = scmp.lt.s32.totalorder %s18, 1
      %s254 = scalar_select %p253, %s18, 1
      %s255 = smul.addr %s254, 6
      %s256 = smul.addr %s255, 8
      %s257 = scalar_lea.vmem %s0, %s256
      %p258 = scmp.lt.s32.totalorder %s18, 1
      %s259 = scalar_select %p258, %s18, 1
      %s260 = smul.addr %s259, 4
      %s261 = smul.addr %s260, 8
      %s262 = scalar_lea.vmem %s4, %s261
      %p263 = scmp.lt.s32.totalorder %s18, 1
      %s264 = scalar_select %p263, %s18, 1
      %s265 = scalar_lea.vmem %s5, %s264
      %p266 = scmp.lt.s32.totalorder %s18, 1
      %s267 = scalar_select %p266, %s18, 1
      %s268 = scalar_lea.vmem %s6, %s267
      %v270 = vld [vmem:[%s257] sm:$0xff]
      %v271 = vld [vmem:[%s257 + $0x8] sm:$0xff]
      %v272 = vld [vmem:[%s257 + $0x10] sm:$0xff]
      %v273 = vld [vmem:[%s257 + $0x18] sm:$0x3f]
      %v274 = vld [vmem:[%s2] sm:$0x1]
      %v276 = vperm.slane %v274, 0
      %v278 = vmul.f32 %v270, %v276
      %v279 = vmul.f32 %v271, %v276
      %v280 = vmul.f32 %v272, %v276
      %v281 = vmul.f32 %v273, %v276
      %v282 = vld [vmem:[%s3] sm:$0x1]
      %v284 = vperm.slane %v282, 0
      %v286 = vadd.f32 %v278, %v284
      %v287 = vadd.f32 %v279, %v284
      %v288 = vadd.f32 %v280, %v284
      %v289 = vadd.f32 %v281, %v284
      %v290 = vmax.f32 %v286, 0.0
      %v291 = vmax.f32 %v287, 0.0
      %v292 = vmax.f32 %v288, 0.0
      %v293 = vmax.f32 %v289, 0.0
      %v294 = vpack.c.bf16 %v291, %v290
      %v295 = vpack.c.bf16 %v293, %v292
      %v296 = vld [vmem:[%s1] sm:$0xf]
      %v297 = vld [vmem:[%s257 + $0x1] sm:$0xff]
      %v298 = vld [vmem:[%s257 + $0x9] sm:$0xff]
      %v299 = vld [vmem:[%s257 + $0x11] sm:$0xff]
      %v300 = vld [vmem:[%s257 + $0x19] sm:$0x3f]
      %v301 = vmul.f32 %v297, %v276
      %v302 = vmul.f32 %v298, %v276
      %v303 = vmul.f32 %v299, %v276
      %v304 = vmul.f32 %v300, %v276
      %v305 = vadd.f32 %v301, %v284
      %v306 = vadd.f32 %v302, %v284
      %v307 = vadd.f32 %v303, %v284
      %v308 = vadd.f32 %v304, %v284
      %v309 = vmax.f32 %v305, 0.0
      %v310 = vmax.f32 %v306, 0.0
      %v311 = vmax.f32 %v307, 0.0
      %v312 = vmax.f32 %v308, 0.0
      %v313 = vpack.c.bf16 %v310, %v309
      %v314 = vpack.c.bf16 %v312, %v311
      %s315 = scalar_lea.vmem %s1, 4
      %v316 = vld [vmem:[%s315] sm:$0xf]
      %vm317 = vcmask 64512
      %v319 = vsel %vm317, %v313, 0
      %v322 = vsel %vm317, %v314, 0
      %vm324 = vcmask 1043456
      %v326 = vsel %vm324, %v316, 0
      %328 = vmatpush.bf16.msra.mxu0 0
      %329 = vmatpush.bf16.msra.mxu0 0
      %330 = vmatpush.bf16.msra.mxu0 0
      %331 = vmatpush.bf16.msra.mxu0 0
      %332 = vmatpush.bf16.msra.mxu0 0
      %333 = vmatpush.bf16.msra.mxu0 0
      %334 = vmatpush.bf16.msra.mxu0 0
      %335 = vmatpush.bf16.msra.mxu0 %v326
      %336 = vmatmul.bf16.gmra.mxu0 %v319
      %v337 = vpop.f32.mrf.mxu0
      %v338 = vadd.f32 0.0, %v337
      %v339 = vpop.f32.mrf.mxu0
      %v340 = vadd.f32 0.0, %v339
      %341 = vmatmul.bf16.gmra.mxu0 %v322
      %v342 = vpop.f32.mrf.mxu0
      %v343 = vadd.f32 0.0, %v342
      %v344 = vpop.f32.mrf.mxu0
      %v345 = vadd.f32 0.0, %v344
      %346 = vdwg.mxu0
      %v348 = vsel %vm317, %v294, 0
      %v351 = vsel %vm317, %v295, 0
      %v354 = vsel %vm324, %v296, 0
      %356 = vmatpush.bf16.msra.mxu0 0
      %357 = vmatpush.bf16.msra.mxu0 0
      %358 = vmatpush.bf16.msra.mxu0 0
      %359 = vmatpush.bf16.msra.mxu0 0
      %360 = vmatpush.bf16.msra.mxu0 0
      %361 = vmatpush.bf16.msra.mxu0 0
      %362 = vmatpush.bf16.msra.mxu0 0
      %363 = vmatpush.bf16.msra.mxu0 %v354
      %364 = vmatmul.bf16.gmra.mxu0 %v348
      %v365 = vpop.f32.mrf.mxu0
      %v366 = vadd.f32 %v338, %v365
      %v367 = vpop.f32.mrf.mxu0
      %v368 = vadd.f32 %v340, %v367
      %369 = vmatmul.bf16.gmra.mxu0 %v351
      %v370 = vpop.f32.mrf.mxu0
      %v371 = vadd.f32 %v343, %v370
      %v372 = vpop.f32.mrf.mxu0
      %v373 = vadd.f32 %v345, %v372
      %374 = vdwg.mxu0
      %v375 = vld [vmem:[%s257 + $0x2] sm:$0xff]
      %v376 = vld [vmem:[%s257 + $0xa] sm:$0xff]
      %v377 = vld [vmem:[%s257 + $0x12] sm:$0xff]
      %v378 = vld [vmem:[%s257 + $0x1a] sm:$0x3f]
      %v379 = vmul.f32 %v375, %v276
      %v380 = vmul.f32 %v376, %v276
      %v381 = vmul.f32 %v377, %v276
      %v382 = vmul.f32 %v378, %v276
      %v383 = vadd.f32 %v379, %v284
      %v384 = vadd.f32 %v380, %v284
      %v385 = vadd.f32 %v381, %v284
      %v386 = vadd.f32 %v382, %v284
      %v387 = vmax.f32 %v383, 0.0
      %v388 = vmax.f32 %v384, 0.0
      %v389 = vmax.f32 %v385, 0.0
      %v390 = vmax.f32 %v386, 0.0
      %v391 = vpack.c.bf16 %v388, %v387
      %v392 = vpack.c.bf16 %v390, %v389
      %s393 = scalar_lea.vmem %s1, 8
      %v394 = vld [vmem:[%s393] sm:$0xf]
      %v396 = vsel %vm317, %v391, 0
      %v399 = vsel %vm317, %v392, 0
      %v402 = vsel %vm324, %v394, 0
      %404 = vmatpush.bf16.msra.mxu0 0
      %405 = vmatpush.bf16.msra.mxu0 0
      %406 = vmatpush.bf16.msra.mxu0 0
      %407 = vmatpush.bf16.msra.mxu0 0
      %408 = vmatpush.bf16.msra.mxu0 0
      %409 = vmatpush.bf16.msra.mxu0 0
      %410 = vmatpush.bf16.msra.mxu0 0
      %411 = vmatpush.bf16.msra.mxu0 %v402
      %412 = vmatmul.bf16.gmra.mxu0 %v396
      %v413 = vpop.f32.mrf.mxu0
      %v414 = vadd.f32 0.0, %v413
      %v415 = vpop.f32.mrf.mxu0
      %v416 = vadd.f32 0.0, %v415
      %417 = vmatmul.bf16.gmra.mxu0 %v399
      %v418 = vpop.f32.mrf.mxu0
      %v419 = vadd.f32 0.0, %v418
      %v420 = vpop.f32.mrf.mxu0
      %v421 = vadd.f32 0.0, %v420
      %422 = vdwg.mxu0
      %v423 = vadd.f32 %v366, %v414
      %v424 = vadd.f32 %v368, %v416
      %v425 = vadd.f32 %v371, %v419
      %v426 = vadd.f32 %v373, %v421
      %v427 = vld [vmem:[%s257 + $0x8] sm:$0xff]
      %v428 = vld [vmem:[%s257 + $0x10] sm:$0xff]
      %v429 = vld [vmem:[%s257 + $0x18] sm:$0xff]
      %v430 = vld [vmem:[%s257 + $0x20] sm:$0x3f]
      %v431 = vmul.f32 %v427, %v276
      %v432 = vmul.f32 %v428, %v276
      %v433 = vmul.f32 %v429, %v276
      %v434 = vmul.f32 %v430, %v276
      %v435 = vadd.f32 %v431, %v284
      %v436 = vadd.f32 %v432, %v284
      %v437 = vadd.f32 %v433, %v284
      %v438 = vadd.f32 %v434, %v284
      %v439 = vmax.f32 %v435, 0.0
      %v440 = vmax.f32 %v436, 0.0
      %v441 = vmax.f32 %v437, 0.0
      %v442 = vmax.f32 %v438, 0.0
      %v443 = vpack.c.bf16 %v440, %v439
      %v444 = vpack.c.bf16 %v442, %v441
      %s445 = scalar_lea.vmem %s1, 12
      %v446 = vld [vmem:[%s445] sm:$0xf]
      %v448 = vsel %vm317, %v443, 0
      %v451 = vsel %vm317, %v444, 0
      %v454 = vsel %vm324, %v446, 0
      %456 = vmatpush.bf16.msra.mxu0 0
      %457 = vmatpush.bf16.msra.mxu0 0
      %458 = vmatpush.bf16.msra.mxu0 0
      %459 = vmatpush.bf16.msra.mxu0 0
      %460 = vmatpush.bf16.msra.mxu0 0
      %461 = vmatpush.bf16.msra.mxu0 0
      %462 = vmatpush.bf16.msra.mxu0 0
      %463 = vmatpush.bf16.msra.mxu0 %v454
      %464 = vmatmul.bf16.gmra.mxu0 %v448
      %v465 = vpop.f32.mrf.mxu0
      %v466 = vadd.f32 0.0, %v465
      %v467 = vpop.f32.mrf.mxu0
      %v468 = vadd.f32 0.0, %v467
      %469 = vmatmul.bf16.gmra.mxu0 %v451
      %v470 = vpop.f32.mrf.mxu0
      %v471 = vadd.f32 0.0, %v470
      %v472 = vpop.f32.mrf.mxu0
      %v473 = vadd.f32 0.0, %v472
      %474 = vdwg.mxu0
      %v475 = vadd.f32 %v423, %v466
      %v476 = vadd.f32 %v424, %v468
      %v477 = vadd.f32 %v425, %v471
      %v478 = vadd.f32 %v426, %v473
      %v479 = vld [vmem:[%s257 + $0x9] sm:$0xff]
      %v480 = vld [vmem:[%s257 + $0x11] sm:$0xff]
      %v481 = vld [vmem:[%s257 + $0x19] sm:$0xff]
      %v482 = vld [vmem:[%s257 + $0x21] sm:$0x3f]
      %v483 = vmul.f32 %v479, %v276
      %v484 = vmul.f32 %v480, %v276
      %v485 = vmul.f32 %v481, %v276
      %v486 = vmul.f32 %v482, %v276
      %v487 = vadd.f32 %v483, %v284
      %v488 = vadd.f32 %v484, %v284
      %v489 = vadd.f32 %v485, %v284
      %v490 = vadd.f32 %v486, %v284
      %v491 = vmax.f32 %v487, 0.0
      %v492 = vmax.f32 %v488, 0.0
      %v493 = vmax.f32 %v489, 0.0
      %v494 = vmax.f32 %v490, 0.0
      %v495 = vpack.c.bf16 %v492, %v491
      %v496 = vpack.c.bf16 %v494, %v493
      %s497 = scalar_lea.vmem %s1, 16
      %v498 = vld [vmem:[%s497] sm:$0xf]
      %v500 = vsel %vm317, %v495, 0
      %v503 = vsel %vm317, %v496, 0
      %v506 = vsel %vm324, %v498, 0
      %508 = vmatpush.bf16.msra.mxu0 0
      %509 = vmatpush.bf16.msra.mxu0 0
      %510 = vmatpush.bf16.msra.mxu0 0
      %511 = vmatpush.bf16.msra.mxu0 0
      %512 = vmatpush.bf16.msra.mxu0 0
      %513 = vmatpush.bf16.msra.mxu0 0
      %514 = vmatpush.bf16.msra.mxu0 0
      %515 = vmatpush.bf16.msra.mxu0 %v506
      %516 = vmatmul.bf16.gmra.mxu0 %v500
      %v517 = vpop.f32.mrf.mxu0
      %v518 = vadd.f32 0.0, %v517
      %v519 = vpop.f32.mrf.mxu0
      %v520 = vadd.f32 0.0, %v519
      %521 = vmatmul.bf16.gmra.mxu0 %v503
      %v522 = vpop.f32.mrf.mxu0
      %v523 = vadd.f32 0.0, %v522
      %v524 = vpop.f32.mrf.mxu0
      %v525 = vadd.f32 0.0, %v524
      %526 = vdwg.mxu0
      %v527 = vadd.f32 %v475, %v518
      %v528 = vadd.f32 %v476, %v520
      %v529 = vadd.f32 %v477, %v523
      %v530 = vadd.f32 %v478, %v525
      %v531 = vld [vmem:[%s257 + $0xa] sm:$0xff]
      %v532 = vld [vmem:[%s257 + $0x12] sm:$0xff]
      %v533 = vld [vmem:[%s257 + $0x1a] sm:$0xff]
      %v534 = vld [vmem:[%s257 + $0x22] sm:$0x3f]
      %v535 = vmul.f32 %v531, %v276
      %v536 = vmul.f32 %v532, %v276
      %v537 = vmul.f32 %v533, %v276
      %v538 = vmul.f32 %v534, %v276
      %v539 = vadd.f32 %v535, %v284
      %v540 = vadd.f32 %v536, %v284
      %v541 = vadd.f32 %v537, %v284
      %v542 = vadd.f32 %v538, %v284
      %v543 = vmax.f32 %v539, 0.0
      %v544 = vmax.f32 %v540, 0.0
      %v545 = vmax.f32 %v541, 0.0
      %v546 = vmax.f32 %v542, 0.0
      %v547 = vpack.c.bf16 %v544, %v543
      %v548 = vpack.c.bf16 %v546, %v545
      %s549 = scalar_lea.vmem %s1, 20
      %v550 = vld [vmem:[%s549] sm:$0xf]
      %v552 = vsel %vm317, %v547, 0
      %v555 = vsel %vm317, %v548, 0
      %v558 = vsel %vm324, %v550, 0
      %560 = vmatpush.bf16.msra.mxu0 0
      %561 = vmatpush.bf16.msra.mxu0 0
      %562 = vmatpush.bf16.msra.mxu0 0
      %563 = vmatpush.bf16.msra.mxu0 0
      %564 = vmatpush.bf16.msra.mxu0 0
      %565 = vmatpush.bf16.msra.mxu0 0
      %566 = vmatpush.bf16.msra.mxu0 0
      %567 = vmatpush.bf16.msra.mxu0 %v558
      %568 = vmatmul.bf16.gmra.mxu0 %v552
      %v569 = vpop.f32.mrf.mxu0
      %v570 = vadd.f32 0.0, %v569
      %v571 = vpop.f32.mrf.mxu0
      %v572 = vadd.f32 0.0, %v571
      %573 = vmatmul.bf16.gmra.mxu0 %v555
      %v574 = vpop.f32.mrf.mxu0
      %v575 = vadd.f32 0.0, %v574
      %v576 = vpop.f32.mrf.mxu0
      %v577 = vadd.f32 0.0, %v576
      %578 = vdwg.mxu0
      %v579 = vadd.f32 %v527, %v570
      %v580 = vadd.f32 %v528, %v572
      %v581 = vadd.f32 %v529, %v575
      %v582 = vadd.f32 %v530, %v577
      %v583 = vld [vmem:[%s257 + $0x10] sm:$0xff]
      %v584 = vld [vmem:[%s257 + $0x18] sm:$0xff]
      %v585 = vld [vmem:[%s257 + $0x20] sm:$0xff]
      %v586 = vld [vmem:[%s257 + $0x28] sm:$0x3f]
      %v587 = vmul.f32 %v583, %v276
      %v588 = vmul.f32 %v584, %v276
      %v589 = vmul.f32 %v585, %v276
      %v590 = vmul.f32 %v586, %v276
      %v591 = vadd.f32 %v587, %v284
      %v592 = vadd.f32 %v588, %v284
      %v593 = vadd.f32 %v589, %v284
      %v594 = vadd.f32 %v590, %v284
      %v595 = vmax.f32 %v591, 0.0
      %v596 = vmax.f32 %v592, 0.0
      %v597 = vmax.f32 %v593, 0.0
      %v598 = vmax.f32 %v594, 0.0
      %v599 = vpack.c.bf16 %v596, %v595
      %v600 = vpack.c.bf16 %v598, %v597
      %s601 = scalar_lea.vmem %s1, 24
      %v602 = vld [vmem:[%s601] sm:$0xf]
      %v604 = vsel %vm317, %v599, 0
      %v607 = vsel %vm317, %v600, 0
      %v610 = vsel %vm324, %v602, 0
      %612 = vmatpush.bf16.msra.mxu0 0
      %613 = vmatpush.bf16.msra.mxu0 0
      %614 = vmatpush.bf16.msra.mxu0 0
      %615 = vmatpush.bf16.msra.mxu0 0
      %616 = vmatpush.bf16.msra.mxu0 0
      %617 = vmatpush.bf16.msra.mxu0 0
      %618 = vmatpush.bf16.msra.mxu0 0
      %619 = vmatpush.bf16.msra.mxu0 %v610
      %620 = vmatmul.bf16.gmra.mxu0 %v604
      %v621 = vpop.f32.mrf.mxu0
      %v622 = vadd.f32 0.0, %v621
      %v623 = vpop.f32.mrf.mxu0
      %v624 = vadd.f32 0.0, %v623
      %625 = vmatmul.bf16.gmra.mxu0 %v607
      %v626 = vpop.f32.mrf.mxu0
      %v627 = vadd.f32 0.0, %v626
      %v628 = vpop.f32.mrf.mxu0
      %v629 = vadd.f32 0.0, %v628
      %630 = vdwg.mxu0
      %v631 = vadd.f32 %v579, %v622
      %v632 = vadd.f32 %v580, %v624
      %v633 = vadd.f32 %v581, %v627
      %v634 = vadd.f32 %v582, %v629
      %v635 = vld [vmem:[%s257 + $0x11] sm:$0xff]
      %v636 = vld [vmem:[%s257 + $0x19] sm:$0xff]
      %v637 = vld [vmem:[%s257 + $0x21] sm:$0xff]
      %v638 = vld [vmem:[%s257 + $0x29] sm:$0x3f]
      %v639 = vmul.f32 %v635, %v276
      %v640 = vmul.f32 %v636, %v276
      %v641 = vmul.f32 %v637, %v276
      %v642 = vmul.f32 %v638, %v276
      %v643 = vadd.f32 %v639, %v284
      %v644 = vadd.f32 %v640, %v284
      %v645 = vadd.f32 %v641, %v284
      %v646 = vadd.f32 %v642, %v284
      %v647 = vmax.f32 %v643, 0.0
      %v648 = vmax.f32 %v644, 0.0
      %v649 = vmax.f32 %v645, 0.0
      %v650 = vmax.f32 %v646, 0.0
      %v651 = vpack.c.bf16 %v648, %v647
      %v652 = vpack.c.bf16 %v650, %v649
      %s653 = scalar_lea.vmem %s1, 28
      %v654 = vld [vmem:[%s653] sm:$0xf]
      %v656 = vsel %vm317, %v651, 0
      %v659 = vsel %vm317, %v652, 0
      %v662 = vsel %vm324, %v654, 0
      %664 = vmatpush.bf16.msra.mxu0 0
      %665 = vmatpush.bf16.msra.mxu0 0
      %666 = vmatpush.bf16.msra.mxu0 0
      %667 = vmatpush.bf16.msra.mxu0 0
      %668 = vmatpush.bf16.msra.mxu0 0
      %669 = vmatpush.bf16.msra.mxu0 0
      %670 = vmatpush.bf16.msra.mxu0 0
      %671 = vmatpush.bf16.msra.mxu0 %v662
      %672 = vmatmul.bf16.gmra.mxu0 %v656
      %v673 = vpop.f32.mrf.mxu0
      %v674 = vadd.f32 0.0, %v673
      %v675 = vpop.f32.mrf.mxu0
      %v676 = vadd.f32 0.0, %v675
      %677 = vmatmul.bf16.gmra.mxu0 %v659
      %v678 = vpop.f32.mrf.mxu0
      %v679 = vadd.f32 0.0, %v678
      %v680 = vpop.f32.mrf.mxu0
      %v681 = vadd.f32 0.0, %v680
      %682 = vdwg.mxu0
      %v683 = vadd.f32 %v631, %v674
      %v684 = vadd.f32 %v632, %v676
      %v685 = vadd.f32 %v633, %v679
      %v686 = vadd.f32 %v634, %v681
      %v687 = vld [vmem:[%s257 + $0x12] sm:$0xff]
      %v688 = vld [vmem:[%s257 + $0x1a] sm:$0xff]
      %v689 = vld [vmem:[%s257 + $0x22] sm:$0xff]
      %v690 = vld [vmem:[%s257 + $0x2a] sm:$0x3f]
      %v691 = vmul.f32 %v687, %v276
      %v692 = vmul.f32 %v688, %v276
      %v693 = vmul.f32 %v689, %v276
      %v694 = vmul.f32 %v690, %v276
      %v695 = vadd.f32 %v691, %v284
      %v696 = vadd.f32 %v692, %v284
      %v697 = vadd.f32 %v693, %v284
      %v698 = vadd.f32 %v694, %v284
      %v699 = vmax.f32 %v695, 0.0
      %v700 = vmax.f32 %v696, 0.0
      %v701 = vmax.f32 %v697, 0.0
      %v702 = vmax.f32 %v698, 0.0
      %v703 = vpack.c.bf16 %v700, %v699
      %v704 = vpack.c.bf16 %v702, %v701
      %s705 = scalar_lea.vmem %s1, 32
      %v706 = vld [vmem:[%s705] sm:$0xf]
      %v708 = vsel %vm317, %v703, 0
      %v711 = vsel %vm317, %v704, 0
      %v714 = vsel %vm324, %v706, 0
      %716 = vmatpush.bf16.msra.mxu0 0
      %717 = vmatpush.bf16.msra.mxu0 0
      %718 = vmatpush.bf16.msra.mxu0 0
      %719 = vmatpush.bf16.msra.mxu0 0
      %720 = vmatpush.bf16.msra.mxu0 0
      %721 = vmatpush.bf16.msra.mxu0 0
      %722 = vmatpush.bf16.msra.mxu0 0
      %723 = vmatpush.bf16.msra.mxu0 %v714
      %724 = vmatmul.bf16.gmra.mxu0 %v708
      %v725 = vpop.f32.mrf.mxu0
      %v726 = vadd.f32 0.0, %v725
      %v727 = vpop.f32.mrf.mxu0
      %v728 = vadd.f32 0.0, %v727
      %729 = vmatmul.bf16.gmra.mxu0 %v711
      %v730 = vpop.f32.mrf.mxu0
      %v731 = vadd.f32 0.0, %v730
      %v732 = vpop.f32.mrf.mxu0
      %v733 = vadd.f32 0.0, %v732
      %734 = vdwg.mxu0
      %v735 = vadd.f32 %v683, %v726
      %v736 = vadd.f32 %v684, %v728
      %v737 = vadd.f32 %v685, %v731
      %v738 = vadd.f32 %v686, %v733
      %739 = vst.msk [vmem:[%s262] sm:$0xff] %vm317, 0.0
      %740 = vst.msk [vmem:[%s262 + $0x8] sm:$0xff] %vm317, 0.0
      %741 = vst.msk [vmem:[%s262 + $0x10] sm:$0xff] %vm317, 0.0
      %742 = vst.msk [vmem:[%s262 + $0x18] sm:$0xff] %vm317, 0.0
      %743 = vst.msk [vmem:[%s262] sm:$0xff] %vm317, %v735
      %744 = vst.msk [vmem:[%s262 + $0x8] sm:$0xff] %vm317, %v736
      %745 = vst.msk [vmem:[%s262 + $0x10] sm:$0xff] %vm317, %v737
      %vm746 = vcmask 62464
      %747 = vst.msk [vmem:[%s262 + $0x18] sm:$0x3f] %vm746, %v738
      %v748 = vlaneseq
      %v749 = vshrl.u32 %v748, 7
      %v750 = vadd.s32 %v749, 8
      %v751 = vadd.s32 %v749, 16
      %v752 = vadd.s32 %v749, 24
      %vm753 = vcmp.lt.s32.totalorder %v749, 0
      %v754 = vsub.s32 0, %v749
      %v755 = vsel %vm753, %v754, %v749
      %v756 = vshrl.u32 %v755, 3
      %v757 = vand.u32 %v755, 7
      %v758 = vsub.s32 0, %v757
      %v759 = vsel %vm753, %v758, %v757
      %vm760 = vcmp.lt.s32.totalorder %v750, 0
      %v761 = vsub.s32 0, %v750
      %v762 = vsel %vm760, %v761, %v750
      %v763 = vshrl.u32 %v762, 3
      %v764 = vand.u32 %v762, 7
      %v765 = vsub.s32 0, %v764
      %v766 = vsel %vm760, %v765, %v764
      %vm767 = vcmp.lt.s32.totalorder %v751, 0
      %v768 = vsub.s32 0, %v751
      %v769 = vsel %vm767, %v768, %v751
      %v770 = vshrl.u32 %v769, 3
      %v771 = vand.u32 %v769, 7
      %v772 = vsub.s32 0, %v771
      %v773 = vsel %vm767, %v772, %v771
      %vm774 = vcmp.lt.s32.totalorder %v752, 0
      %v775 = vsub.s32 0, %v752
      %v776 = vsel %vm774, %v775, %v752
      %v777 = vshrl.u32 %v776, 3
      %v778 = vand.u32 %v776, 7
      %v779 = vsub.s32 0, %v778
      %v780 = vsel %vm774, %v779, %v778
      %vm781 = vcmp.ne.s32.totalorder %v759, 0
      %vm782 = vcmp.ne.s32.totalorder %v766, 0
      %vm783 = vcmp.ne.s32.totalorder %v773, 0
      %vm784 = vcmp.ne.s32.totalorder %v780, 0
      %vm785 = vcmp.lt.s32.totalorder %v759, 0
      %vm786 = vcmp.lt.s32.totalorder %v766, 0
      %vm787 = vcmp.lt.s32.totalorder %v773, 0
      %vm788 = vcmp.lt.s32.totalorder %v780, 0
      %vm789 = vmand %vm785, %vm781
      %vm790 = vmand %vm786, %vm782
      %vm791 = vmand %vm787, %vm783
      %vm792 = vmand %vm788, %vm784
      %v793 = vadd.s32 %v759, 8
      %v794 = vadd.s32 %v766, 8
      %v795 = vadd.s32 %v773, 8
      %v796 = vadd.s32 %v780, 8
      %v797 = vsel %vm789, %v793, %v759
      %v798 = vsel %vm790, %v794, %v766
      %v799 = vsel %vm791, %v795, %v773
      %v800 = vsel %vm792, %v796, %v780
      %vm801 = vcmp.lt.s32.totalorder %v797, 4
      %vm802 = vcmp.lt.s32.totalorder %v798, 4
      %vm803 = vcmp.lt.s32.totalorder %v799, 4
      %vm804 = vcmp.lt.s32.totalorder %v800, 4
      %v805 = vsel %vm801, %v735, 0.0
      %v806 = vsel %vm802, %v736, 0.0
      %v807 = vsel %vm803, %v737, 0.0
      %v808 = vsel %vm804, %v738, 0.0
      %v809 = vsel %vm317, %v805, 0.0
      %v810 = vsel %vm317, %v806, 0.0
      %v811 = vadd.f32 %v809, %v810
      %v812 = vsel %vm317, %v807, 0.0
      %v813 = vadd.f32 %v811, %v812
      %v814 = vsel %vm746, %v808, 0.0
      %v815 = vadd.f32 %v813, %v814
      %v816 = vrot.slane %v815, 4
      %v817 = vadd.f32 %v815, %v816
      %v818 = vrot.slane %v817, 2
      %v819 = vadd.f32 %v817, %v818
      %v820 = vrot.slane %v819, 1
      %v821 = vadd.f32 %v819, %v820
      %vm822 = vcmask 57344
      %823 = vst.msk [vmem:[%s265] sm:$0x1] %vm822, %v821
      %v824 = vmul.f32 %v805, %v805
      %v825 = vmul.f32 %v806, %v806
      %v826 = vmul.f32 %v807, %v807
      %v827 = vmul.f32 %v808, %v808
      %v828 = vsel %vm317, %v824, 0.0
      %v829 = vsel %vm317, %v825, 0.0
      %v830 = vadd.f32 %v828, %v829
      %v831 = vsel %vm317, %v826, 0.0
      %v832 = vadd.f32 %v830, %v831
      %v833 = vsel %vm746, %v827, 0.0
      %v834 = vadd.f32 %v832, %v833
      %v835 = vrot.slane %v834, 4
      %v836 = vadd.f32 %v834, %v835
      %v837 = vrot.slane %v836, 2
      %v838 = vadd.f32 %v836, %v837
      %v839 = vrot.slane %v838, 1
      %v840 = vadd.f32 %v838, %v839
      %841 = vst.msk [vmem:[%s268] sm:$0x1] %vm822, %v840
      %p842 = scmp.lt.s32.totalorder %s18, 1
      %s843 = scalar_select %p842, %s18, 1
      %s844 = smul.addr %s843, 4
      %s845 = smul.addr %s844, 8
      %s846 = scalar_lea.vmem %s4, %s845
      %p847 = scmp.lt.s32.totalorder %s18, 1
      %s848 = scalar_select %p847, %s18, 1
      %s849 = scalar_lea.vmem %s5, %s848
      %p850 = scmp.lt.s32.totalorder %s18, 1
      %s851 = scalar_select %p850, %s18, 1
      %s852 = scalar_lea.vmem %s6, %s851
      // Predicated region
      $region37: #{down_step.6} parent=35 // pred_check
        %p853 = pneg %p125
      $region38: #{down_step.6} parent=35 // pred_check_branch
        %855 = sbr.rel (%p853) target = $region40
      $region39: #{down_step.6} parent=35 // pred_region
        _
      $region40: #{down_step.6} parent=35 // pred_fallthru
        _
      // Predicated region
      $region41: #{down_step.6} parent=35 // pred_check
        %p856 = pneg %p151
      $region42: #{down_step.6} parent=35 // pred_check_branch
        %858 = sbr.rel (%p856) target = $region44
      $region43: #{down_step.6} parent=35 // pred_region
        _
      $region44: #{down_step.6} parent=35 // pred_fallthru
        _
      // Predicated region
      $region45: #{down_step.6} parent=35 // pred_check
        %p859 = pneg %p177
      $region46: #{down_step.6} parent=35 // pred_check_branch
        %861 = sbr.rel (%p859) target = $region48
      $region47: #{down_step.6} parent=35 // pred_region
        _
      $region48: #{down_step.6} parent=35 // pred_fallthru
        _
    $region36: #{down_step.6} parent=5 // pred_fallthru
      _
    %p862 = scmp.le.s32.totalorder 2, %s13
    // Predicated region
    $region49: #{down_step.6} parent=5 // pred_check
      %p863 = pneg %p862
    $region50: #{down_step.6} parent=5 // pred_check_branch
      %865 = sbr.rel (%p863) target = $region52
    $region51: #{down_step.6} parent=5 // pred_region
      %s866 = ssub.s32 %s13, 2
      // Predicated region
      $region53: #{down_step.6} parent=51 // pred_check
        %p867 = pneg %p131
      $region54: #{down_step.6} parent=51 // pred_check_branch
        %869 = sbr.rel (%p867) target = $region56
      $region55: #{down_step.6} parent=51 // pred_region
        %p870 = scmp.lt.s32.totalorder %s19, 1
        %s871 = scalar_select %p870, %s19, 1
        %s872 = smul.addr %s871, 4
        %s873 = smul.addr %s872, 8
        %s874 = scalar_lea.vmem %s4, %s873
      $region56: #{down_step.6} parent=51 // pred_fallthru
        _
      // Predicated region
      $region57: #{down_step.6} parent=51 // pred_check
        %p875 = pneg %p157
      $region58: #{down_step.6} parent=51 // pred_check_branch
        %877 = sbr.rel (%p875) target = $region60
      $region59: #{down_step.6} parent=51 // pred_region
        %p878 = scmp.lt.s32.totalorder %s19, 1
        %s879 = scalar_select %p878, %s19, 1
        %s880 = scalar_lea.vmem %s5, %s879
      $region60: #{down_step.6} parent=51 // pred_fallthru
        _
      // Predicated region
      $region61: #{down_step.6} parent=51 // pred_check
        %p881 = pneg %p183
      $region62: #{down_step.6} parent=51 // pred_check_branch
        %883 = sbr.rel (%p881) target = $region64
      $region63: #{down_step.6} parent=51 // pred_region
        %p884 = scmp.lt.s32.totalorder %s19, 1
        %s885 = scalar_select %p884, %s19, 1
        %s886 = scalar_lea.vmem %s6, %s885
      $region64: #{down_step.6} parent=51 // pred_fallthru
        _
    $region52: #{down_step.6} parent=5 // pred_fallthru
      _
  $region6: #{down_step.6} parent=0 // loop_footer
    %s17 = sadd.s32 1, %s13
  $region7: #{down_step.6} parent=0 // loop_footer_branch
    %12 = sbr.rel target = $region3
  $region8: #{down_step.6} parent=0 // loop_exit
    _

</llo_original>
